<compile_context>
chip_gen: v7x
topology: tpu7x:2x2x1
jax: 0.10.0
libtpu: 0.0.40
codegen_flags: <defaults>
</compile_context>

<pallas_src>
import functools

import jax
import jax.numpy as jnp
from jax.experimental import pallas as pl
from jax.experimental.pallas import tpu as pltpu


def _gru_recurrent_kernel(gi_ref, m_ref, whh_ref, bhh_ref, gamma_ref, beta_ref,
                          out_ref, h_scratch,
                          *, t_chunk, hidden_norm, ln_eps, compute_dtype):
    """One grid step = one (batch_tile, time_chunk); recurrence carried in h_scratch."""
    # grid = (batch_tiles, time_chunks); axis 1 (time) is the sequential axis.
    @pl.when(pl.program_id(1) == 0)
    def _():
        h_scratch[...] = jnp.zeros_like(h_scratch)

    # Constant-per-chunk operands hoisted out of the time loop.
    w_r = whh_ref[0]            # (H, H), already transposed: h @ w_g == h @ W_h{g}^T
    w_z = whh_ref[1]
    w_n = whh_ref[2]
    b_r = bhh_ref[0]            # (1, H)
    b_z = bhh_ref[1]
    b_n = bhh_ref[2]

    def step(tt, h):
        gi_t = gi_ref[tt]                      # (3, Bt, H) f32: precomputed x@W_ih^T + b_ih
        m_t = m_ref[tt]                        # (Bt, 1) float 0/1 mask
        hc = h.astype(compute_dtype)
        gh_r = jnp.dot(hc, w_r, preferred_element_type=jnp.float32) + b_r
        gh_z = jnp.dot(hc, w_z, preferred_element_type=jnp.float32) + b_z
        gh_n = jnp.dot(hc, w_n, preferred_element_type=jnp.float32) + b_n
        r = jax.nn.sigmoid(gi_t[0] + gh_r)
        z = jax.nn.sigmoid(gi_t[1] + gh_z)
        n = jnp.tanh(gi_t[2] + r * gh_n)
        new_h = n + z * (h - n)                # == (1 - z) * n + z * h
        if hidden_norm:
            mu = jnp.mean(new_h, axis=-1, keepdims=True)
            var = jnp.mean((new_h - mu) ** 2, axis=-1, keepdims=True)
            new_h = (new_h - mu) * jax.lax.rsqrt(var + ln_eps)
            new_h = new_h * gamma_ref[...] + beta_ref[...]
        # TODO(synk): Dropout is identity in eval mode (dropout_prob=0.0); training-mode
        # stochastic dropout would use pltpu.prng_seed / pltpu.stateful_bernoulli here.
        new_h = h + m_t * (new_h - h)          # == m*new_h + (1-m)*h (masked update)
        out_ref[tt] = new_h.astype(out_ref.dtype)
        return new_h

    h_final = jax.lax.fori_loop(0, t_chunk, step, h_scratch[...], unroll=True)
    h_scratch[...] = h_final


def _largest_divisor_leq(n, cap):
    cap = max(1, min(int(cap), int(n)))
    for c in range(cap, 0, -1):
        if n % c == 0:
            return c
    return 1


def gru_masked_encoder(x, mask, params, *, hidden_norm=False, ln_eps=1e-5,
                       t_chunk=8, b_tile=None, compute_dtype=jnp.float32,
                       vmem_limit_bytes=None):
    """x: [B, S, D] float32, mask: [B, S] float32 -> (last_hidden [B, H], all_hiddens [B, S, H])."""
    B, S, D = x.shape
    H = params["w_hh"].shape[-1]

    if b_tile is None:
        b_tile = B
    assert B % b_tile == 0, "b_tile must divide B"
    # NOTE: b_tile < B additionally requires b_tile % 8 == 0 and H % 128 == 0 (block tiling rule).
    t_chunk = _largest_divisor_leq(S, t_chunk)
    n_bt = B // b_tile
    n_tc = S // t_chunk

    f32 = jnp.float32
    cdt = compute_dtype

    # ---- wrapper-side layout plumbing + hoisted (h-independent) input projection ----
    x_tm = jnp.transpose(x, (1, 0, 2))                                # [S, B, D]
    m_tm = jnp.transpose(mask, (1, 0)).reshape(S, B, 1).astype(f32)   # [S, B, 1]

    w_ih3 = params["w_ih"].reshape(3, H, D)                           # gate-split (r, z, n)
    b_ih3 = params["b_ih"].reshape(1, 3, 1, H).astype(f32)
    # gi[s, g, b, :] = x[s, b] @ W_i{g}^T + b_i{g}  -- one big parallel MXU matmul, f32 accumulation.
    gi = jnp.einsum("sbd,ghd->sgbh", x_tm.astype(cdt), w_ih3.astype(cdt),
                    preferred_element_type=jnp.float32) + b_ih3       # [S, 3, B, H] f32

    w_hh3_t = jnp.transpose(params["w_hh"].reshape(3, H, H), (0, 2, 1)).astype(cdt)  # [3, H, H]
    b_hh3 = params["b_hh"].reshape(3, 1, H).astype(f32)
    gamma = params["ln_gamma"].reshape(1, H).astype(f32)
    beta = params["ln_beta"].reshape(1, H).astype(f32)

    kernel = functools.partial(
        _gru_recurrent_kernel, t_chunk=t_chunk, hidden_norm=hidden_norm,
        ln_eps=ln_eps, compute_dtype=cdt)

    # NOTE: the weight/bias/LN specs below have constant index maps; for large H their
    # double-buffering could be dropped (pipeline_mode=pl.Buffered(1) or a manual pl.ANY +
    # copy-to-scratch) to halve their VMEM footprint; negligible at these sizes.
    grid_spec = pltpu.PrefetchScalarGridSpec(
        num_scalar_prefetch=0,
        grid=(n_bt, n_tc),
        in_specs=[
            pl.BlockSpec((t_chunk, 3, b_tile, H), lambda b, s: (s, 0, b, 0)),  # gi time-chunk
            pl.BlockSpec((t_chunk, b_tile, 1), lambda b, s: (s, b, 0)),        # mask time-chunk
            pl.BlockSpec((3, H, H), lambda b, s: (0, 0, 0)),                   # W_hh^T per gate
            pl.BlockSpec((3, 1, H), lambda b, s: (0, 0, 0)),                   # b_hh per gate
            pl.BlockSpec((1, H), lambda b, s: (0, 0)),                         # LN gamma
            pl.BlockSpec((1, H), lambda b, s: (0, 0)),                         # LN beta
        ],
        out_specs=pl.BlockSpec((t_chunk, b_tile, H), lambda b, s: (s, b, 0)),  # all hiddens
        scratch_shapes=[pltpu.VMEM((b_tile, H), jnp.float32)],
    )

    out_tm = pl.pallas_call(
        kernel,
        out_shape=jax.ShapeDtypeStruct((S, B, H), jnp.float32),
        grid_spec=grid_spec,
        compiler_params=pltpu.CompilerParams(
            # batch tiles are independent (megacore-parallel on v7x); time is sequential.
            dimension_semantics=("parallel", "arbitrary"),
            vmem_limit_bytes=vmem_limit_bytes,
        ),
    )(gi, m_tm, w_hh3_t, b_hh3, gamma, beta)

    all_h = jnp.transpose(out_tm, (1, 0, 2))   # [B, S, H]
    last_h = all_h[:, -1]                      # masked update guarantees out[S-1] == final hidden
    return last_h, all_h


def _ref_forward(x, mask, params, *, hidden_norm=False, ln_eps=1e-5):
    """Pure-JAX reference matching the PyTorch module (eval mode)."""
    B, S, D = x.shape
    H = params["w_hh"].shape[-1]

    def step(h, inp):
        x_t, m_t = inp
        gi = x_t @ params["w_ih"].T + params["b_ih"]
        gh = h @ params["w_hh"].T + params["b_hh"]
        i_r, i_z, i_n = gi[:, :H], gi[:, H:2 * H], gi[:, 2 * H:]
        h_r, h_z, h_n = gh[:, :H], gh[:, H:2 * H], gh[:, 2 * H:]
        r = jax.nn.sigmoid(i_r + h_r)
        z = jax.nn.sigmoid(i_z + h_z)
        n = jnp.tanh(i_n + r * h_n)
        new_h = (1.0 - z) * n + z * h
        if hidden_norm:
            mu = jnp.mean(new_h, axis=-1, keepdims=True)
            var = jnp.mean((new_h - mu) ** 2, axis=-1, keepdims=True)
            new_h = (new_h - mu) / jnp.sqrt(var + ln_eps)
            new_h = new_h * params["ln_gamma"] + params["ln_beta"]
        new_h = m_t[:, None] * new_h + (1.0 - m_t[:, None]) * h
        return new_h, new_h

    h0 = jnp.zeros((B, H), jnp.float32)
    last, outs = jax.lax.scan(step, h0, (jnp.transpose(x, (1, 0, 2)), jnp.transpose(mask)))
    return last, jnp.transpose(outs, (1, 0, 2))


def init_params(key, input_dim, hidden_dim):
    """Deterministic PyTorch-style GRUCell init: U(-1/sqrt(H), 1/sqrt(H))."""
    k = 1.0 / jnp.sqrt(jnp.float32(hidden_dim))
    keys = jax.random.split(key, 4)
    return {
        "w_ih": jax.random.uniform(keys[0], (3 * hidden_dim, input_dim), jnp.float32, -k, k),
        "w_hh": jax.random.uniform(keys[1], (3 * hidden_dim, hidden_dim), jnp.float32, -k, k),
        "b_ih": jax.random.uniform(keys[2], (3 * hidden_dim,), jnp.float32, -k, k),
        "b_hh": jax.random.uniform(keys[3], (3 * hidden_dim,), jnp.float32, -k, k),
        "ln_gamma": jnp.ones((hidden_dim,), jnp.float32),
        "ln_beta": jnp.zeros((hidden_dim,), jnp.float32),
    }


if __name__ == "__main__":
    B, S, D, H = 4, 16, 16, 32   # small shapes; S=16 with t_chunk=8 exercises the chunked grid

    key = jax.random.PRNGKey(0)
    kx, km, kp = jax.random.split(key, 3)
    x = jax.random.normal(kx, (B, S, D), jnp.float32)
    mask = (jax.random.uniform(km, (B, S)) > 0.3).astype(jnp.float32)   # 0/1 float mask
    params = init_params(kp, D, H)

    # f32 path, no LayerNorm
    last_h, all_h = gru_masked_encoder(x, mask, params, hidden_norm=False, t_chunk=8)
    jax.block_until_ready((last_h, all_h))
    ref_last, ref_all = _ref_forward(x, mask, params, hidden_norm=False)
    assert last_h.shape == (B, H) and all_h.shape == (B, S, H)
    assert jnp.allclose(last_h, ref_last, atol=1e-4, rtol=1e-4)
    assert jnp.allclose(all_h, ref_all, atol=1e-4, rtol=1e-4)

    # f32 path, with LayerNorm
    last_n, all_n = gru_masked_encoder(x, mask, params, hidden_norm=True, t_chunk=8)
    jax.block_until_ready((last_n, all_n))
    ref_last_n, ref_all_n = _ref_forward(x, mask, params, hidden_norm=True)
    assert jnp.allclose(last_n, ref_last_n, atol=1e-4, rtol=1e-4)
    assert jnp.allclose(all_n, ref_all_n, atol=1e-4, rtol=1e-4)

    # bf16 MXU operands (f32 accumulation) -- looser tolerance
    last_b, all_b = gru_masked_encoder(x, mask, params, hidden_norm=False, t_chunk=8,
                                       compute_dtype=jnp.bfloat16)
    jax.block_until_ready((last_b, all_b))
    assert jnp.allclose(all_b, ref_all, atol=5e-2, rtol=5e-2)

    print("KERNEL_OK")
</pallas_src>

<mosaic_0001>
module attributes {stable_mosaic.version = 11 : i64} {
  func.func @_gru_recurrent_kernel(%arg0: i32, %arg1: i32, %arg2: memref<8x3x4x32xf32, #tpu.memory_space<vmem>>, %arg3: memref<8x4x1xf32, #tpu.memory_space<vmem>>, %arg4: memref<3x32x32xf32, #tpu.memory_space<vmem>>, %arg5: memref<3x1x32xf32, #tpu.memory_space<vmem>>, %arg6: memref<1x32xf32, #tpu.memory_space<vmem>>, %arg7: memref<1x32xf32, #tpu.memory_space<vmem>>, %arg8: memref<8x4x32xf32, #tpu.memory_space<vmem>>, %arg9: memref<4x32xf32, #tpu.memory_space<vmem>>) attributes {dimension_semantics = [#tpu.dimension_semantics<parallel>, #tpu.dimension_semantics<arbitrary>], iteration_bounds = array<i64: 1, 2>, scalar_prefetch = 0 : i64, scratch_operands = 1 : i64, tpu.core_type = #tpu.core_type<tc>, window_params = [{transform_indices = @transform_0, window_bounds = array<i64: 8, 3, 4, 32>}, {transform_indices = @transform_1, window_bounds = array<i64: 8, 4, 1>}, {pipeline_mode = #tpu.pipeline_mode<synchronous>, transform_indices = @transform_2, window_bounds = array<i64: 3, 32, 32>}, {pipeline_mode = #tpu.pipeline_mode<synchronous>, transform_indices = @transform_3, window_bounds = array<i64: 3, 1, 32>}, {pipeline_mode = #tpu.pipeline_mode<synchronous>, transform_indices = @transform_4, window_bounds = array<i64: 1, 32>}, {pipeline_mode = #tpu.pipeline_mode<synchronous>, transform_indices = @transform_5, window_bounds = array<i64: 1, 32>}, {transform_indices = @transform_6, window_bounds = array<i64: 8, 4, 32>}]} {
    %c0_i32 = arith.constant 0 : i32
    %0 = arith.cmpi eq, %arg1, %c0_i32 : i32
    %1 = arith.extui %0 : i1 to i32
    %c0_i32_0 = arith.constant 0 : i32
    %2 = arith.cmpi ne, %1, %c0_i32_0 : i32
    scf.if %2 {
      %cst_116 = arith.constant 0.000000e+00 : f32
      %393 = vector.broadcast %cst_116 : f32 to vector<4x32xf32>
      %c0_117 = arith.constant 0 : index
      %c0_118 = arith.constant 0 : index
      %394 = vector.load %arg9[%c0_117, %c0_118] : memref<4x32xf32, #tpu.memory_space<vmem>>, vector<4x32xf32>
      tpu.vector_store %arg9[%c0_117, %c0_118], %393 {strides = array<i32>} : memref<4x32xf32, #tpu.memory_space<vmem>>, vector<4x32xf32>,
    } else {
    }
    %c0 = arith.constant 0 : index
    %c0_1 = arith.constant 0 : index
    %c0_2 = arith.constant 0 : index
    %3 = vector.load %arg4[%c0, %c0_1, %c0_2] : memref<3x32x32xf32, #tpu.memory_space<vmem>>, vector<1x32x32xf32>
    %4 = vector.shape_cast %3 : vector<1x32x32xf32> to vector<32x32xf32>
    %c1 = arith.constant 1 : index
    %c0_3 = arith.constant 0 : index
    %c0_4 = arith.constant 0 : index
    %5 = vector.load %arg4[%c1, %c0_3, %c0_4] : memref<3x32x32xf32, #tpu.memory_space<vmem>>, vector<1x32x32xf32>
    %6 = vector.shape_cast %5 : vector<1x32x32xf32> to vector<32x32xf32>
    %c2 = arith.constant 2 : index
    %c0_5 = arith.constant 0 : index
    %c0_6 = arith.constant 0 : index
    %7 = vector.load %arg4[%c2, %c0_5, %c0_6] : memref<3x32x32xf32, #tpu.memory_space<vmem>>, vector<1x32x32xf32>
    %8 = vector.shape_cast %7 : vector<1x32x32xf32> to vector<32x32xf32>
    %c0_7 = arith.constant 0 : index
    %c0_8 = arith.constant 0 : index
    %c0_9 = arith.constant 0 : index
    %9 = vector.load %arg5[%c0_7, %c0_8, %c0_9] : memref<3x1x32xf32, #tpu.memory_space<vmem>>, vector<1x1x32xf32>
    %10 = vector.shape_cast %9 : vector<1x1x32xf32> to vector<1x32xf32>
    %c1_10 = arith.constant 1 : index
    %c0_11 = arith.constant 0 : index
    %c0_12 = arith.constant 0 : index
    %11 = vector.load %arg5[%c1_10, %c0_11, %c0_12] : memref<3x1x32xf32, #tpu.memory_space<vmem>>, vector<1x1x32xf32>
    %12 = vector.shape_cast %11 : vector<1x1x32xf32> to vector<1x32xf32>
    %c2_13 = arith.constant 2 : index
    %c0_14 = arith.constant 0 : index
    %c0_15 = arith.constant 0 : index
    %13 = vector.load %arg5[%c2_13, %c0_14, %c0_15] : memref<3x1x32xf32, #tpu.memory_space<vmem>>, vector<1x1x32xf32>
    %14 = vector.shape_cast %13 : vector<1x1x32xf32> to vector<1x32xf32>
    %c0_16 = arith.constant 0 : index
    %c0_17 = arith.constant 0 : index
    %15 = vector.load %arg9[%c0_16, %c0_17] : memref<4x32xf32, #tpu.memory_space<vmem>>, vector<4x32xf32>
    %c0_i32_18 = arith.constant 0 : i32
    %16 = arith.index_cast %c0_i32_18 : i32 to index
    %c0_19 = arith.constant 0 : index
    %c0_20 = arith.constant 0 : index
    %c0_21 = arith.constant 0 : index
    %17 = vector.load %arg2[%16, %c0_19, %c0_20, %c0_21] : memref<8x3x4x32xf32, #tpu.memory_space<vmem>>, vector<1x3x4x32xf32>
    %18 = vector.shape_cast %17 : vector<1x3x4x32xf32> to vector<3x4x32xf32>
    %19 = arith.index_cast %c0_i32_18 : i32 to index
    %c0_22 = arith.constant 0 : index
    %c0_23 = arith.constant 0 : index
    %20 = vector.load %arg3[%19, %c0_22, %c0_23] : memref<8x4x1xf32, #tpu.memory_space<vmem>>, vector<1x4x1xf32>
    %21 = vector.shape_cast %20 : vector<1x4x1xf32> to vector<4x1xf32>
    %cst = arith.constant dense<0.000000e+00> : vector<4x32xf32>
    %22 = tpu.matmul %15, %4, %cst {dimension_numbers = #tpu.dot_dimension_numbers<[1], [0], [0], [1], [0, 0, 1, 1], [], []>} : vector<4x32xf32>, vector<32x32xf32>, vector<4x32xf32> -> vector<4x32xf32>
    %23 = vector.broadcast %10 : vector<1x32xf32> to vector<4x32xf32>
    %24 = arith.addf %22, %23 : vector<4x32xf32>
    %cst_24 = arith.constant dense<0.000000e+00> : vector<4x32xf32>
    %25 = tpu.matmul %15, %6, %cst_24 {dimension_numbers = #tpu.dot_dimension_numbers<[1], [0], [0], [1], [0, 0, 1, 1], [], []>} : vector<4x32xf32>, vector<32x32xf32>, vector<4x32xf32> -> vector<4x32xf32>
    %26 = vector.broadcast %12 : vector<1x32xf32> to vector<4x32xf32>
    %27 = arith.addf %25, %26 : vector<4x32xf32>
    %cst_25 = arith.constant dense<0.000000e+00> : vector<4x32xf32>
    %28 = tpu.matmul %15, %8, %cst_25 {dimension_numbers = #tpu.dot_dimension_numbers<[1], [0], [0], [1], [0, 0, 1, 1], [], []>} : vector<4x32xf32>, vector<32x32xf32>, vector<4x32xf32> -> vector<4x32xf32>
    %29 = vector.broadcast %14 : vector<1x32xf32> to vector<4x32xf32>
    %30 = arith.addf %28, %29 : vector<4x32xf32>
    %31 = vector.extract_strided_slice %18 {offsets = [0, 0, 0], sizes = [1, 4, 32], strides = [1, 1, 1]} : vector<3x4x32xf32> to vector<1x4x32xf32>
    %32 = vector.shape_cast %31 : vector<1x4x32xf32> to vector<4x32xf32>
    %33 = arith.addf %32, %24 : vector<4x32xf32>
    %34 = arith.negf %33 : vector<4x32xf32>
    %35 = math.exp %34 : vector<4x32xf32>
    %cst_26 = arith.constant 1.000000e+00 : f32
    %36 = vector.broadcast %cst_26 : f32 to vector<4x32xf32>
    %37 = arith.addf %36, %35 : vector<4x32xf32>
    %38 = arith.divf %36, %37 : vector<4x32xf32>
    %39 = vector.extract_strided_slice %18 {offsets = [1, 0, 0], sizes = [1, 4, 32], strides = [1, 1, 1]} : vector<3x4x32xf32> to vector<1x4x32xf32>
    %40 = vector.shape_cast %39 : vector<1x4x32xf32> to vector<4x32xf32>
    %41 = arith.addf %40, %27 : vector<4x32xf32>
    %42 = arith.negf %41 : vector<4x32xf32>
    %43 = math.exp %42 : vector<4x32xf32>
    %cst_27 = arith.constant 1.000000e+00 : f32
    %44 = vector.broadcast %cst_27 : f32 to vector<4x32xf32>
    %45 = arith.addf %44, %43 : vector<4x32xf32>
    %46 = arith.divf %44, %45 : vector<4x32xf32>
    %47 = vector.extract_strided_slice %18 {offsets = [2, 0, 0], sizes = [1, 4, 32], strides = [1, 1, 1]} : vector<3x4x32xf32> to vector<1x4x32xf32>
    %48 = vector.shape_cast %47 : vector<1x4x32xf32> to vector<4x32xf32>
    %49 = arith.mulf %38, %30 : vector<4x32xf32>
    %50 = arith.addf %48, %49 : vector<4x32xf32>
    %51 = math.tanh %50 : vector<4x32xf32>
    %52 = arith.subf %15, %51 : vector<4x32xf32>
    %53 = arith.mulf %46, %52 : vector<4x32xf32>
    %54 = arith.addf %51, %53 : vector<4x32xf32>
    %55 = arith.subf %54, %15 : vector<4x32xf32>
    %56 = vector.broadcast %21 : vector<4x1xf32> to vector<4x32xf32>
    %57 = arith.mulf %56, %55 : vector<4x32xf32>
    %58 = arith.addf %15, %57 : vector<4x32xf32>
    %59 = arith.index_cast %c0_i32_18 : i32 to index
    %c0_28 = arith.constant 0 : index
    %c0_29 = arith.constant 0 : index
    %60 = vector.load %arg8[%59, %c0_28, %c0_29] : memref<8x4x32xf32, #tpu.memory_space<vmem>>, vector<1x4x32xf32>
    %61 = vector.shape_cast %60 : vector<1x4x32xf32> to vector<4x32xf32>
    %62 = vector.shape_cast %58 : vector<4x32xf32> to vector<1x4x32xf32>
    tpu.vector_store %arg8[%59, %c0_28, %c0_29], %62 {strides = array<i32>} : memref<8x4x32xf32, #tpu.memory_space<vmem>>, vector<1x4x32xf32>,
    %c1_i32 = arith.constant 1 : i32
    %63 = arith.index_cast %c1_i32 : i32 to index
    %c0_30 = arith.constant 0 : index
    %c0_31 = arith.constant 0 : index
    %c0_32 = arith.constant 0 : index
    %64 = vector.load %arg2[%63, %c0_30, %c0_31, %c0_32] : memref<8x3x4x32xf32, #tpu.memory_space<vmem>>, vector<1x3x4x32xf32>
    %65 = vector.shape_cast %64 : vector<1x3x4x32xf32> to vector<3x4x32xf32>
    %66 = arith.index_cast %c1_i32 : i32 to index
    %c0_33 = arith.constant 0 : index
    %c0_34 = arith.constant 0 : index
    %67 = vector.load %arg3[%66, %c0_33, %c0_34] : memref<8x4x1xf32, #tpu.memory_space<vmem>>, vector<1x4x1xf32>
    %68 = vector.shape_cast %67 : vector<1x4x1xf32> to vector<4x1xf32>
    %cst_35 = arith.constant dense<0.000000e+00> : vector<4x32xf32>
    %69 = tpu.matmul %58, %4, %cst_35 {dimension_numbers = #tpu.dot_dimension_numbers<[1], [0], [0], [1], [0, 0, 1, 1], [], []>} : vector<4x32xf32>, vector<32x32xf32>, vector<4x32xf32> -> vector<4x32xf32>
    %70 = vector.broadcast %10 : vector<1x32xf32> to vector<4x32xf32>
    %71 = arith.addf %69, %70 : vector<4x32xf32>
    %cst_36 = arith.constant dense<0.000000e+00> : vector<4x32xf32>
    %72 = tpu.matmul %58, %6, %cst_36 {dimension_numbers = #tpu.dot_dimension_numbers<[1], [0], [0], [1], [0, 0, 1, 1], [], []>} : vector<4x32xf32>, vector<32x32xf32>, vector<4x32xf32> -> vector<4x32xf32>
    %73 = vector.broadcast %12 : vector<1x32xf32> to vector<4x32xf32>
    %74 = arith.addf %72, %73 : vector<4x32xf32>
    %cst_37 = arith.constant dense<0.000000e+00> : vector<4x32xf32>
    %75 = tpu.matmul %58, %8, %cst_37 {dimension_numbers = #tpu.dot_dimension_numbers<[1], [0], [0], [1], [0, 0, 1, 1], [], []>} : vector<4x32xf32>, vector<32x32xf32>, vector<4x32xf32> -> vector<4x32xf32>
    %76 = vector.broadcast %14 : vector<1x32xf32> to vector<4x32xf32>
    %77 = arith.addf %75, %76 : vector<4x32xf32>
    %78 = vector.extract_strided_slice %65 {offsets = [0, 0, 0], sizes = [1, 4, 32], strides = [1, 1, 1]} : vector<3x4x32xf32> to vector<1x4x32xf32>
    %79 = vector.shape_cast %78 : vector<1x4x32xf32> to vector<4x32xf32>
    %80 = arith.addf %79, %71 : vector<4x32xf32>
    %81 = arith.negf %80 : vector<4x32xf32>
    %82 = math.exp %81 : vector<4x32xf32>
    %cst_38 = arith.constant 1.000000e+00 : f32
    %83 = vector.broadcast %cst_38 : f32 to vector<4x32xf32>
    %84 = arith.addf %83, %82 : vector<4x32xf32>
    %85 = arith.divf %83, %84 : vector<4x32xf32>
    %86 = vector.extract_strided_slice %65 {offsets = [1, 0, 0], sizes = [1, 4, 32], strides = [1, 1, 1]} : vector<3x4x32xf32> to vector<1x4x32xf32>
    %87 = vector.shape_cast %86 : vector<1x4x32xf32> to vector<4x32xf32>
    %88 = arith.addf %87, %74 : vector<4x32xf32>
    %89 = arith.negf %88 : vector<4x32xf32>
    %90 = math.exp %89 : vector<4x32xf32>
    %cst_39 = arith.constant 1.000000e+00 : f32
    %91 = vector.broadcast %cst_39 : f32 to vector<4x32xf32>
    %92 = arith.addf %91, %90 : vector<4x32xf32>
    %93 = arith.divf %91, %92 : vector<4x32xf32>
    %94 = vector.extract_strided_slice %65 {offsets = [2, 0, 0], sizes = [1, 4, 32], strides = [1, 1, 1]} : vector<3x4x32xf32> to vector<1x4x32xf32>
    %95 = vector.shape_cast %94 : vector<1x4x32xf32> to vector<4x32xf32>
    %96 = arith.mulf %85, %77 : vector<4x32xf32>
    %97 = arith.addf %95, %96 : vector<4x32xf32>
    %98 = math.tanh %97 : vector<4x32xf32>
    %99 = arith.subf %58, %98 : vector<4x32xf32>
    %100 = arith.mulf %93, %99 : vector<4x32xf32>
    %101 = arith.addf %98, %100 : vector<4x32xf32>
    %102 = arith.subf %101, %58 : vector<4x32xf32>
    %103 = vector.broadcast %68 : vector<4x1xf32> to vector<4x32xf32>
    %104 = arith.mulf %103, %102 : vector<4x32xf32>
    %105 = arith.addf %58, %104 : vector<4x32xf32>
    %106 = arith.index_cast %c1_i32 : i32 to index
    %c0_40 = arith.constant 0 : index
    %c0_41 = arith.constant 0 : index
    %107 = vector.load %arg8[%106, %c0_40, %c0_41] : memref<8x4x32xf32, #tpu.memory_space<vmem>>, vector<1x4x32xf32>
    %108 = vector.shape_cast %107 : vector<1x4x32xf32> to vector<4x32xf32>
    %109 = vector.shape_cast %105 : vector<4x32xf32> to vector<1x4x32xf32>
    tpu.vector_store %arg8[%106, %c0_40, %c0_41], %109 {strides = array<i32>} : memref<8x4x32xf32, #tpu.memory_space<vmem>>, vector<1x4x32xf32>,
    %c2_i32 = arith.constant 2 : i32
    %110 = arith.index_cast %c2_i32 : i32 to index
    %c0_42 = arith.constant 0 : index
    %c0_43 = arith.constant 0 : index
    %c0_44 = arith.constant 0 : index
    %111 = vector.load %arg2[%110, %c0_42, %c0_43, %c0_44] : memref<8x3x4x32xf32, #tpu.memory_space<vmem>>, vector<1x3x4x32xf32>
    %112 = vector.shape_cast %111 : vector<1x3x4x32xf32> to vector<3x4x32xf32>
    %113 = arith.index_cast %c2_i32 : i32 to index
    %c0_45 = arith.constant 0 : index
    %c0_46 = arith.constant 0 : index
    %114 = vector.load %arg3[%113, %c0_45, %c0_46] : memref<8x4x1xf32, #tpu.memory_space<vmem>>, vector<1x4x1xf32>
    %115 = vector.shape_cast %114 : vector<1x4x1xf32> to vector<4x1xf32>
    %cst_47 = arith.constant dense<0.000000e+00> : vector<4x32xf32>
    %116 = tpu.matmul %105, %4, %cst_47 {dimension_numbers = #tpu.dot_dimension_numbers<[1], [0], [0], [1], [0, 0, 1, 1], [], []>} : vector<4x32xf32>, vector<32x32xf32>, vector<4x32xf32> -> vector<4x32xf32>
    %117 = vector.broadcast %10 : vector<1x32xf32> to vector<4x32xf32>
    %118 = arith.addf %116, %117 : vector<4x32xf32>
    %cst_48 = arith.constant dense<0.000000e+00> : vector<4x32xf32>
    %119 = tpu.matmul %105, %6, %cst_48 {dimension_numbers = #tpu.dot_dimension_numbers<[1], [0], [0], [1], [0, 0, 1, 1], [], []>} : vector<4x32xf32>, vector<32x32xf32>, vector<4x32xf32> -> vector<4x32xf32>
    %120 = vector.broadcast %12 : vector<1x32xf32> to vector<4x32xf32>
    %121 = arith.addf %119, %120 : vector<4x32xf32>
    %cst_49 = arith.constant dense<0.000000e+00> : vector<4x32xf32>
    %122 = tpu.matmul %105, %8, %cst_49 {dimension_numbers = #tpu.dot_dimension_numbers<[1], [0], [0], [1], [0, 0, 1, 1], [], []>} : vector<4x32xf32>, vector<32x32xf32>, vector<4x32xf32> -> vector<4x32xf32>
    %123 = vector.broadcast %14 : vector<1x32xf32> to vector<4x32xf32>
    %124 = arith.addf %122, %123 : vector<4x32xf32>
    %125 = vector.extract_strided_slice %112 {offsets = [0, 0, 0], sizes = [1, 4, 32], strides = [1, 1, 1]} : vector<3x4x32xf32> to vector<1x4x32xf32>
    %126 = vector.shape_cast %125 : vector<1x4x32xf32> to vector<4x32xf32>
    %127 = arith.addf %126, %118 : vector<4x32xf32>
    %128 = arith.negf %127 : vector<4x32xf32>
    %129 = math.exp %128 : vector<4x32xf32>
    %cst_50 = arith.constant 1.000000e+00 : f32
    %130 = vector.broadcast %cst_50 : f32 to vector<4x32xf32>
    %131 = arith.addf %130, %129 : vector<4x32xf32>
    %132 = arith.divf %130, %131 : vector<4x32xf32>
    %133 = vector.extract_strided_slice %112 {offsets = [1, 0, 0], sizes = [1, 4, 32], strides = [1, 1, 1]} : vector<3x4x32xf32> to vector<1x4x32xf32>
    %134 = vector.shape_cast %133 : vector<1x4x32xf32> to vector<4x32xf32>
    %135 = arith.addf %134, %121 : vector<4x32xf32>
    %136 = arith.negf %135 : vector<4x32xf32>
    %137 = math.exp %136 : vector<4x32xf32>
    %cst_51 = arith.constant 1.000000e+00 : f32
    %138 = vector.broadcast %cst_51 : f32 to vector<4x32xf32>
    %139 = arith.addf %138, %137 : vector<4x32xf32>
    %140 = arith.divf %138, %139 : vector<4x32xf32>
    %141 = vector.extract_strided_slice %112 {offsets = [2, 0, 0], sizes = [1, 4, 32], strides = [1, 1, 1]} : vector<3x4x32xf32> to vector<1x4x32xf32>
    %142 = vector.shape_cast %141 : vector<1x4x32xf32> to vector<4x32xf32>
    %143 = arith.mulf %132, %124 : vector<4x32xf32>
    %144 = arith.addf %142, %143 : vector<4x32xf32>
    %145 = math.tanh %144 : vector<4x32xf32>
    %146 = arith.subf %105, %145 : vector<4x32xf32>
    %147 = arith.mulf %140, %146 : vector<4x32xf32>
    %148 = arith.addf %145, %147 : vector<4x32xf32>
    %149 = arith.subf %148, %105 : vector<4x32xf32>
    %150 = vector.broadcast %115 : vector<4x1xf32> to vector<4x32xf32>
    %151 = arith.mulf %150, %149 : vector<4x32xf32>
    %152 = arith.addf %105, %151 : vector<4x32xf32>
    %153 = arith.index_cast %c2_i32 : i32 to index
    %c0_52 = arith.constant 0 : index
    %c0_53 = arith.constant 0 : index
    %154 = vector.load %arg8[%153, %c0_52, %c0_53] : memref<8x4x32xf32, #tpu.memory_space<vmem>>, vector<1x4x32xf32>
    %155 = vector.shape_cast %154 : vector<1x4x32xf32> to vector<4x32xf32>
    %156 = vector.shape_cast %152 : vector<4x32xf32> to vector<1x4x32xf32>
    tpu.vector_store %arg8[%153, %c0_52, %c0_53], %156 {strides = array<i32>} : memref<8x4x32xf32, #tpu.memory_space<vmem>>, vector<1x4x32xf32>,
    %c3_i32 = arith.constant 3 : i32
    %157 = arith.index_cast %c3_i32 : i32 to index
    %c0_54 = arith.constant 0 : index
    %c0_55 = arith.constant 0 : index
    %c0_56 = arith.constant 0 : index
    %158 = vector.load %arg2[%157, %c0_54, %c0_55, %c0_56] : memref<8x3x4x32xf32, #tpu.memory_space<vmem>>, vector<1x3x4x32xf32>
    %159 = vector.shape_cast %158 : vector<1x3x4x32xf32> to vector<3x4x32xf32>
    %160 = arith.index_cast %c3_i32 : i32 to index
    %c0_57 = arith.constant 0 : index
    %c0_58 = arith.constant 0 : index
    %161 = vector.load %arg3[%160, %c0_57, %c0_58] : memref<8x4x1xf32, #tpu.memory_space<vmem>>, vector<1x4x1xf32>
    %162 = vector.shape_cast %161 : vector<1x4x1xf32> to vector<4x1xf32>
    %cst_59 = arith.constant dense<0.000000e+00> : vector<4x32xf32>
    %163 = tpu.matmul %152, %4, %cst_59 {dimension_numbers = #tpu.dot_dimension_numbers<[1], [0], [0], [1], [0, 0, 1, 1], [], []>} : vector<4x32xf32>, vector<32x32xf32>, vector<4x32xf32> -> vector<4x32xf32>
    %164 = vector.broadcast %10 : vector<1x32xf32> to vector<4x32xf32>
    %165 = arith.addf %163, %164 : vector<4x32xf32>
    %cst_60 = arith.constant dense<0.000000e+00> : vector<4x32xf32>
    %166 = tpu.matmul %152, %6, %cst_60 {dimension_numbers = #tpu.dot_dimension_numbers<[1], [0], [0], [1], [0, 0, 1, 1], [], []>} : vector<4x32xf32>, vector<32x32xf32>, vector<4x32xf32> -> vector<4x32xf32>
    %167 = vector.broadcast %12 : vector<1x32xf32> to vector<4x32xf32>
    %168 = arith.addf %166, %167 : vector<4x32xf32>
    %cst_61 = arith.constant dense<0.000000e+00> : vector<4x32xf32>
    %169 = tpu.matmul %152, %8, %cst_61 {dimension_numbers = #tpu.dot_dimension_numbers<[1], [0], [0], [1], [0, 0, 1, 1], [], []>} : vector<4x32xf32>, vector<32x32xf32>, vector<4x32xf32> -> vector<4x32xf32>
    %170 = vector.broadcast %14 : vector<1x32xf32> to vector<4x32xf32>
    %171 = arith.addf %169, %170 : vector<4x32xf32>
    %172 = vector.extract_strided_slice %159 {offsets = [0, 0, 0], sizes = [1, 4, 32], strides = [1, 1, 1]} : vector<3x4x32xf32> to vector<1x4x32xf32>
    %173 = vector.shape_cast %172 : vector<1x4x32xf32> to vector<4x32xf32>
    %174 = arith.addf %173, %165 : vector<4x32xf32>
    %175 = arith.negf %174 : vector<4x32xf32>
    %176 = math.exp %175 : vector<4x32xf32>
    %cst_62 = arith.constant 1.000000e+00 : f32
    %177 = vector.broadcast %cst_62 : f32 to vector<4x32xf32>
    %178 = arith.addf %177, %176 : vector<4x32xf32>
    %179 = arith.divf %177, %178 : vector<4x32xf32>
    %180 = vector.extract_strided_slice %159 {offsets = [1, 0, 0], sizes = [1, 4, 32], strides = [1, 1, 1]} : vector<3x4x32xf32> to vector<1x4x32xf32>
    %181 = vector.shape_cast %180 : vector<1x4x32xf32> to vector<4x32xf32>
    %182 = arith.addf %181, %168 : vector<4x32xf32>
    %183 = arith.negf %182 : vector<4x32xf32>
    %184 = math.exp %183 : vector<4x32xf32>
    %cst_63 = arith.constant 1.000000e+00 : f32
    %185 = vector.broadcast %cst_63 : f32 to vector<4x32xf32>
    %186 = arith.addf %185, %184 : vector<4x32xf32>
    %187 = arith.divf %185, %186 : vector<4x32xf32>
    %188 = vector.extract_strided_slice %159 {offsets = [2, 0, 0], sizes = [1, 4, 32], strides = [1, 1, 1]} : vector<3x4x32xf32> to vector<1x4x32xf32>
    %189 = vector.shape_cast %188 : vector<1x4x32xf32> to vector<4x32xf32>
    %190 = arith.mulf %179, %171 : vector<4x32xf32>
    %191 = arith.addf %189, %190 : vector<4x32xf32>
    %192 = math.tanh %191 : vector<4x32xf32>
    %193 = arith.subf %152, %192 : vector<4x32xf32>
    %194 = arith.mulf %187, %193 : vector<4x32xf32>
    %195 = arith.addf %192, %194 : vector<4x32xf32>
    %196 = arith.subf %195, %152 : vector<4x32xf32>
    %197 = vector.broadcast %162 : vector<4x1xf32> to vector<4x32xf32>
    %198 = arith.mulf %197, %196 : vector<4x32xf32>
    %199 = arith.addf %152, %198 : vector<4x32xf32>
    %200 = arith.index_cast %c3_i32 : i32 to index
    %c0_64 = arith.constant 0 : index
    %c0_65 = arith.constant 0 : index
    %201 = vector.load %arg8[%200, %c0_64, %c0_65] : memref<8x4x32xf32, #tpu.memory_space<vmem>>, vector<1x4x32xf32>
    %202 = vector.shape_cast %201 : vector<1x4x32xf32> to vector<4x32xf32>
    %203 = vector.shape_cast %199 : vector<4x32xf32> to vector<1x4x32xf32>
    tpu.vector_store %arg8[%200, %c0_64, %c0_65], %203 {strides = array<i32>} : memref<8x4x32xf32, #tpu.memory_space<vmem>>, vector<1x4x32xf32>,
    %c4_i32 = arith.constant 4 : i32
    %204 = arith.index_cast %c4_i32 : i32 to index
    %c0_66 = arith.constant 0 : index
    %c0_67 = arith.constant 0 : index
    %c0_68 = arith.constant 0 : index
    %205 = vector.load %arg2[%204, %c0_66, %c0_67, %c0_68] : memref<8x3x4x32xf32, #tpu.memory_space<vmem>>, vector<1x3x4x32xf32>
    %206 = vector.shape_cast %205 : vector<1x3x4x32xf32> to vector<3x4x32xf32>
    %207 = arith.index_cast %c4_i32 : i32 to index
    %c0_69 = arith.constant 0 : index
    %c0_70 = arith.constant 0 : index
    %208 = vector.load %arg3[%207, %c0_69, %c0_70] : memref<8x4x1xf32, #tpu.memory_space<vmem>>, vector<1x4x1xf32>
    %209 = vector.shape_cast %208 : vector<1x4x1xf32> to vector<4x1xf32>
    %cst_71 = arith.constant dense<0.000000e+00> : vector<4x32xf32>
    %210 = tpu.matmul %199, %4, %cst_71 {dimension_numbers = #tpu.dot_dimension_numbers<[1], [0], [0], [1], [0, 0, 1, 1], [], []>} : vector<4x32xf32>, vector<32x32xf32>, vector<4x32xf32> -> vector<4x32xf32>
    %211 = vector.broadcast %10 : vector<1x32xf32> to vector<4x32xf32>
    %212 = arith.addf %210, %211 : vector<4x32xf32>
    %cst_72 = arith.constant dense<0.000000e+00> : vector<4x32xf32>
    %213 = tpu.matmul %199, %6, %cst_72 {dimension_numbers = #tpu.dot_dimension_numbers<[1], [0], [0], [1], [0, 0, 1, 1], [], []>} : vector<4x32xf32>, vector<32x32xf32>, vector<4x32xf32> -> vector<4x32xf32>
    %214 = vector.broadcast %12 : vector<1x32xf32> to vector<4x32xf32>
    %215 = arith.addf %213, %214 : vector<4x32xf32>
    %cst_73 = arith.constant dense<0.000000e+00> : vector<4x32xf32>
    %216 = tpu.matmul %199, %8, %cst_73 {dimension_numbers = #tpu.dot_dimension_numbers<[1], [0], [0], [1], [0, 0, 1, 1], [], []>} : vector<4x32xf32>, vector<32x32xf32>, vector<4x32xf32> -> vector<4x32xf32>
    %217 = vector.broadcast %14 : vector<1x32xf32> to vector<4x32xf32>
    %218 = arith.addf %216, %217 : vector<4x32xf32>
    %219 = vector.extract_strided_slice %206 {offsets = [0, 0, 0], sizes = [1, 4, 32], strides = [1, 1, 1]} : vector<3x4x32xf32> to vector<1x4x32xf32>
    %220 = vector.shape_cast %219 : vector<1x4x32xf32> to vector<4x32xf32>
    %221 = arith.addf %220, %212 : vector<4x32xf32>
    %222 = arith.negf %221 : vector<4x32xf32>
    %223 = math.exp %222 : vector<4x32xf32>
    %cst_74 = arith.constant 1.000000e+00 : f32
    %224 = vector.broadcast %cst_74 : f32 to vector<4x32xf32>
    %225 = arith.addf %224, %223 : vector<4x32xf32>
    %226 = arith.divf %224, %225 : vector<4x32xf32>
    %227 = vector.extract_strided_slice %206 {offsets = [1, 0, 0], sizes = [1, 4, 32], strides = [1, 1, 1]} : vector<3x4x32xf32> to vector<1x4x32xf32>
    %228 = vector.shape_cast %227 : vector<1x4x32xf32> to vector<4x32xf32>
    %229 = arith.addf %228, %215 : vector<4x32xf32>
    %230 = arith.negf %229 : vector<4x32xf32>
    %231 = math.exp %230 : vector<4x32xf32>
    %cst_75 = arith.constant 1.000000e+00 : f32
    %232 = vector.broadcast %cst_75 : f32 to vector<4x32xf32>
    %233 = arith.addf %232, %231 : vector<4x32xf32>
    %234 = arith.divf %232, %233 : vector<4x32xf32>
    %235 = vector.extract_strided_slice %206 {offsets = [2, 0, 0], sizes = [1, 4, 32], strides = [1, 1, 1]} : vector<3x4x32xf32> to vector<1x4x32xf32>
    %236 = vector.shape_cast %235 : vector<1x4x32xf32> to vector<4x32xf32>
    %237 = arith.mulf %226, %218 : vector<4x32xf32>
    %238 = arith.addf %236, %237 : vector<4x32xf32>
    %239 = math.tanh %238 : vector<4x32xf32>
    %240 = arith.subf %199, %239 : vector<4x32xf32>
    %241 = arith.mulf %234, %240 : vector<4x32xf32>
    %242 = arith.addf %239, %241 : vector<4x32xf32>
    %243 = arith.subf %242, %199 : vector<4x32xf32>
    %244 = vector.broadcast %209 : vector<4x1xf32> to vector<4x32xf32>
    %245 = arith.mulf %244, %243 : vector<4x32xf32>
    %246 = arith.addf %199, %245 : vector<4x32xf32>
    %247 = arith.index_cast %c4_i32 : i32 to index
    %c0_76 = arith.constant 0 : index
    %c0_77 = arith.constant 0 : index
    %248 = vector.load %arg8[%247, %c0_76, %c0_77] : memref<8x4x32xf32, #tpu.memory_space<vmem>>, vector<1x4x32xf32>
    %249 = vector.shape_cast %248 : vector<1x4x32xf32> to vector<4x32xf32>
    %250 = vector.shape_cast %246 : vector<4x32xf32> to vector<1x4x32xf32>
    tpu.vector_store %arg8[%247, %c0_76, %c0_77], %250 {strides = array<i32>} : memref<8x4x32xf32, #tpu.memory_space<vmem>>, vector<1x4x32xf32>,
    %c5_i32 = arith.constant 5 : i32
    %251 = arith.index_cast %c5_i32 : i32 to index
    %c0_78 = arith.constant 0 : index
    %c0_79 = arith.constant 0 : index
    %c0_80 = arith.constant 0 : index
    %252 = vector.load %arg2[%251, %c0_78, %c0_79, %c0_80] : memref<8x3x4x32xf32, #tpu.memory_space<vmem>>, vector<1x3x4x32xf32>
    %253 = vector.shape_cast %252 : vector<1x3x4x32xf32> to vector<3x4x32xf32>
    %254 = arith.index_cast %c5_i32 : i32 to index
    %c0_81 = arith.constant 0 : index
    %c0_82 = arith.constant 0 : index
    %255 = vector.load %arg3[%254, %c0_81, %c0_82] : memref<8x4x1xf32, #tpu.memory_space<vmem>>, vector<1x4x1xf32>
    %256 = vector.shape_cast %255 : vector<1x4x1xf32> to vector<4x1xf32>
    %cst_83 = arith.constant dense<0.000000e+00> : vector<4x32xf32>
    %257 = tpu.matmul %246, %4, %cst_83 {dimension_numbers = #tpu.dot_dimension_numbers<[1], [0], [0], [1], [0, 0, 1, 1], [], []>} : vector<4x32xf32>, vector<32x32xf32>, vector<4x32xf32> -> vector<4x32xf32>
    %258 = vector.broadcast %10 : vector<1x32xf32> to vector<4x32xf32>
    %259 = arith.addf %257, %258 : vector<4x32xf32>
    %cst_84 = arith.constant dense<0.000000e+00> : vector<4x32xf32>
    %260 = tpu.matmul %246, %6, %cst_84 {dimension_numbers = #tpu.dot_dimension_numbers<[1], [0], [0], [1], [0, 0, 1, 1], [], []>} : vector<4x32xf32>, vector<32x32xf32>, vector<4x32xf32> -> vector<4x32xf32>
    %261 = vector.broadcast %12 : vector<1x32xf32> to vector<4x32xf32>
    %262 = arith.addf %260, %261 : vector<4x32xf32>
    %cst_85 = arith.constant dense<0.000000e+00> : vector<4x32xf32>
    %263 = tpu.matmul %246, %8, %cst_85 {dimension_numbers = #tpu.dot_dimension_numbers<[1], [0], [0], [1], [0, 0, 1, 1], [], []>} : vector<4x32xf32>, vector<32x32xf32>, vector<4x32xf32> -> vector<4x32xf32>
    %264 = vector.broadcast %14 : vector<1x32xf32> to vector<4x32xf32>
    %265 = arith.addf %263, %264 : vector<4x32xf32>
    %266 = vector.extract_strided_slice %253 {offsets = [0, 0, 0], sizes = [1, 4, 32], strides = [1, 1, 1]} : vector<3x4x32xf32> to vector<1x4x32xf32>
    %267 = vector.shape_cast %266 : vector<1x4x32xf32> to vector<4x32xf32>
    %268 = arith.addf %267, %259 : vector<4x32xf32>
    %269 = arith.negf %268 : vector<4x32xf32>
    %270 = math.exp %269 : vector<4x32xf32>
    %cst_86 = arith.constant 1.000000e+00 : f32
    %271 = vector.broadcast %cst_86 : f32 to vector<4x32xf32>
    %272 = arith.addf %271, %270 : vector<4x32xf32>
    %273 = arith.divf %271, %272 : vector<4x32xf32>
    %274 = vector.extract_strided_slice %253 {offsets = [1, 0, 0], sizes = [1, 4, 32], strides = [1, 1, 1]} : vector<3x4x32xf32> to vector<1x4x32xf32>
    %275 = vector.shape_cast %274 : vector<1x4x32xf32> to vector<4x32xf32>
    %276 = arith.addf %275, %262 : vector<4x32xf32>
    %277 = arith.negf %276 : vector<4x32xf32>
    %278 = math.exp %277 : vector<4x32xf32>
    %cst_87 = arith.constant 1.000000e+00 : f32
    %279 = vector.broadcast %cst_87 : f32 to vector<4x32xf32>
    %280 = arith.addf %279, %278 : vector<4x32xf32>
    %281 = arith.divf %279, %280 : vector<4x32xf32>
    %282 = vector.extract_strided_slice %253 {offsets = [2, 0, 0], sizes = [1, 4, 32], strides = [1, 1, 1]} : vector<3x4x32xf32> to vector<1x4x32xf32>
    %283 = vector.shape_cast %282 : vector<1x4x32xf32> to vector<4x32xf32>
    %284 = arith.mulf %273, %265 : vector<4x32xf32>
    %285 = arith.addf %283, %284 : vector<4x32xf32>
    %286 = math.tanh %285 : vector<4x32xf32>
    %287 = arith.subf %246, %286 : vector<4x32xf32>
    %288 = arith.mulf %281, %287 : vector<4x32xf32>
    %289 = arith.addf %286, %288 : vector<4x32xf32>
    %290 = arith.subf %289, %246 : vector<4x32xf32>
    %291 = vector.broadcast %256 : vector<4x1xf32> to vector<4x32xf32>
    %292 = arith.mulf %291, %290 : vector<4x32xf32>
    %293 = arith.addf %246, %292 : vector<4x32xf32>
    %294 = arith.index_cast %c5_i32 : i32 to index
    %c0_88 = arith.constant 0 : index
    %c0_89 = arith.constant 0 : index
    %295 = vector.load %arg8[%294, %c0_88, %c0_89] : memref<8x4x32xf32, #tpu.memory_space<vmem>>, vector<1x4x32xf32>
    %296 = vector.shape_cast %295 : vector<1x4x32xf32> to vector<4x32xf32>
    %297 = vector.shape_cast %293 : vector<4x32xf32> to vector<1x4x32xf32>
    tpu.vector_store %arg8[%294, %c0_88, %c0_89], %297 {strides = array<i32>} : memref<8x4x32xf32, #tpu.memory_space<vmem>>, vector<1x4x32xf32>,
    %c6_i32 = arith.constant 6 : i32
    %298 = arith.index_cast %c6_i32 : i32 to index
    %c0_90 = arith.constant 0 : index
    %c0_91 = arith.constant 0 : index
    %c0_92 = arith.constant 0 : index
    %299 = vector.load %arg2[%298, %c0_90, %c0_91, %c0_92] : memref<8x3x4x32xf32, #tpu.memory_space<vmem>>, vector<1x3x4x32xf32>
    %300 = vector.shape_cast %299 : vector<1x3x4x32xf32> to vector<3x4x32xf32>
    %301 = arith.index_cast %c6_i32 : i32 to index
    %c0_93 = arith.constant 0 : index
    %c0_94 = arith.constant 0 : index
    %302 = vector.load %arg3[%301, %c0_93, %c0_94] : memref<8x4x1xf32, #tpu.memory_space<vmem>>, vector<1x4x1xf32>
    %303 = vector.shape_cast %302 : vector<1x4x1xf32> to vector<4x1xf32>
    %cst_95 = arith.constant dense<0.000000e+00> : vector<4x32xf32>
    %304 = tpu.matmul %293, %4, %cst_95 {dimension_numbers = #tpu.dot_dimension_numbers<[1], [0], [0], [1], [0, 0, 1, 1], [], []>} : vector<4x32xf32>, vector<32x32xf32>, vector<4x32xf32> -> vector<4x32xf32>
    %305 = vector.broadcast %10 : vector<1x32xf32> to vector<4x32xf32>
    %306 = arith.addf %304, %305 : vector<4x32xf32>
    %cst_96 = arith.constant dense<0.000000e+00> : vector<4x32xf32>
    %307 = tpu.matmul %293, %6, %cst_96 {dimension_numbers = #tpu.dot_dimension_numbers<[1], [0], [0], [1], [0, 0, 1, 1], [], []>} : vector<4x32xf32>, vector<32x32xf32>, vector<4x32xf32> -> vector<4x32xf32>
    %308 = vector.broadcast %12 : vector<1x32xf32> to vector<4x32xf32>
    %309 = arith.addf %307, %308 : vector<4x32xf32>
    %cst_97 = arith.constant dense<0.000000e+00> : vector<4x32xf32>
    %310 = tpu.matmul %293, %8, %cst_97 {dimension_numbers = #tpu.dot_dimension_numbers<[1], [0], [0], [1], [0, 0, 1, 1], [], []>} : vector<4x32xf32>, vector<32x32xf32>, vector<4x32xf32> -> vector<4x32xf32>
    %311 = vector.broadcast %14 : vector<1x32xf32> to vector<4x32xf32>
    %312 = arith.addf %310, %311 : vector<4x32xf32>
    %313 = vector.extract_strided_slice %300 {offsets = [0, 0, 0], sizes = [1, 4, 32], strides = [1, 1, 1]} : vector<3x4x32xf32> to vector<1x4x32xf32>
    %314 = vector.shape_cast %313 : vector<1x4x32xf32> to vector<4x32xf32>
    %315 = arith.addf %314, %306 : vector<4x32xf32>
    %316 = arith.negf %315 : vector<4x32xf32>
    %317 = math.exp %316 : vector<4x32xf32>
    %cst_98 = arith.constant 1.000000e+00 : f32
    %318 = vector.broadcast %cst_98 : f32 to vector<4x32xf32>
    %319 = arith.addf %318, %317 : vector<4x32xf32>
    %320 = arith.divf %318, %319 : vector<4x32xf32>
    %321 = vector.extract_strided_slice %300 {offsets = [1, 0, 0], sizes = [1, 4, 32], strides = [1, 1, 1]} : vector<3x4x32xf32> to vector<1x4x32xf32>
    %322 = vector.shape_cast %321 : vector<1x4x32xf32> to vector<4x32xf32>
    %323 = arith.addf %322, %309 : vector<4x32xf32>
    %324 = arith.negf %323 : vector<4x32xf32>
    %325 = math.exp %324 : vector<4x32xf32>
    %cst_99 = arith.constant 1.000000e+00 : f32
    %326 = vector.broadcast %cst_99 : f32 to vector<4x32xf32>
    %327 = arith.addf %326, %325 : vector<4x32xf32>
    %328 = arith.divf %326, %327 : vector<4x32xf32>
    %329 = vector.extract_strided_slice %300 {offsets = [2, 0, 0], sizes = [1, 4, 32], strides = [1, 1, 1]} : vector<3x4x32xf32> to vector<1x4x32xf32>
    %330 = vector.shape_cast %329 : vector<1x4x32xf32> to vector<4x32xf32>
    %331 = arith.mulf %320, %312 : vector<4x32xf32>
    %332 = arith.addf %330, %331 : vector<4x32xf32>
    %333 = math.tanh %332 : vector<4x32xf32>
    %334 = arith.subf %293, %333 : vector<4x32xf32>
    %335 = arith.mulf %328, %334 : vector<4x32xf32>
    %336 = arith.addf %333, %335 : vector<4x32xf32>
    %337 = arith.subf %336, %293 : vector<4x32xf32>
    %338 = vector.broadcast %303 : vector<4x1xf32> to vector<4x32xf32>
    %339 = arith.mulf %338, %337 : vector<4x32xf32>
    %340 = arith.addf %293, %339 : vector<4x32xf32>
    %341 = arith.index_cast %c6_i32 : i32 to index
    %c0_100 = arith.constant 0 : index
    %c0_101 = arith.constant 0 : index
    %342 = vector.load %arg8[%341, %c0_100, %c0_101] : memref<8x4x32xf32, #tpu.memory_space<vmem>>, vector<1x4x32xf32>
    %343 = vector.shape_cast %342 : vector<1x4x32xf32> to vector<4x32xf32>
    %344 = vector.shape_cast %340 : vector<4x32xf32> to vector<1x4x32xf32>
    tpu.vector_store %arg8[%341, %c0_100, %c0_101], %344 {strides = array<i32>} : memref<8x4x32xf32, #tpu.memory_space<vmem>>, vector<1x4x32xf32>,
    %c7_i32 = arith.constant 7 : i32
    %345 = arith.index_cast %c7_i32 : i32 to index
    %c0_102 = arith.constant 0 : index
    %c0_103 = arith.constant 0 : index
    %c0_104 = arith.constant 0 : index
    %346 = vector.load %arg2[%345, %c0_102, %c0_103, %c0_104] : memref<8x3x4x32xf32, #tpu.memory_space<vmem>>, vector<1x3x4x32xf32>
    %347 = vector.shape_cast %346 : vector<1x3x4x32xf32> to vector<3x4x32xf32>
    %348 = arith.index_cast %c7_i32 : i32 to index
    %c0_105 = arith.constant 0 : index
    %c0_106 = arith.constant 0 : index
    %349 = vector.load %arg3[%348, %c0_105, %c0_106] : memref<8x4x1xf32, #tpu.memory_space<vmem>>, vector<1x4x1xf32>
    %350 = vector.shape_cast %349 : vector<1x4x1xf32> to vector<4x1xf32>
    %cst_107 = arith.constant dense<0.000000e+00> : vector<4x32xf32>
    %351 = tpu.matmul %340, %4, %cst_107 {dimension_numbers = #tpu.dot_dimension_numbers<[1], [0], [0], [1], [0, 0, 1, 1], [], []>} : vector<4x32xf32>, vector<32x32xf32>, vector<4x32xf32> -> vector<4x32xf32>
    %352 = vector.broadcast %10 : vector<1x32xf32> to vector<4x32xf32>
    %353 = arith.addf %351, %352 : vector<4x32xf32>
    %cst_108 = arith.constant dense<0.000000e+00> : vector<4x32xf32>
    %354 = tpu.matmul %340, %6, %cst_108 {dimension_numbers = #tpu.dot_dimension_numbers<[1], [0], [0], [1], [0, 0, 1, 1], [], []>} : vector<4x32xf32>, vector<32x32xf32>, vector<4x32xf32> -> vector<4x32xf32>
    %355 = vector.broadcast %12 : vector<1x32xf32> to vector<4x32xf32>
    %356 = arith.addf %354, %355 : vector<4x32xf32>
    %cst_109 = arith.constant dense<0.000000e+00> : vector<4x32xf32>
    %357 = tpu.matmul %340, %8, %cst_109 {dimension_numbers = #tpu.dot_dimension_numbers<[1], [0], [0], [1], [0, 0, 1, 1], [], []>} : vector<4x32xf32>, vector<32x32xf32>, vector<4x32xf32> -> vector<4x32xf32>
    %358 = vector.broadcast %14 : vector<1x32xf32> to vector<4x32xf32>
    %359 = arith.addf %357, %358 : vector<4x32xf32>
    %360 = vector.extract_strided_slice %347 {offsets = [0, 0, 0], sizes = [1, 4, 32], strides = [1, 1, 1]} : vector<3x4x32xf32> to vector<1x4x32xf32>
    %361 = vector.shape_cast %360 : vector<1x4x32xf32> to vector<4x32xf32>
    %362 = arith.addf %361, %353 : vector<4x32xf32>
    %363 = arith.negf %362 : vector<4x32xf32>
    %364 = math.exp %363 : vector<4x32xf32>
    %cst_110 = arith.constant 1.000000e+00 : f32
    %365 = vector.broadcast %cst_110 : f32 to vector<4x32xf32>
    %366 = arith.addf %365, %364 : vector<4x32xf32>
    %367 = arith.divf %365, %366 : vector<4x32xf32>
    %368 = vector.extract_strided_slice %347 {offsets = [1, 0, 0], sizes = [1, 4, 32], strides = [1, 1, 1]} : vector<3x4x32xf32> to vector<1x4x32xf32>
    %369 = vector.shape_cast %368 : vector<1x4x32xf32> to vector<4x32xf32>
    %370 = arith.addf %369, %356 : vector<4x32xf32>
    %371 = arith.negf %370 : vector<4x32xf32>
    %372 = math.exp %371 : vector<4x32xf32>
    %cst_111 = arith.constant 1.000000e+00 : f32
    %373 = vector.broadcast %cst_111 : f32 to vector<4x32xf32>
    %374 = arith.addf %373, %372 : vector<4x32xf32>
    %375 = arith.divf %373, %374 : vector<4x32xf32>
    %376 = vector.extract_strided_slice %347 {offsets = [2, 0, 0], sizes = [1, 4, 32], strides = [1, 1, 1]} : vector<3x4x32xf32> to vector<1x4x32xf32>
    %377 = vector.shape_cast %376 : vector<1x4x32xf32> to vector<4x32xf32>
    %378 = arith.mulf %367, %359 : vector<4x32xf32>
    %379 = arith.addf %377, %378 : vector<4x32xf32>
    %380 = math.tanh %379 : vector<4x32xf32>
    %381 = arith.subf %340, %380 : vector<4x32xf32>
    %382 = arith.mulf %375, %381 : vector<4x32xf32>
    %383 = arith.addf %380, %382 : vector<4x32xf32>
    %384 = arith.subf %383, %340 : vector<4x32xf32>
    %385 = vector.broadcast %350 : vector<4x1xf32> to vector<4x32xf32>
    %386 = arith.mulf %385, %384 : vector<4x32xf32>
    %387 = arith.addf %340, %386 : vector<4x32xf32>
    %388 = arith.index_cast %c7_i32 : i32 to index
    %c0_112 = arith.constant 0 : index
    %c0_113 = arith.constant 0 : index
    %389 = vector.load %arg8[%388, %c0_112, %c0_113] : memref<8x4x32xf32, #tpu.memory_space<vmem>>, vector<1x4x32xf32>
    %390 = vector.shape_cast %389 : vector<1x4x32xf32> to vector<4x32xf32>
    %391 = vector.shape_cast %387 : vector<4x32xf32> to vector<1x4x32xf32>
    tpu.vector_store %arg8[%388, %c0_112, %c0_113], %391 {strides = array<i32>} : memref<8x4x32xf32, #tpu.memory_space<vmem>>, vector<1x4x32xf32>,
    %c8_i32 = arith.constant 8 : i32
    %c0_114 = arith.constant 0 : index
    %c0_115 = arith.constant 0 : index
    %392 = vector.load %arg9[%c0_114, %c0_115] : memref<4x32xf32, #tpu.memory_space<vmem>>, vector<4x32xf32>
    tpu.vector_store %arg9[%c0_114, %c0_115], %387 {strides = array<i32>} : memref<4x32xf32, #tpu.memory_space<vmem>>, vector<4x32xf32>,
    return
  }
  func.func @transform_0(%arg0: i32, %arg1: i32) -> (i32, i32, i32, i32) {
    %c0_i32 = arith.constant 0 : i32
    %c0_i32_0 = arith.constant 0 : i32
    %c0_i32_1 = arith.constant 0 : i32
    return %arg1, %c0_i32, %arg0, %c0_i32_0 : i32, i32, i32, i32
  }
  func.func @transform_1(%arg0: i32, %arg1: i32) -> (i32, i32, i32) {
    %c0_i32 = arith.constant 0 : i32
    %c0_i32_0 = arith.constant 0 : i32
    return %arg1, %arg0, %c0_i32 : i32, i32, i32
  }
  func.func @transform_2(%arg0: i32, %arg1: i32) -> (i32, i32, i32) {
    %c0_i32 = arith.constant 0 : i32
    %c0_i32_0 = arith.constant 0 : i32
    %c0_i32_1 = arith.constant 0 : i32
    %c0_i32_2 = arith.constant 0 : i32
    return %c0_i32, %c0_i32_0, %c0_i32_1 : i32, i32, i32
  }
  func.func @transform_3(%arg0: i32, %arg1: i32) -> (i32, i32, i32) {
    %c0_i32 = arith.constant 0 : i32
    %c0_i32_0 = arith.constant 0 : i32
    %c0_i32_1 = arith.constant 0 : i32
    %c0_i32_2 = arith.constant 0 : i32
    return %c0_i32, %c0_i32_0, %c0_i32_1 : i32, i32, i32
  }
  func.func @transform_4(%arg0: i32, %arg1: i32) -> (i32, i32) {
    %c0_i32 = arith.constant 0 : i32
    %c0_i32_0 = arith.constant 0 : i32
    %c0_i32_1 = arith.constant 0 : i32
    return %c0_i32, %c0_i32_0 : i32, i32
  }
  func.func @transform_5(%arg0: i32, %arg1: i32) -> (i32, i32) {
    %c0_i32 = arith.constant 0 : i32
    %c0_i32_0 = arith.constant 0 : i32
    %c0_i32_1 = arith.constant 0 : i32
    return %c0_i32, %c0_i32_0 : i32, i32
  }
  func.func @transform_6(%arg0: i32, %arg1: i32) -> (i32, i32, i32) {
    %c0_i32 = arith.constant 0 : i32
    %c0_i32_0 = arith.constant 0 : i32
    return %arg1, %arg0, %c0_i32 : i32, i32, i32
  }
}

</mosaic_0001>

<llo_original>
// kernel: tpu_custom_call.1
$region0: #{tpu_custom_call.1}
  #allocation0 [shape = 'u32[]', space=smem, size = 0x4, offset = 0x4, fixed_abs, tag = 'smem constant byte address 0x4 - core index']
  #allocation1 [shape = 'u32[144,128]{1,0:T(1,128)}', space=vmem, size = 0x12000, scoped, tag = 'internal scratch']
  #allocation2 [shape = 'f32[4,32]{1,0:T(4,128)}', space=vmem, size = 0x800, scoped, tag = 'scratch operand']
  %s0 = inlined_call_operand.hbm [shape: f32[16,3,4,32], index: 0, kind: input, shape index: {}]
  %s1 = inlined_call_operand.vmem [shape: f32[16,4,1], index: 1, kind: input, shape index: {}]
  %s2 = inlined_call_operand.hbm [shape: f32[3,32,32], index: 2, kind: input, shape index: {}]
  %s3 = inlined_call_operand.vmem [shape: f32[3,1,32], index: 3, kind: input, shape index: {}]
  %s4 = inlined_call_operand.vmem [shape: f32[1,32], index: 4, kind: input, shape index: {}]
  %s5 = inlined_call_operand.vmem [shape: f32[1,32], index: 5, kind: input, shape index: {}]
  %s6 = inlined_call_operand.hbm [shape: f32[16,4,32], index: 6, kind: output, shape index: {}]
  %s7 = sld [smem:[#allocation0]]
  $region69: #{tpu_custom_call.1} parent=0
    _
  %s9 = ssub.s32 1, %s7
  %s10 = scalar_select 0, %s9, %s7
  $region1: #{tpu_custom_call.1} parent=0
    #allocation3 [shape = 'u8[98304]{0}', space=vmem, size = 0x18000, scoped, tag = 'input window, operand 0']
    #allocation4 [shape = 's32[2]{0}', space=sflag, size = 0x8, scoped, tag = 'scoped memory for tpu_custom_call.1']
    #allocation5 [shape = 's32[2]{0}', space=sflag, size = 0x8, scoped, tag = 'scoped memory for tpu_custom_call.1']
    #allocation6 [shape = 'u8[49152]{0}', space=vmem, size = 0xc000, scoped, tag = 'input window, operand 2, single buffered']
    #allocation7 [shape = 's32[1]{0}', space=sflag, size = 0x4, scoped, tag = 'scoped memory for tpu_custom_call.1']
    #allocation8 [shape = 'u8[32768]{0}', space=vmem, size = 0x8000, scoped, tag = 'output window, operand 0']
    %11 = vsyncpa [#allocation4], 0
    %s12 = scalar_lea.sflag [#allocation4], 1
    %13 = vsyncpa %s12, 0
    %14 = vsyncpa [#allocation7], 0
    %15 = vsyncpa [#allocation5], 0
    %s16 = scalar_lea.sflag [#allocation5], 1
    %17 = vsyncpa %s16, 0
    loop: start=0, step=1, limit=4
    $region2: #{tpu_custom_call.1} parent=1 // loop_pre_header
      _
    $region3: #{tpu_custom_call.1} parent=1 // loop_header
      %s19 = sphi 0, %s23
      %p20 = scmp.ge.s32.totalorder %s19, 4
      %s26 = sphi 0, %s38
      %s27 = sphi 0, %s34
      %s28 = sphi 0, %s26
      %s29 = sphi 0, %s27
      %s30 = sphi 0, %s28
      %s31 = sphi 0, %s29
      %s43 = sphi 0, %s45
      %s46 = sphi 0, %s43
      %s47 = sphi 0, %s46
      %s63 = sphi 0, %s47
      %s71 = sphi 0, %s73
      %s74 = sphi 0, %s71
      %s75 = sphi 0, %s74
      %s91 = sphi 0, %s75
      %s95 = sphi 0, %s95
      %s97 = sphi 0, %s95
      %s98 = sphi 0, %s97
      %s112 = sphi 0, %s98
      %s116 = sphi 0, %s116
      %s118 = sphi 0, %s116
      %s119 = sphi 0, %s118
      %s133 = sphi 0, %s119
      %s137 = sphi 0, %s137
      %s139 = sphi 0, %s137
      %s140 = sphi 0, %s139
      %s154 = sphi 0, %s140
      %s158 = sphi 0, %s158
      %s160 = sphi 0, %s158
      %s161 = sphi 0, %s160
      %s175 = sphi 0, %s161
      %s183 = sphi 0, %s185
      %s186 = sphi 0, %s183
      %s187 = sphi 0, %s186
      %s203 = sphi 0, %s187
    $region4: #{tpu_custom_call.1} parent=1 // loop_header_branch
      %22 = sbr.rel (%p20) target = $region8
    $region5: #{tpu_custom_call.1} parent=1 // loop_body
      %s24 = ssub.s32 %s19, 1
      %s25 = ssub.s32 %s19, 2
      %s32 = sadd.s32 1, %s27
      %p33 = scmp.ge.s32.totalorder %s32, 2
      %s34 = scalar_select %p33, 0, %s32
      %s35 = sadd.s32 1, %s26
      %s36 = scalar_select %p33, %s35, %s26
      %p37 = scmp.ge.s32.totalorder %s36, 1
      %s38 = scalar_select %p37, 0, %s36
      %s39 = ssub.s32 %s27, %s34
      %s40 = ssub.s32 %s26, %s38
      %s41 = sor.u32 %s39, %s40
      %p42 = scmp.eq.s32.totalorder %s41, 0
      %s44 = sadd.s32 %s43, 1
      %s45 = scalar_select %p42, %s43, %s44
      %p48 = pneg %p42
      %p49 = scmp.eq.s32.totalorder %s19, 1
      %p50 = por %p48, %p49
      %p51 = scmp.ne.s32.totalorder %s43, %s46
      %p52 = scmp.eq.s32.totalorder %s19, 0
      %p53 = por %p51, %p52
      %p54 = scmp.ne.s32.totalorder %s43, %s46
      %p55 = scmp.eq.s32.totalorder %s24, 1
      %p56 = por %p54, %p55
      %p57 = scmp.ne.s32.totalorder %s46, %s47
      %p58 = scmp.eq.s32.totalorder %s24, 0
      %p59 = por %p57, %p58
      %p60 = scmp.ne.s32.totalorder %s46, %s47
      %p61 = scmp.eq.s32.totalorder %s25, 1
      %p62 = por %p60, %p61
      %p64 = scmp.ne.s32.totalorder %s47, %s63
      %p65 = scmp.eq.s32.totalorder %s25, 0
      %p66 = por %p64, %p65
      %s67 = ssub.s32 %s27, %s34
      %s68 = ssub.s32 %s26, %s38
      %s69 = sor.u32 %s67, %s68
      %p70 = scmp.eq.s32.totalorder %s69, 0
      %s72 = sadd.s32 %s71, 1
      %s73 = scalar_select %p70, %s71, %s72
      %p76 = pneg %p70
      %p77 = scmp.eq.s32.totalorder %s19, 1
      %p78 = por %p76, %p77
      %p79 = scmp.ne.s32.totalorder %s71, %s74
      %p80 = scmp.eq.s32.totalorder %s19, 0
      %p81 = por %p79, %p80
      %p82 = scmp.ne.s32.totalorder %s71, %s74
      %p83 = scmp.eq.s32.totalorder %s24, 1
      %p84 = por %p82, %p83
      %p85 = scmp.ne.s32.totalorder %s74, %s75
      %p86 = scmp.eq.s32.totalorder %s24, 0
      %p87 = por %p85, %p86
      %p88 = scmp.ne.s32.totalorder %s74, %s75
      %p89 = scmp.eq.s32.totalorder %s25, 1
      %p90 = por %p88, %p89
      %p92 = scmp.ne.s32.totalorder %s75, %s91
      %p93 = scmp.eq.s32.totalorder %s25, 0
      %p94 = por %p92, %p93
      %s96 = sadd.s32 %s95, 1
      %p99 = scmp.eq.s32.totalorder %s19, 1
      %p100 = scmp.ne.s32.totalorder %s95, %s97
      %p101 = scmp.eq.s32.totalorder %s19, 0
      %p102 = por %p100, %p101
      %p103 = scmp.ne.s32.totalorder %s95, %s97
      %p104 = scmp.eq.s32.totalorder %s24, 1
      %p105 = por %p103, %p104
      %p106 = scmp.ne.s32.totalorder %s97, %s98
      %p107 = scmp.eq.s32.totalorder %s24, 0
      %p108 = por %p106, %p107
      %p109 = scmp.ne.s32.totalorder %s97, %s98
      %p110 = scmp.eq.s32.totalorder %s25, 1
      %p111 = por %p109, %p110
      %p113 = scmp.ne.s32.totalorder %s98, %s112
      %p114 = scmp.eq.s32.totalorder %s25, 0
      %p115 = por %p113, %p114
      %s117 = sadd.s32 %s116, 1
      %p120 = scmp.eq.s32.totalorder %s19, 1
      %p121 = scmp.ne.s32.totalorder %s116, %s118
      %p122 = scmp.eq.s32.totalorder %s19, 0
      %p123 = por %p121, %p122
      %p124 = scmp.ne.s32.totalorder %s116, %s118
      %p125 = scmp.eq.s32.totalorder %s24, 1
      %p126 = por %p124, %p125
      %p127 = scmp.ne.s32.totalorder %s118, %s119
      %p128 = scmp.eq.s32.totalorder %s24, 0
      %p129 = por %p127, %p128
      %p130 = scmp.ne.s32.totalorder %s118, %s119
      %p131 = scmp.eq.s32.totalorder %s25, 1
      %p132 = por %p130, %p131
      %p134 = scmp.ne.s32.totalorder %s119, %s133
      %p135 = scmp.eq.s32.totalorder %s25, 0
      %p136 = por %p134, %p135
      %s138 = sadd.s32 %s137, 1
      %p141 = scmp.eq.s32.totalorder %s19, 1
      %p142 = scmp.ne.s32.totalorder %s137, %s139
      %p143 = scmp.eq.s32.totalorder %s19, 0
      %p144 = por %p142, %p143
      %p145 = scmp.ne.s32.totalorder %s137, %s139
      %p146 = scmp.eq.s32.totalorder %s24, 1
      %p147 = por %p145, %p146
      %p148 = scmp.ne.s32.totalorder %s139, %s140
      %p149 = scmp.eq.s32.totalorder %s24, 0
      %p150 = por %p148, %p149
      %p151 = scmp.ne.s32.totalorder %s139, %s140
      %p152 = scmp.eq.s32.totalorder %s25, 1
      %p153 = por %p151, %p152
      %p155 = scmp.ne.s32.totalorder %s140, %s154
      %p156 = scmp.eq.s32.totalorder %s25, 0
      %p157 = por %p155, %p156
      %s159 = sadd.s32 %s158, 1
      %p162 = scmp.eq.s32.totalorder %s19, 1
      %p163 = scmp.ne.s32.totalorder %s158, %s160
      %p164 = scmp.eq.s32.totalorder %s19, 0
      %p165 = por %p163, %p164
      %p166 = scmp.ne.s32.totalorder %s158, %s160
      %p167 = scmp.eq.s32.totalorder %s24, 1
      %p168 = por %p166, %p167
      %p169 = scmp.ne.s32.totalorder %s160, %s161
      %p170 = scmp.eq.s32.totalorder %s24, 0
      %p171 = por %p169, %p170
      %p172 = scmp.ne.s32.totalorder %s160, %s161
      %p173 = scmp.eq.s32.totalorder %s25, 1
      %p174 = por %p172, %p173
      %p176 = scmp.ne.s32.totalorder %s161, %s175
      %p177 = scmp.eq.s32.totalorder %s25, 0
      %p178 = por %p176, %p177
      %s179 = ssub.s32 %s27, %s34
      %s180 = ssub.s32 %s26, %s38
      %s181 = sor.u32 %s179, %s180
      %p182 = scmp.eq.s32.totalorder %s181, 0
      %s184 = sadd.s32 %s183, 1
      %s185 = scalar_select %p182, %s183, %s184
      %p188 = pneg %p182
      %p189 = scmp.eq.s32.totalorder %s19, 1
      %p190 = por %p188, %p189
      %p191 = scmp.ne.s32.totalorder %s183, %s186
      %p192 = scmp.eq.s32.totalorder %s19, 0
      %p193 = por %p191, %p192
      %p194 = scmp.ne.s32.totalorder %s183, %s186
      %p195 = scmp.eq.s32.totalorder %s24, 1
      %p196 = por %p194, %p195
      %p197 = scmp.ne.s32.totalorder %s186, %s187
      %p198 = scmp.eq.s32.totalorder %s24, 0
      %p199 = por %p197, %p198
      %p200 = scmp.ne.s32.totalorder %s186, %s187
      %p201 = scmp.eq.s32.totalorder %s25, 1
      %p202 = por %p200, %p201
      %p204 = scmp.ne.s32.totalorder %s187, %s203
      %p205 = scmp.eq.s32.totalorder %s25, 0
      %p206 = por %p204, %p205
      %p207 = scmp.le.s32.totalorder 1, %s19
      %p208 = scmp.lt.s32.totalorder %s19, 3
      %p209 = pnand %p207, %p208
      %p210 = pneg %p209
      // Predicated region
      $region9: #{tpu_custom_call.1} parent=5 // pred_check
        _
      $region10: #{tpu_custom_call.1} parent=5 // pred_check_branch
        %212 = sbr.rel (%p209) target = $region12
      $region11: #{tpu_custom_call.1} parent=5 // pred_region
        %s213 = ssub.s32 %s19, 1
        // Predicated region
        $region13: #{tpu_custom_call.1} parent=11 // pred_check
          %p214 = pneg %p108
        $region14: #{tpu_custom_call.1} parent=11 // pred_check_branch
          %216 = sbr.rel (%p214) target = $region16
        $region15: #{tpu_custom_call.1} parent=11 // pred_region
          %s218 = ssub.s32 1536, 1536
          %219 = vsyncadd [#allocation7], %s218
          %s220 = sshll.u32 [#allocation6], 4
          %s221 = int_to_ptr.vmem [resolvable:$true] %s220
          %226 = dma.hbm_to_vmem [thread:$0]  %s2, 1536, %s221, [#allocation7], 128, 128, 8
        $region16: #{tpu_custom_call.1} parent=11 // pred_fallthru
          _
        // Predicated region
        $region17: #{tpu_custom_call.1} parent=11 // pred_check
          %p227 = pneg %p129
        $region18: #{tpu_custom_call.1} parent=11 // pred_check_branch
          %229 = sbr.rel (%p227) target = $region20
        $region19: #{tpu_custom_call.1} parent=11 // pred_region
          _
        $region20: #{tpu_custom_call.1} parent=11 // pred_fallthru
          _
        // Predicated region
        $region21: #{tpu_custom_call.1} parent=11 // pred_check
          %p230 = pneg %p150
        $region22: #{tpu_custom_call.1} parent=11 // pred_check_branch
          %232 = sbr.rel (%p230) target = $region24
        $region23: #{tpu_custom_call.1} parent=11 // pred_region
          _
        $region24: #{tpu_custom_call.1} parent=11 // pred_fallthru
          _
        // Predicated region
        $region25: #{tpu_custom_call.1} parent=11 // pred_check
          %p233 = pneg %p171
        $region26: #{tpu_custom_call.1} parent=11 // pred_check_branch
          %235 = sbr.rel (%p233) target = $region28
        $region27: #{tpu_custom_call.1} parent=11 // pred_region
          _
        $region28: #{tpu_custom_call.1} parent=11 // pred_fallthru
          _
      $region12: #{tpu_custom_call.1} parent=5 // pred_fallthru
        _
      %p236 = scmp.lt.s32.totalorder %s19, 2
      // Predicated region
      $region29: #{tpu_custom_call.1} parent=5 // pred_check
        %p237 = pneg %p236
      $region30: #{tpu_custom_call.1} parent=5 // pred_check_branch
        %239 = sbr.rel (%p237) target = $region32
      $region31: #{tpu_custom_call.1} parent=5 // pred_region
        // Predicated region
        $region33: #{tpu_custom_call.1} parent=31 // pred_check
          %p240 = pneg %p53
        $region34: #{tpu_custom_call.1} parent=31 // pred_check_branch
          %242 = sbr.rel (%p240) target = $region36
        $region35: #{tpu_custom_call.1} parent=31 // pred_region
          %s243 = sand.u32 %s43, 1
          %s244 = scalar_lea.sflag [#allocation4], %s243
          %s245 = sand.u32 %s43, 1
          %s246 = smul.addr %s245, 96
          %s247 = scalar_lea.vmem [#allocation3], %s246
          %s248 = smul.u32 8, %s27
          %s250 = ssub.s32 1536, 1536
          %251 = vsyncadd %s244, %s250
          %s252 = smul.addr %s248, 3
          %s253 = sadd.s32 %s26, %s252
          %s254 = smul.addr %s253, 64
          %s255 = scalar_lea.hbm %s0, %s254
          %s256 = sshll.u32 %s247, 4
          %s257 = int_to_ptr.vmem [resolvable:$true] %s256
          %262 = dma.hbm_to_vmem [thread:$0]  %s255, 1536, %s257, %s244, 64, 64, 4
        $region36: #{tpu_custom_call.1} parent=31 // pred_fallthru
          _
        // Predicated region
        $region37: #{tpu_custom_call.1} parent=31 // pred_check
          %p263 = pneg %p81
        $region38: #{tpu_custom_call.1} parent=31 // pred_check_branch
          %265 = sbr.rel (%p263) target = $region40
        $region39: #{tpu_custom_call.1} parent=31 // pred_region
          %s266 = smul.u32 8, %s27
          %p267 = scmp.lt.s32.totalorder %s266, 15
          %s268 = scalar_select %p267, %s266, 15
          %p269 = scmp.lt.s32.totalorder %s26, 0
          %s270 = scalar_select %p269, %s26, 0
          %s271 = sadd.s32 %s270, %s268
          %s272 = smul.addr %s271, 4
          %s273 = scalar_lea.vmem %s1, %s272
          %s274 = smul.u32 8, %s27
        $region40: #{tpu_custom_call.1} parent=31 // pred_fallthru
          _
      $region32: #{tpu_custom_call.1} parent=5 // pred_fallthru
        _
      %p275 = scmp.le.s32.totalorder 1, %s19
      %p276 = scmp.lt.s32.totalorder %s19, 3
      %p277 = pnand %p275, %p276
      %p278 = pneg %p277
      // Predicated region
      $region41: #{tpu_custom_call.1} parent=5 // pred_check
        _
      $region42: #{tpu_custom_call.1} parent=5 // pred_check_branch
        %280 = sbr.rel (%p277) target = $region44
      $region43: #{tpu_custom_call.1} parent=5 // pred_region
        %s281 = ssub.s32 %s19, 1
        %s282 = sand.u32 %s46, 1
        %s283 = scalar_lea.sflag [#allocation4], %s282
        %s284 = sand.u32 %s46, 1
        %s285 = smul.addr %s284, 96
        %s286 = scalar_lea.vmem [#allocation3], %s285
        // Predicated region
        $region45: #{tpu_custom_call.1} parent=43 // pred_check
          %p287 = pneg %p59
        $region46: #{tpu_custom_call.1} parent=43 // pred_check_branch
          %289 = sbr.rel (%p287) target = $region48
        $region47: #{tpu_custom_call.1} parent=43 // pred_region
          %290 = dma.done %s283, 1536
        $region48: #{tpu_custom_call.1} parent=43 // pred_fallthru
          _
        // Predicated region
        $region49: #{tpu_custom_call.1} parent=43 // pred_check
          %p291 = pneg %p108
        $region50: #{tpu_custom_call.1} parent=43 // pred_check_branch
          %293 = sbr.rel (%p291) target = $region52
        $region51: #{tpu_custom_call.1} parent=43 // pred_region
          %294 = dma.done [#allocation7], 1536
        $region52: #{tpu_custom_call.1} parent=43 // pred_fallthru
          _
        %s295 = sand.u32 %s46, 1
        %s296 = scalar_lea.sflag [#allocation4], %s295
        %s297 = sand.u32 %s46, 1
        %s298 = smul.addr %s297, 96
        %s299 = scalar_lea.vmem [#allocation3], %s298
        %p300 = pneg %p59
        %p301 = pneg %p56
        %s302 = smul.u32 8, %s29
        %p303 = scmp.lt.s32.totalorder %s302, 15
        %s304 = scalar_select %p303, %s302, 15
        %p305 = scmp.lt.s32.totalorder %s28, 0
        %s306 = scalar_select %p305, %s28, 0
        %s307 = sadd.s32 %s306, %s304
        %s308 = smul.addr %s307, 4
        %s309 = scalar_lea.vmem %s1, %s308
        %p310 = pneg %p87
        %p311 = pneg %p84
        %p312 = pneg %p108
        %p313 = pneg %p105
        %p314 = pneg %p129
        %p315 = pneg %p126
        %p316 = pneg %p150
        %p317 = pneg %p147
        %p318 = pneg %p171
        %p319 = pneg %p168
        %p320 = pneg %p199
        %p321 = pneg %p196
        %s322 = sand.u32 %s186, 1
        %s323 = scalar_lea.sflag [#allocation5], %s322
        %s324 = sand.u32 %s186, 1
        %s325 = smul.addr %s324, 32
        %s326 = scalar_lea.vmem [#allocation8], %s325
        %s327 = smul.u32 8, %s29
        %s328 = smul.u32 8, %s29
        %p329 = scmp.lt.s32.totalorder %s328, 15
        %s330 = scalar_select %p329, %s328, 15
        %p331 = scmp.lt.s32.totalorder %s28, 0
        %s332 = scalar_select %p331, %s28, 0
        %s333 = sadd.s32 %s332, %s330
        %s334 = smul.addr %s333, 4
        %s335 = scalar_lea.vmem %s1, %s334
        %s336 = smul.u32 8, %s29
        %s337 = smul.u32 8, %s29
        %p338 = scmp.eq.s32.totalorder %s29, 0
        // Predicated region
        $region53: #{tpu_custom_call.1} parent=43 // pred_check
          %p339 = pneg %p338
        $region54: #{tpu_custom_call.1} parent=43 // pred_check_branch
          %341 = sbr.rel (%p339) target = $region56
        $region55: #{tpu_custom_call.1} parent=43 // pred_region
          %vm342 = vcmask 257024
          %343 = vst.msk [vmem:[#allocation2] sm:$0xf] %vm342, 0.0
        $region56: #{tpu_custom_call.1} parent=43 // pred_fallthru
          _
        %v344 = vld [vmem:[#allocation6] sm:$0xff]
        %v345 = vld [vmem:[#allocation6 + $0x8] sm:$0xff]
        %v346 = vld [vmem:[#allocation6 + $0x10] sm:$0xff]
        %v347 = vld [vmem:[#allocation6 + $0x18] sm:$0xff]
        %s348 = scalar_lea.vmem [#allocation6], 32
        %v349 = vld [vmem:[%s348] sm:$0xff]
        %v350 = vld [vmem:[%s348 + $0x8] sm:$0xff]
        %v351 = vld [vmem:[%s348 + $0x10] sm:$0xff]
        %v352 = vld [vmem:[%s348 + $0x18] sm:$0xff]
        %s353 = scalar_lea.vmem [#allocation6], 64
        %v354 = vld [vmem:[%s353] sm:$0xff]
        %v355 = vld [vmem:[%s353 + $0x8] sm:$0xff]
        %v356 = vld [vmem:[%s353 + $0x10] sm:$0xff]
        %v357 = vld [vmem:[%s353 + $0x18] sm:$0xff]
        %v358 = vld [vmem:[%s3] sm:$0x1]
        %s359 = scalar_lea.vmem %s3, 1
        %v360 = vld [vmem:[%s359] sm:$0x1]
        %s361 = scalar_lea.vmem %s3, 2
        %v362 = vld [vmem:[%s361] sm:$0x1]
        %v363 = vld [vmem:[#allocation2] sm:$0xf]
        %v364 = vld [vmem:[%s286] sm:$0xf]
        %v365 = vld [vmem:[%s286 + $0x4] sm:$0xf]
        %v366 = vld [vmem:[%s286 + $0x8] sm:$0xf]
        %v367 = vld [vmem:[%s335] sm:$0xf]
        %v369 = vlaneseq
        %v370 = vshrl.u32 %v369, 7
        %v371 = vsub.s32 0, %v370
        %v372 = vrot.slane %v358, %v371
        %vm374 = vcmask 261120
        %v376 = vsel %vm374, %v363, 0
        %378 = vmatprep.subr.mxu0 0.0
        %379 = vmatpush1.msra.mxu0 %v344
        %380 = vmatprep.subr.mxu0 0.0
        %381 = vmatpush1.msra.mxu0 %v345
        %382 = vmatprep.subr.mxu0 0.0
        %383 = vmatpush1.msra.mxu0 %v346
        %384 = vmatprep.subr.mxu0 0.0
        %385 = vmatpush1.msra.mxu0 %v347
        %386 = vmatprep.subr.mxu0 0.0
        %387 = vmatpush1.msra.mxu0 0.0
        %388 = vmatprep.subr.mxu0 0.0
        %389 = vmatpush1.msra.mxu0 0.0
        %390 = vmatprep.subr.mxu0 0.0
        %391 = vmatpush1.msra.mxu0 0.0
        %392 = vmatprep.subr.mxu0 0.0
        %393 = vmatpush1.msra.mxu0 0.0
        %394 = vmatprep.subr.mxu0 0.0
        %395 = vmatpush1.msra.mxu0 0.0
        %396 = vmatprep.subr.mxu0 0.0
        %397 = vmatpush1.msra.mxu0 0.0
        %398 = vmatprep.subr.mxu0 0.0
        %399 = vmatpush1.msra.mxu0 0.0
        %400 = vmatprep.subr.mxu0 0.0
        %401 = vmatpush1.msra.mxu0 0.0
        %402 = vmatprep.subr.mxu0 0.0
        %403 = vmatpush1.msra.mxu0 0.0
        %404 = vmatprep.subr.mxu0 0.0
        %405 = vmatpush1.msra.mxu0 0.0
        %406 = vmatprep.subr.mxu0 0.0
        %407 = vmatpush1.msra.mxu0 0.0
        %408 = vmatprep.subr.mxu0 0.0
        %409 = vmatpush1.msra.mxu0 0.0
        %410 = vmatprep.subr.mxu0 0.0
        %411 = vmatpush1.msra.mxu0 0.0
        %412 = vmatprep.subr.mxu0 0.0
        %413 = vmatpush1.msra.mxu0 0.0
        %414 = vmatprep.subr.mxu0 0.0
        %415 = vmatpush1.msra.mxu0 0.0
        %416 = vmatprep.subr.mxu0 0.0
        %417 = vmatpush1.msra.mxu0 0.0
        %418 = vmatprep.subr.mxu0 0.0
        %419 = vmatpush1.msra.mxu0 0.0
        %420 = vmatprep.subr.mxu0 0.0
        %421 = vmatpush1.msra.mxu0 0.0
        %422 = vmatprep.subr.mxu0 0.0
        %423 = vmatpush1.msra.mxu0 0.0
        %424 = vmatprep.subr.mxu0 0.0
        %425 = vmatpush1.msra.mxu0 0.0
        %426 = vmatprep.subr.mxu0 0.0
        %427 = vmatpush1.msra.mxu0 0.0
        %428 = vmatprep.subr.mxu0 0.0
        %429 = vmatpush1.msra.mxu0 0.0
        %430 = vmatprep.subr.mxu0 0.0
        %431 = vmatpush1.msra.mxu0 0.0
        %432 = vmatprep.subr.mxu0 0.0
        %433 = vmatpush1.msra.mxu0 0.0
        %434 = vmatprep.subr.mxu0 0.0
        %435 = vmatpush1.msra.mxu0 0.0
        %436 = vmatprep.subr.mxu0 0.0
        %437 = vmatpush1.msra.mxu0 0.0
        %438 = vmatprep.subr.mxu0 0.0
        %439 = vmatpush1.msra.mxu0 0.0
        %440 = vmatprep.subr.mxu0 0.0
        %441 = vmatpush1.msra.mxu0 0.0
        %442 = vmatprep.mubr.f32.mxu0 0.0
        %443 = vmatmul.mubr.f32.gmra.mrb[0].mxu0 %v376
        %v444 = vpop.f32.mrb[0].mxu0
        %v445 = vadd.f32 %v372, %v444
        %v446 = vpop.f32.mrb[0].mxu0
        %447 = vdwg.mxu0
        %v449 = vlaneseq
        %v450 = vshrl.u32 %v449, 7
        %v451 = vsub.s32 0, %v450
        %v452 = vrot.slane %v360, %v451
        %454 = vmatprep.subr.mxu0 0.0
        %455 = vmatpush1.msra.mxu0 %v349
        %456 = vmatprep.subr.mxu0 0.0
        %457 = vmatpush1.msra.mxu0 %v350
        %458 = vmatprep.subr.mxu0 0.0
        %459 = vmatpush1.msra.mxu0 %v351
        %460 = vmatprep.subr.mxu0 0.0
        %461 = vmatpush1.msra.mxu0 %v352
        %462 = vmatprep.subr.mxu0 0.0
        %463 = vmatpush1.msra.mxu0 0.0
        %464 = vmatprep.subr.mxu0 0.0
        %465 = vmatpush1.msra.mxu0 0.0
        %466 = vmatprep.subr.mxu0 0.0
        %467 = vmatpush1.msra.mxu0 0.0
        %468 = vmatprep.subr.mxu0 0.0
        %469 = vmatpush1.msra.mxu0 0.0
        %470 = vmatprep.subr.mxu0 0.0
        %471 = vmatpush1.msra.mxu0 0.0
        %472 = vmatprep.subr.mxu0 0.0
        %473 = vmatpush1.msra.mxu0 0.0
        %474 = vmatprep.subr.mxu0 0.0
        %475 = vmatpush1.msra.mxu0 0.0
        %476 = vmatprep.subr.mxu0 0.0
        %477 = vmatpush1.msra.mxu0 0.0
        %478 = vmatprep.subr.mxu0 0.0
        %479 = vmatpush1.msra.mxu0 0.0
        %480 = vmatprep.subr.mxu0 0.0
        %481 = vmatpush1.msra.mxu0 0.0
        %482 = vmatprep.subr.mxu0 0.0
        %483 = vmatpush1.msra.mxu0 0.0
        %484 = vmatprep.subr.mxu0 0.0
        %485 = vmatpush1.msra.mxu0 0.0
        %486 = vmatprep.subr.mxu0 0.0
        %487 = vmatpush1.msra.mxu0 0.0
        %488 = vmatprep.subr.mxu0 0.0
        %489 = vmatpush1.msra.mxu0 0.0
        %490 = vmatprep.subr.mxu0 0.0
        %491 = vmatpush1.msra.mxu0 0.0
        %492 = vmatprep.subr.mxu0 0.0
        %493 = vmatpush1.msra.mxu0 0.0
        %494 = vmatprep.subr.mxu0 0.0
        %495 = vmatpush1.msra.mxu0 0.0
        %496 = vmatprep.subr.mxu0 0.0
        %497 = vmatpush1.msra.mxu0 0.0
        %498 = vmatprep.subr.mxu0 0.0
        %499 = vmatpush1.msra.mxu0 0.0
        %500 = vmatprep.subr.mxu0 0.0
        %501 = vmatpush1.msra.mxu0 0.0
        %502 = vmatprep.subr.mxu0 0.0
        %503 = vmatpush1.msra.mxu0 0.0
        %504 = vmatprep.subr.mxu0 0.0
        %505 = vmatpush1.msra.mxu0 0.0
        %506 = vmatprep.subr.mxu0 0.0
        %507 = vmatpush1.msra.mxu0 0.0
        %508 = vmatprep.subr.mxu0 0.0
        %509 = vmatpush1.msra.mxu0 0.0
        %510 = vmatprep.subr.mxu0 0.0
        %511 = vmatpush1.msra.mxu0 0.0
        %512 = vmatprep.subr.mxu0 0.0
        %513 = vmatpush1.msra.mxu0 0.0
        %514 = vmatprep.subr.mxu0 0.0
        %515 = vmatpush1.msra.mxu0 0.0
        %516 = vmatprep.subr.mxu0 0.0
        %517 = vmatpush1.msra.mxu0 0.0
        %518 = vmatprep.mubr.f32.mxu0 0.0
        %519 = vmatmul.mubr.f32.gmra.mrb[0].mxu0 %v376
        %v520 = vpop.f32.mrb[0].mxu0
        %v521 = vadd.f32 %v452, %v520
        %v522 = vpop.f32.mrb[0].mxu0
        %523 = vdwg.mxu0
        %v525 = vlaneseq
        %v526 = vshrl.u32 %v525, 7
        %v527 = vsub.s32 0, %v526
        %v528 = vrot.slane %v362, %v527
        %530 = vmatprep.subr.mxu0 0.0
        %531 = vmatpush1.msra.mxu0 %v354
        %532 = vmatprep.subr.mxu0 0.0
        %533 = vmatpush1.msra.mxu0 %v355
        %534 = vmatprep.subr.mxu0 0.0
        %535 = vmatpush1.msra.mxu0 %v356
        %536 = vmatprep.subr.mxu0 0.0
        %537 = vmatpush1.msra.mxu0 %v357
        %538 = vmatprep.subr.mxu0 0.0
        %539 = vmatpush1.msra.mxu0 0.0
        %540 = vmatprep.subr.mxu0 0.0
        %541 = vmatpush1.msra.mxu0 0.0
        %542 = vmatprep.subr.mxu0 0.0
        %543 = vmatpush1.msra.mxu0 0.0
        %544 = vmatprep.subr.mxu0 0.0
        %545 = vmatpush1.msra.mxu0 0.0
        %546 = vmatprep.subr.mxu0 0.0
        %547 = vmatpush1.msra.mxu0 0.0
        %548 = vmatprep.subr.mxu0 0.0
        %549 = vmatpush1.msra.mxu0 0.0
        %550 = vmatprep.subr.mxu0 0.0
        %551 = vmatpush1.msra.mxu0 0.0
        %552 = vmatprep.subr.mxu0 0.0
        %553 = vmatpush1.msra.mxu0 0.0
        %554 = vmatprep.subr.mxu0 0.0
        %555 = vmatpush1.msra.mxu0 0.0
        %556 = vmatprep.subr.mxu0 0.0
        %557 = vmatpush1.msra.mxu0 0.0
        %558 = vmatprep.subr.mxu0 0.0
        %559 = vmatpush1.msra.mxu0 0.0
        %560 = vmatprep.subr.mxu0 0.0
        %561 = vmatpush1.msra.mxu0 0.0
        %562 = vmatprep.subr.mxu0 0.0
        %563 = vmatpush1.msra.mxu0 0.0
        %564 = vmatprep.subr.mxu0 0.0
        %565 = vmatpush1.msra.mxu0 0.0
        %566 = vmatprep.subr.mxu0 0.0
        %567 = vmatpush1.msra.mxu0 0.0
        %568 = vmatprep.subr.mxu0 0.0
        %569 = vmatpush1.msra.mxu0 0.0
        %570 = vmatprep.subr.mxu0 0.0
        %571 = vmatpush1.msra.mxu0 0.0
        %572 = vmatprep.subr.mxu0 0.0
        %573 = vmatpush1.msra.mxu0 0.0
        %574 = vmatprep.subr.mxu0 0.0
        %575 = vmatpush1.msra.mxu0 0.0
        %576 = vmatprep.subr.mxu0 0.0
        %577 = vmatpush1.msra.mxu0 0.0
        %578 = vmatprep.subr.mxu0 0.0
        %579 = vmatpush1.msra.mxu0 0.0
        %580 = vmatprep.subr.mxu0 0.0
        %581 = vmatpush1.msra.mxu0 0.0
        %582 = vmatprep.subr.mxu0 0.0
        %583 = vmatpush1.msra.mxu0 0.0
        %584 = vmatprep.subr.mxu0 0.0
        %585 = vmatpush1.msra.mxu0 0.0
        %586 = vmatprep.subr.mxu0 0.0
        %587 = vmatpush1.msra.mxu0 0.0
        %588 = vmatprep.subr.mxu0 0.0
        %589 = vmatpush1.msra.mxu0 0.0
        %590 = vmatprep.subr.mxu0 0.0
        %591 = vmatpush1.msra.mxu0 0.0
        %592 = vmatprep.subr.mxu0 0.0
        %593 = vmatpush1.msra.mxu0 0.0
        %594 = vmatprep.mubr.f32.mxu0 0.0
        %595 = vmatmul.mubr.f32.gmra.mrb[0].mxu0 %v376
        %v596 = vpop.f32.mrb[0].mxu0
        %v597 = vadd.f32 %v528, %v596
        %v598 = vpop.f32.mrb[0].mxu0
        %599 = vdwg.mxu0
        %v600 = vadd.f32 %v364, %v445
        %v601 = vxor.u32 %v600, 2147483648
        %v602 = vmul.f32 %v601, 1.442695
        %v603 = vpow.pop %v602
        %v604 = vadd.f32 %v603, 1.0
        %v605 = vrcp.pop %v604
        %v606 = vmul.f32 1.0, %v605
        %v607 = vadd.f32 %v365, %v521
        %v608 = vxor.u32 %v607, 2147483648
        %v609 = vmul.f32 %v608, 1.442695
        %v610 = vpow.pop %v609
        %v611 = vadd.f32 %v610, 1.0
        %v612 = vrcp.pop %v611
        %v613 = vmul.f32 1.0, %v612
        %v614 = vmul.f32 %v606, %v597
        %v615 = vadd.f32 %v366, %v614
        %v616 = vtanh.pop %v615
        %v617 = vsub.f32 %v363, %v616
        %v618 = vmul.f32 %v613, %v617
        %v619 = vadd.f32 %v616, %v618
        %v620 = vsub.f32 %v619, %v363
        %622 = vset.pattern.permute.xlu0 0
        %623 = vperm.xlu0 %622, %v367
        %v624 = vpop.permute.xlu0 %623
        %v626 = vmul.f32 %v624, %v620
        %v627 = vadd.f32 %v363, %v626
        %vm628 = vcmask 257024
        %629 = vst.msk [vmem:[%s326] sm:$0xf] %vm628, %v627
        %s630 = scalar_lea.vmem %s286, 12 [#allocation3]
        %v631 = vld [vmem:[%s630] sm:$0xf]
        %v632 = vld [vmem:[%s630 + $0x4] sm:$0xf]
        %v633 = vld [vmem:[%s630 + $0x8] sm:$0xf]
        %s634 = scalar_lea.vmem %s335, 4
        %v635 = vld [vmem:[%s634] sm:$0xf]
        %v637 = vsel %vm374, %v627, 0
        %639 = vmatprep.subr.mxu0 0.0
        %640 = vmatpush1.msra.mxu0 %v344
        %641 = vmatprep.subr.mxu0 0.0
        %642 = vmatpush1.msra.mxu0 %v345
        %643 = vmatprep.subr.mxu0 0.0
        %644 = vmatpush1.msra.mxu0 %v346
        %645 = vmatprep.subr.mxu0 0.0
        %646 = vmatpush1.msra.mxu0 %v347
        %647 = vmatprep.subr.mxu0 0.0
        %648 = vmatpush1.msra.mxu0 0.0
        %649 = vmatprep.subr.mxu0 0.0
        %650 = vmatpush1.msra.mxu0 0.0
        %651 = vmatprep.subr.mxu0 0.0
        %652 = vmatpush1.msra.mxu0 0.0
        %653 = vmatprep.subr.mxu0 0.0
        %654 = vmatpush1.msra.mxu0 0.0
        %655 = vmatprep.subr.mxu0 0.0
        %656 = vmatpush1.msra.mxu0 0.0
        %657 = vmatprep.subr.mxu0 0.0
        %658 = vmatpush1.msra.mxu0 0.0
        %659 = vmatprep.subr.mxu0 0.0
        %660 = vmatpush1.msra.mxu0 0.0
        %661 = vmatprep.subr.mxu0 0.0
        %662 = vmatpush1.msra.mxu0 0.0
        %663 = vmatprep.subr.mxu0 0.0
        %664 = vmatpush1.msra.mxu0 0.0
        %665 = vmatprep.subr.mxu0 0.0
        %666 = vmatpush1.msra.mxu0 0.0
        %667 = vmatprep.subr.mxu0 0.0
        %668 = vmatpush1.msra.mxu0 0.0
        %669 = vmatprep.subr.mxu0 0.0
        %670 = vmatpush1.msra.mxu0 0.0
        %671 = vmatprep.subr.mxu0 0.0
        %672 = vmatpush1.msra.mxu0 0.0
        %673 = vmatprep.subr.mxu0 0.0
        %674 = vmatpush1.msra.mxu0 0.0
        %675 = vmatprep.subr.mxu0 0.0
        %676 = vmatpush1.msra.mxu0 0.0
        %677 = vmatprep.subr.mxu0 0.0
        %678 = vmatpush1.msra.mxu0 0.0
        %679 = vmatprep.subr.mxu0 0.0
        %680 = vmatpush1.msra.mxu0 0.0
        %681 = vmatprep.subr.mxu0 0.0
        %682 = vmatpush1.msra.mxu0 0.0
        %683 = vmatprep.subr.mxu0 0.0
        %684 = vmatpush1.msra.mxu0 0.0
        %685 = vmatprep.subr.mxu0 0.0
        %686 = vmatpush1.msra.mxu0 0.0
        %687 = vmatprep.subr.mxu0 0.0
        %688 = vmatpush1.msra.mxu0 0.0
        %689 = vmatprep.subr.mxu0 0.0
        %690 = vmatpush1.msra.mxu0 0.0
        %691 = vmatprep.subr.mxu0 0.0
        %692 = vmatpush1.msra.mxu0 0.0
        %693 = vmatprep.subr.mxu0 0.0
        %694 = vmatpush1.msra.mxu0 0.0
        %695 = vmatprep.subr.mxu0 0.0
        %696 = vmatpush1.msra.mxu0 0.0
        %697 = vmatprep.subr.mxu0 0.0
        %698 = vmatpush1.msra.mxu0 0.0
        %699 = vmatprep.subr.mxu0 0.0
        %700 = vmatpush1.msra.mxu0 0.0
        %701 = vmatprep.subr.mxu0 0.0
        %702 = vmatpush1.msra.mxu0 0.0
        %703 = vmatprep.mubr.f32.mxu0 0.0
        %704 = vmatmul.mubr.f32.gmra.mrb[0].mxu0 %v637
        %v705 = vpop.f32.mrb[0].mxu0
        %v706 = vadd.f32 %v372, %v705
        %v707 = vpop.f32.mrb[0].mxu0
        %708 = vdwg.mxu0
        %709 = vmatprep.subr.mxu0 0.0
        %710 = vmatpush1.msra.mxu0 %v349
        %711 = vmatprep.subr.mxu0 0.0
        %712 = vmatpush1.msra.mxu0 %v350
        %713 = vmatprep.subr.mxu0 0.0
        %714 = vmatpush1.msra.mxu0 %v351
        %715 = vmatprep.subr.mxu0 0.0
        %716 = vmatpush1.msra.mxu0 %v352
        %717 = vmatprep.subr.mxu0 0.0
        %718 = vmatpush1.msra.mxu0 0.0
        %719 = vmatprep.subr.mxu0 0.0
        %720 = vmatpush1.msra.mxu0 0.0
        %721 = vmatprep.subr.mxu0 0.0
        %722 = vmatpush1.msra.mxu0 0.0
        %723 = vmatprep.subr.mxu0 0.0
        %724 = vmatpush1.msra.mxu0 0.0
        %725 = vmatprep.subr.mxu0 0.0
        %726 = vmatpush1.msra.mxu0 0.0
        %727 = vmatprep.subr.mxu0 0.0
        %728 = vmatpush1.msra.mxu0 0.0
        %729 = vmatprep.subr.mxu0 0.0
        %730 = vmatpush1.msra.mxu0 0.0
        %731 = vmatprep.subr.mxu0 0.0
        %732 = vmatpush1.msra.mxu0 0.0
        %733 = vmatprep.subr.mxu0 0.0
        %734 = vmatpush1.msra.mxu0 0.0
        %735 = vmatprep.subr.mxu0 0.0
        %736 = vmatpush1.msra.mxu0 0.0
        %737 = vmatprep.subr.mxu0 0.0
        %738 = vmatpush1.msra.mxu0 0.0
        %739 = vmatprep.subr.mxu0 0.0
        %740 = vmatpush1.msra.mxu0 0.0
        %741 = vmatprep.subr.mxu0 0.0
        %742 = vmatpush1.msra.mxu0 0.0
        %743 = vmatprep.subr.mxu0 0.0
        %744 = vmatpush1.msra.mxu0 0.0
        %745 = vmatprep.subr.mxu0 0.0
        %746 = vmatpush1.msra.mxu0 0.0
        %747 = vmatprep.subr.mxu0 0.0
        %748 = vmatpush1.msra.mxu0 0.0
        %749 = vmatprep.subr.mxu0 0.0
        %750 = vmatpush1.msra.mxu0 0.0
        %751 = vmatprep.subr.mxu0 0.0
        %752 = vmatpush1.msra.mxu0 0.0
        %753 = vmatprep.subr.mxu0 0.0
        %754 = vmatpush1.msra.mxu0 0.0
        %755 = vmatprep.subr.mxu0 0.0
        %756 = vmatpush1.msra.mxu0 0.0
        %757 = vmatprep.subr.mxu0 0.0
        %758 = vmatpush1.msra.mxu0 0.0
        %759 = vmatprep.subr.mxu0 0.0
        %760 = vmatpush1.msra.mxu0 0.0
        %761 = vmatprep.subr.mxu0 0.0
        %762 = vmatpush1.msra.mxu0 0.0
        %763 = vmatprep.subr.mxu0 0.0
        %764 = vmatpush1.msra.mxu0 0.0
        %765 = vmatprep.subr.mxu0 0.0
        %766 = vmatpush1.msra.mxu0 0.0
        %767 = vmatprep.subr.mxu0 0.0
        %768 = vmatpush1.msra.mxu0 0.0
        %769 = vmatprep.subr.mxu0 0.0
        %770 = vmatpush1.msra.mxu0 0.0
        %771 = vmatprep.subr.mxu0 0.0
        %772 = vmatpush1.msra.mxu0 0.0
        %773 = vmatprep.mubr.f32.mxu0 0.0
        %774 = vmatmul.mubr.f32.gmra.mrb[0].mxu0 %v637
        %v775 = vpop.f32.mrb[0].mxu0
        %v776 = vadd.f32 %v452, %v775
        %v777 = vpop.f32.mrb[0].mxu0
        %778 = vdwg.mxu0
        %779 = vmatprep.subr.mxu0 0.0
        %780 = vmatpush1.msra.mxu0 %v354
        %781 = vmatprep.subr.mxu0 0.0
        %782 = vmatpush1.msra.mxu0 %v355
        %783 = vmatprep.subr.mxu0 0.0
        %784 = vmatpush1.msra.mxu0 %v356
        %785 = vmatprep.subr.mxu0 0.0
        %786 = vmatpush1.msra.mxu0 %v357
        %787 = vmatprep.subr.mxu0 0.0
        %788 = vmatpush1.msra.mxu0 0.0
        %789 = vmatprep.subr.mxu0 0.0
        %790 = vmatpush1.msra.mxu0 0.0
        %791 = vmatprep.subr.mxu0 0.0
        %792 = vmatpush1.msra.mxu0 0.0
        %793 = vmatprep.subr.mxu0 0.0
        %794 = vmatpush1.msra.mxu0 0.0
        %795 = vmatprep.subr.mxu0 0.0
        %796 = vmatpush1.msra.mxu0 0.0
        %797 = vmatprep.subr.mxu0 0.0
        %798 = vmatpush1.msra.mxu0 0.0
        %799 = vmatprep.subr.mxu0 0.0
        %800 = vmatpush1.msra.mxu0 0.0
        %801 = vmatprep.subr.mxu0 0.0
        %802 = vmatpush1.msra.mxu0 0.0
        %803 = vmatprep.subr.mxu0 0.0
        %804 = vmatpush1.msra.mxu0 0.0
        %805 = vmatprep.subr.mxu0 0.0
        %806 = vmatpush1.msra.mxu0 0.0
        %807 = vmatprep.subr.mxu0 0.0
        %808 = vmatpush1.msra.mxu0 0.0
        %809 = vmatprep.subr.mxu0 0.0
        %810 = vmatpush1.msra.mxu0 0.0
        %811 = vmatprep.subr.mxu0 0.0
        %812 = vmatpush1.msra.mxu0 0.0
        %813 = vmatprep.subr.mxu0 0.0
        %814 = vmatpush1.msra.mxu0 0.0
        %815 = vmatprep.subr.mxu0 0.0
        %816 = vmatpush1.msra.mxu0 0.0
        %817 = vmatprep.subr.mxu0 0.0
        %818 = vmatpush1.msra.mxu0 0.0
        %819 = vmatprep.subr.mxu0 0.0
        %820 = vmatpush1.msra.mxu0 0.0
        %821 = vmatprep.subr.mxu0 0.0
        %822 = vmatpush1.msra.mxu0 0.0
        %823 = vmatprep.subr.mxu0 0.0
        %824 = vmatpush1.msra.mxu0 0.0
        %825 = vmatprep.subr.mxu0 0.0
        %826 = vmatpush1.msra.mxu0 0.0
        %827 = vmatprep.subr.mxu0 0.0
        %828 = vmatpush1.msra.mxu0 0.0
        %829 = vmatprep.subr.mxu0 0.0
        %830 = vmatpush1.msra.mxu0 0.0
        %831 = vmatprep.subr.mxu0 0.0
        %832 = vmatpush1.msra.mxu0 0.0
        %833 = vmatprep.subr.mxu0 0.0
        %834 = vmatpush1.msra.mxu0 0.0
        %835 = vmatprep.subr.mxu0 0.0
        %836 = vmatpush1.msra.mxu0 0.0
        %837 = vmatprep.subr.mxu0 0.0
        %838 = vmatpush1.msra.mxu0 0.0
        %839 = vmatprep.subr.mxu0 0.0
        %840 = vmatpush1.msra.mxu0 0.0
        %841 = vmatprep.subr.mxu0 0.0
        %842 = vmatpush1.msra.mxu0 0.0
        %843 = vmatprep.mubr.f32.mxu0 0.0
        %844 = vmatmul.mubr.f32.gmra.mrb[0].mxu0 %v637
        %v845 = vpop.f32.mrb[0].mxu0
        %v846 = vadd.f32 %v528, %v845
        %v847 = vpop.f32.mrb[0].mxu0
        %848 = vdwg.mxu0
        %v849 = vadd.f32 %v631, %v706
        %v850 = vxor.u32 %v849, 2147483648
        %v851 = vmul.f32 %v850, 1.442695
        %v852 = vpow.pop %v851
        %v853 = vadd.f32 %v852, 1.0
        %v854 = vrcp.pop %v853
        %v855 = vmul.f32 1.0, %v854
        %v856 = vadd.f32 %v632, %v776
        %v857 = vxor.u32 %v856, 2147483648
        %v858 = vmul.f32 %v857, 1.442695
        %v859 = vpow.pop %v858
        %v860 = vadd.f32 %v859, 1.0
        %v861 = vrcp.pop %v860
        %v862 = vmul.f32 1.0, %v861
        %v863 = vmul.f32 %v855, %v846
        %v864 = vadd.f32 %v633, %v863
        %v865 = vtanh.pop %v864
        %v866 = vsub.f32 %v627, %v865
        %v867 = vmul.f32 %v862, %v866
        %v868 = vadd.f32 %v865, %v867
        %v869 = vsub.f32 %v868, %v627
        %871 = vset.pattern.permute.xlu0 0
        %872 = vperm.xlu0 %871, %v635
        %v873 = vpop.permute.xlu0 %872
        %v875 = vmul.f32 %v873, %v869
        %v876 = vadd.f32 %v627, %v875
        %s877 = scalar_lea.vmem %s326, 4 [#allocation8]
        %878 = vst.msk [vmem:[%s877] sm:$0xf] %vm628, %v876
        %s879 = scalar_lea.vmem %s286, 24 [#allocation3]
        %v880 = vld [vmem:[%s879] sm:$0xf]
        %v881 = vld [vmem:[%s879 + $0x4] sm:$0xf]
        %v882 = vld [vmem:[%s879 + $0x8] sm:$0xf]
        %s883 = scalar_lea.vmem %s335, 8
        %v884 = vld [vmem:[%s883] sm:$0xf]
        %v886 = vsel %vm374, %v876, 0
        %888 = vmatprep.subr.mxu0 0.0
        %889 = vmatpush1.msra.mxu0 %v344
        %890 = vmatprep.subr.mxu0 0.0
        %891 = vmatpush1.msra.mxu0 %v345
        %892 = vmatprep.subr.mxu0 0.0
        %893 = vmatpush1.msra.mxu0 %v346
        %894 = vmatprep.subr.mxu0 0.0
        %895 = vmatpush1.msra.mxu0 %v347
        %896 = vmatprep.subr.mxu0 0.0
        %897 = vmatpush1.msra.mxu0 0.0
        %898 = vmatprep.subr.mxu0 0.0
        %899 = vmatpush1.msra.mxu0 0.0
        %900 = vmatprep.subr.mxu0 0.0
        %901 = vmatpush1.msra.mxu0 0.0
        %902 = vmatprep.subr.mxu0 0.0
        %903 = vmatpush1.msra.mxu0 0.0
        %904 = vmatprep.subr.mxu0 0.0
        %905 = vmatpush1.msra.mxu0 0.0
        %906 = vmatprep.subr.mxu0 0.0
        %907 = vmatpush1.msra.mxu0 0.0
        %908 = vmatprep.subr.mxu0 0.0
        %909 = vmatpush1.msra.mxu0 0.0
        %910 = vmatprep.subr.mxu0 0.0
        %911 = vmatpush1.msra.mxu0 0.0
        %912 = vmatprep.subr.mxu0 0.0
        %913 = vmatpush1.msra.mxu0 0.0
        %914 = vmatprep.subr.mxu0 0.0
        %915 = vmatpush1.msra.mxu0 0.0
        %916 = vmatprep.subr.mxu0 0.0
        %917 = vmatpush1.msra.mxu0 0.0
        %918 = vmatprep.subr.mxu0 0.0
        %919 = vmatpush1.msra.mxu0 0.0
        %920 = vmatprep.subr.mxu0 0.0
        %921 = vmatpush1.msra.mxu0 0.0
        %922 = vmatprep.subr.mxu0 0.0
        %923 = vmatpush1.msra.mxu0 0.0
        %924 = vmatprep.subr.mxu0 0.0
        %925 = vmatpush1.msra.mxu0 0.0
        %926 = vmatprep.subr.mxu0 0.0
        %927 = vmatpush1.msra.mxu0 0.0
        %928 = vmatprep.subr.mxu0 0.0
        %929 = vmatpush1.msra.mxu0 0.0
        %930 = vmatprep.subr.mxu0 0.0
        %931 = vmatpush1.msra.mxu0 0.0
        %932 = vmatprep.subr.mxu0 0.0
        %933 = vmatpush1.msra.mxu0 0.0
        %934 = vmatprep.subr.mxu0 0.0
        %935 = vmatpush1.msra.mxu0 0.0
        %936 = vmatprep.subr.mxu0 0.0
        %937 = vmatpush1.msra.mxu0 0.0
        %938 = vmatprep.subr.mxu0 0.0
        %939 = vmatpush1.msra.mxu0 0.0
        %940 = vmatprep.subr.mxu0 0.0
        %941 = vmatpush1.msra.mxu0 0.0
        %942 = vmatprep.subr.mxu0 0.0
        %943 = vmatpush1.msra.mxu0 0.0
        %944 = vmatprep.subr.mxu0 0.0
        %945 = vmatpush1.msra.mxu0 0.0
        %946 = vmatprep.subr.mxu0 0.0
        %947 = vmatpush1.msra.mxu0 0.0
        %948 = vmatprep.subr.mxu0 0.0
        %949 = vmatpush1.msra.mxu0 0.0
        %950 = vmatprep.subr.mxu0 0.0
        %951 = vmatpush1.msra.mxu0 0.0
        %952 = vmatprep.mubr.f32.mxu0 0.0
        %953 = vmatmul.mubr.f32.gmra.mrb[0].mxu0 %v886
        %v954 = vpop.f32.mrb[0].mxu0
        %v955 = vadd.f32 %v372, %v954
        %v956 = vpop.f32.mrb[0].mxu0
        %957 = vdwg.mxu0
        %958 = vmatprep.subr.mxu0 0.0
        %959 = vmatpush1.msra.mxu0 %v349
        %960 = vmatprep.subr.mxu0 0.0
        %961 = vmatpush1.msra.mxu0 %v350
        %962 = vmatprep.subr.mxu0 0.0
        %963 = vmatpush1.msra.mxu0 %v351
        %964 = vmatprep.subr.mxu0 0.0
        %965 = vmatpush1.msra.mxu0 %v352
        %966 = vmatprep.subr.mxu0 0.0
        %967 = vmatpush1.msra.mxu0 0.0
        %968 = vmatprep.subr.mxu0 0.0
        %969 = vmatpush1.msra.mxu0 0.0
        %970 = vmatprep.subr.mxu0 0.0
        %971 = vmatpush1.msra.mxu0 0.0
        %972 = vmatprep.subr.mxu0 0.0
        %973 = vmatpush1.msra.mxu0 0.0
        %974 = vmatprep.subr.mxu0 0.0
        %975 = vmatpush1.msra.mxu0 0.0
        %976 = vmatprep.subr.mxu0 0.0
        %977 = vmatpush1.msra.mxu0 0.0
        %978 = vmatprep.subr.mxu0 0.0
        %979 = vmatpush1.msra.mxu0 0.0
        %980 = vmatprep.subr.mxu0 0.0
        %981 = vmatpush1.msra.mxu0 0.0
        %982 = vmatprep.subr.mxu0 0.0
        %983 = vmatpush1.msra.mxu0 0.0
        %984 = vmatprep.subr.mxu0 0.0
        %985 = vmatpush1.msra.mxu0 0.0
        %986 = vmatprep.subr.mxu0 0.0
        %987 = vmatpush1.msra.mxu0 0.0
        %988 = vmatprep.subr.mxu0 0.0
        %989 = vmatpush1.msra.mxu0 0.0
        %990 = vmatprep.subr.mxu0 0.0
        %991 = vmatpush1.msra.mxu0 0.0
        %992 = vmatprep.subr.mxu0 0.0
        %993 = vmatpush1.msra.mxu0 0.0
        %994 = vmatprep.subr.mxu0 0.0
        %995 = vmatpush1.msra.mxu0 0.0
        %996 = vmatprep.subr.mxu0 0.0
        %997 = vmatpush1.msra.mxu0 0.0
        %998 = vmatprep.subr.mxu0 0.0
        %999 = vmatpush1.msra.mxu0 0.0
        %1000 = vmatprep.subr.mxu0 0.0
        %1001 = vmatpush1.msra.mxu0 0.0
        %1002 = vmatprep.subr.mxu0 0.0
        %1003 = vmatpush1.msra.mxu0 0.0
        %1004 = vmatprep.subr.mxu0 0.0
        %1005 = vmatpush1.msra.mxu0 0.0
        %1006 = vmatprep.subr.mxu0 0.0
        %1007 = vmatpush1.msra.mxu0 0.0
        %1008 = vmatprep.subr.mxu0 0.0
        %1009 = vmatpush1.msra.mxu0 0.0
        %1010 = vmatprep.subr.mxu0 0.0
        %1011 = vmatpush1.msra.mxu0 0.0
        %1012 = vmatprep.subr.mxu0 0.0
        %1013 = vmatpush1.msra.mxu0 0.0
        %1014 = vmatprep.subr.mxu0 0.0
        %1015 = vmatpush1.msra.mxu0 0.0
        %1016 = vmatprep.subr.mxu0 0.0
        %1017 = vmatpush1.msra.mxu0 0.0
        %1018 = vmatprep.subr.mxu0 0.0
        %1019 = vmatpush1.msra.mxu0 0.0
        %1020 = vmatprep.subr.mxu0 0.0
        %1021 = vmatpush1.msra.mxu0 0.0
        %1022 = vmatprep.mubr.f32.mxu0 0.0
        %1023 = vmatmul.mubr.f32.gmra.mrb[0].mxu0 %v886
        %v1024 = vpop.f32.mrb[0].mxu0
        %v1025 = vadd.f32 %v452, %v1024
        %v1026 = vpop.f32.mrb[0].mxu0
        %1027 = vdwg.mxu0
        %1028 = vmatprep.subr.mxu0 0.0
        %1029 = vmatpush1.msra.mxu0 %v354
        %1030 = vmatprep.subr.mxu0 0.0
        %1031 = vmatpush1.msra.mxu0 %v355
        %1032 = vmatprep.subr.mxu0 0.0
        %1033 = vmatpush1.msra.mxu0 %v356
        %1034 = vmatprep.subr.mxu0 0.0
        %1035 = vmatpush1.msra.mxu0 %v357
        %1036 = vmatprep.subr.mxu0 0.0
        %1037 = vmatpush1.msra.mxu0 0.0
        %1038 = vmatprep.subr.mxu0 0.0
        %1039 = vmatpush1.msra.mxu0 0.0
        %1040 = vmatprep.subr.mxu0 0.0
        %1041 = vmatpush1.msra.mxu0 0.0
        %1042 = vmatprep.subr.mxu0 0.0
        %1043 = vmatpush1.msra.mxu0 0.0
        %1044 = vmatprep.subr.mxu0 0.0
        %1045 = vmatpush1.msra.mxu0 0.0
        %1046 = vmatprep.subr.mxu0 0.0
        %1047 = vmatpush1.msra.mxu0 0.0
        %1048 = vmatprep.subr.mxu0 0.0
        %1049 = vmatpush1.msra.mxu0 0.0
        %1050 = vmatprep.subr.mxu0 0.0
        %1051 = vmatpush1.msra.mxu0 0.0
        %1052 = vmatprep.subr.mxu0 0.0
        %1053 = vmatpush1.msra.mxu0 0.0
        %1054 = vmatprep.subr.mxu0 0.0
        %1055 = vmatpush1.msra.mxu0 0.0
        %1056 = vmatprep.subr.mxu0 0.0
        %1057 = vmatpush1.msra.mxu0 0.0
        %1058 = vmatprep.subr.mxu0 0.0
        %1059 = vmatpush1.msra.mxu0 0.0
        %1060 = vmatprep.subr.mxu0 0.0
        %1061 = vmatpush1.msra.mxu0 0.0
        %1062 = vmatprep.subr.mxu0 0.0
        %1063 = vmatpush1.msra.mxu0 0.0
        %1064 = vmatprep.subr.mxu0 0.0
        %1065 = vmatpush1.msra.mxu0 0.0
        %1066 = vmatprep.subr.mxu0 0.0
        %1067 = vmatpush1.msra.mxu0 0.0
        %1068 = vmatprep.subr.mxu0 0.0
        %1069 = vmatpush1.msra.mxu0 0.0
        %1070 = vmatprep.subr.mxu0 0.0
        %1071 = vmatpush1.msra.mxu0 0.0
        %1072 = vmatprep.subr.mxu0 0.0
        %1073 = vmatpush1.msra.mxu0 0.0
        %1074 = vmatprep.subr.mxu0 0.0
        %1075 = vmatpush1.msra.mxu0 0.0
        %1076 = vmatprep.subr.mxu0 0.0
        %1077 = vmatpush1.msra.mxu0 0.0
        %1078 = vmatprep.subr.mxu0 0.0
        %1079 = vmatpush1.msra.mxu0 0.0
        %1080 = vmatprep.subr.mxu0 0.0
        %1081 = vmatpush1.msra.mxu0 0.0
        %1082 = vmatprep.subr.mxu0 0.0
        %1083 = vmatpush1.msra.mxu0 0.0
        %1084 = vmatprep.subr.mxu0 0.0
        %1085 = vmatpush1.msra.mxu0 0.0
        %1086 = vmatprep.subr.mxu0 0.0
        %1087 = vmatpush1.msra.mxu0 0.0
        %1088 = vmatprep.subr.mxu0 0.0
        %1089 = vmatpush1.msra.mxu0 0.0
        %1090 = vmatprep.subr.mxu0 0.0
        %1091 = vmatpush1.msra.mxu0 0.0
        %1092 = vmatprep.mubr.f32.mxu0 0.0
        %1093 = vmatmul.mubr.f32.gmra.mrb[0].mxu0 %v886
        %v1094 = vpop.f32.mrb[0].mxu0
        %v1095 = vadd.f32 %v528, %v1094
        %v1096 = vpop.f32.mrb[0].mxu0
        %1097 = vdwg.mxu0
        %v1098 = vadd.f32 %v880, %v955
        %v1099 = vxor.u32 %v1098, 2147483648
        %v1100 = vmul.f32 %v1099, 1.442695
        %v1101 = vpow.pop %v1100
        %v1102 = vadd.f32 %v1101, 1.0
        %v1103 = vrcp.pop %v1102
        %v1104 = vmul.f32 1.0, %v1103
        %v1105 = vadd.f32 %v881, %v1025
        %v1106 = vxor.u32 %v1105, 2147483648
        %v1107 = vmul.f32 %v1106, 1.442695
        %v1108 = vpow.pop %v1107
        %v1109 = vadd.f32 %v1108, 1.0
        %v1110 = vrcp.pop %v1109
        %v1111 = vmul.f32 1.0, %v1110
        %v1112 = vmul.f32 %v1104, %v1095
        %v1113 = vadd.f32 %v882, %v1112
        %v1114 = vtanh.pop %v1113
        %v1115 = vsub.f32 %v876, %v1114
        %v1116 = vmul.f32 %v1111, %v1115
        %v1117 = vadd.f32 %v1114, %v1116
        %v1118 = vsub.f32 %v1117, %v876
        %1120 = vset.pattern.permute.xlu0 0
        %1121 = vperm.xlu0 %1120, %v884
        %v1122 = vpop.permute.xlu0 %1121
        %v1124 = vmul.f32 %v1122, %v1118
        %v1125 = vadd.f32 %v876, %v1124
        %s1126 = scalar_lea.vmem %s326, 8 [#allocation8]
        %1127 = vst.msk [vmem:[%s1126] sm:$0xf] %vm628, %v1125
        %s1128 = scalar_lea.vmem %s286, 36 [#allocation3]
        %v1129 = vld [vmem:[%s1128] sm:$0xf]
        %v1130 = vld [vmem:[%s1128 + $0x4] sm:$0xf]
        %v1131 = vld [vmem:[%s1128 + $0x8] sm:$0xf]
        %s1132 = scalar_lea.vmem %s335, 12
        %v1133 = vld [vmem:[%s1132] sm:$0xf]
        %v1135 = vsel %vm374, %v1125, 0
        %1137 = vmatprep.subr.mxu0 0.0
        %1138 = vmatpush1.msra.mxu0 %v344
        %1139 = vmatprep.subr.mxu0 0.0
        %1140 = vmatpush1.msra.mxu0 %v345
        %1141 = vmatprep.subr.mxu0 0.0
        %1142 = vmatpush1.msra.mxu0 %v346
        %1143 = vmatprep.subr.mxu0 0.0
        %1144 = vmatpush1.msra.mxu0 %v347
        %1145 = vmatprep.subr.mxu0 0.0
        %1146 = vmatpush1.msra.mxu0 0.0
        %1147 = vmatprep.subr.mxu0 0.0
        %1148 = vmatpush1.msra.mxu0 0.0
        %1149 = vmatprep.subr.mxu0 0.0
        %1150 = vmatpush1.msra.mxu0 0.0
        %1151 = vmatprep.subr.mxu0 0.0
        %1152 = vmatpush1.msra.mxu0 0.0
        %1153 = vmatprep.subr.mxu0 0.0
        %1154 = vmatpush1.msra.mxu0 0.0
        %1155 = vmatprep.subr.mxu0 0.0
        %1156 = vmatpush1.msra.mxu0 0.0
        %1157 = vmatprep.subr.mxu0 0.0
        %1158 = vmatpush1.msra.mxu0 0.0
        %1159 = vmatprep.subr.mxu0 0.0
        %1160 = vmatpush1.msra.mxu0 0.0
        %1161 = vmatprep.subr.mxu0 0.0
        %1162 = vmatpush1.msra.mxu0 0.0
        %1163 = vmatprep.subr.mxu0 0.0
        %1164 = vmatpush1.msra.mxu0 0.0
        %1165 = vmatprep.subr.mxu0 0.0
        %1166 = vmatpush1.msra.mxu0 0.0
        %1167 = vmatprep.subr.mxu0 0.0
        %1168 = vmatpush1.msra.mxu0 0.0
        %1169 = vmatprep.subr.mxu0 0.0
        %1170 = vmatpush1.msra.mxu0 0.0
        %1171 = vmatprep.subr.mxu0 0.0
        %1172 = vmatpush1.msra.mxu0 0.0
        %1173 = vmatprep.subr.mxu0 0.0
        %1174 = vmatpush1.msra.mxu0 0.0
        %1175 = vmatprep.subr.mxu0 0.0
        %1176 = vmatpush1.msra.mxu0 0.0
        %1177 = vmatprep.subr.mxu0 0.0
        %1178 = vmatpush1.msra.mxu0 0.0
        %1179 = vmatprep.subr.mxu0 0.0
        %1180 = vmatpush1.msra.mxu0 0.0
        %1181 = vmatprep.subr.mxu0 0.0
        %1182 = vmatpush1.msra.mxu0 0.0
        %1183 = vmatprep.subr.mxu0 0.0
        %1184 = vmatpush1.msra.mxu0 0.0
        %1185 = vmatprep.subr.mxu0 0.0
        %1186 = vmatpush1.msra.mxu0 0.0
        %1187 = vmatprep.subr.mxu0 0.0
        %1188 = vmatpush1.msra.mxu0 0.0
        %1189 = vmatprep.subr.mxu0 0.0
        %1190 = vmatpush1.msra.mxu0 0.0
        %1191 = vmatprep.subr.mxu0 0.0
        %1192 = vmatpush1.msra.mxu0 0.0
        %1193 = vmatprep.subr.mxu0 0.0
        %1194 = vmatpush1.msra.mxu0 0.0
        %1195 = vmatprep.subr.mxu0 0.0
        %1196 = vmatpush1.msra.mxu0 0.0
        %1197 = vmatprep.subr.mxu0 0.0
        %1198 = vmatpush1.msra.mxu0 0.0
        %1199 = vmatprep.subr.mxu0 0.0
        %1200 = vmatpush1.msra.mxu0 0.0
        %1201 = vmatprep.mubr.f32.mxu0 0.0
        %1202 = vmatmul.mubr.f32.gmra.mrb[0].mxu0 %v1135
        %v1203 = vpop.f32.mrb[0].mxu0
        %v1204 = vadd.f32 %v372, %v1203
        %v1205 = vpop.f32.mrb[0].mxu0
        %1206 = vdwg.mxu0
        %1207 = vmatprep.subr.mxu0 0.0
        %1208 = vmatpush1.msra.mxu0 %v349
        %1209 = vmatprep.subr.mxu0 0.0
        %1210 = vmatpush1.msra.mxu0 %v350
        %1211 = vmatprep.subr.mxu0 0.0
        %1212 = vmatpush1.msra.mxu0 %v351
        %1213 = vmatprep.subr.mxu0 0.0
        %1214 = vmatpush1.msra.mxu0 %v352
        %1215 = vmatprep.subr.mxu0 0.0
        %1216 = vmatpush1.msra.mxu0 0.0
        %1217 = vmatprep.subr.mxu0 0.0
        %1218 = vmatpush1.msra.mxu0 0.0
        %1219 = vmatprep.subr.mxu0 0.0
        %1220 = vmatpush1.msra.mxu0 0.0
        %1221 = vmatprep.subr.mxu0 0.0
        %1222 = vmatpush1.msra.mxu0 0.0
        %1223 = vmatprep.subr.mxu0 0.0
        %1224 = vmatpush1.msra.mxu0 0.0
        %1225 = vmatprep.subr.mxu0 0.0
        %1226 = vmatpush1.msra.mxu0 0.0
        %1227 = vmatprep.subr.mxu0 0.0
        %1228 = vmatpush1.msra.mxu0 0.0
        %1229 = vmatprep.subr.mxu0 0.0
        %1230 = vmatpush1.msra.mxu0 0.0
        %1231 = vmatprep.subr.mxu0 0.0
        %1232 = vmatpush1.msra.mxu0 0.0
        %1233 = vmatprep.subr.mxu0 0.0
        %1234 = vmatpush1.msra.mxu0 0.0
        %1235 = vmatprep.subr.mxu0 0.0
        %1236 = vmatpush1.msra.mxu0 0.0
        %1237 = vmatprep.subr.mxu0 0.0
        %1238 = vmatpush1.msra.mxu0 0.0
        %1239 = vmatprep.subr.mxu0 0.0
        %1240 = vmatpush1.msra.mxu0 0.0
        %1241 = vmatprep.subr.mxu0 0.0
        %1242 = vmatpush1.msra.mxu0 0.0
        %1243 = vmatprep.subr.mxu0 0.0
        %1244 = vmatpush1.msra.mxu0 0.0
        %1245 = vmatprep.subr.mxu0 0.0
        %1246 = vmatpush1.msra.mxu0 0.0
        %1247 = vmatprep.subr.mxu0 0.0
        %1248 = vmatpush1.msra.mxu0 0.0
        %1249 = vmatprep.subr.mxu0 0.0
        %1250 = vmatpush1.msra.mxu0 0.0
        %1251 = vmatprep.subr.mxu0 0.0
        %1252 = vmatpush1.msra.mxu0 0.0
        %1253 = vmatprep.subr.mxu0 0.0
        %1254 = vmatpush1.msra.mxu0 0.0
        %1255 = vmatprep.subr.mxu0 0.0
        %1256 = vmatpush1.msra.mxu0 0.0
        %1257 = vmatprep.subr.mxu0 0.0
        %1258 = vmatpush1.msra.mxu0 0.0
        %1259 = vmatprep.subr.mxu0 0.0
        %1260 = vmatpush1.msra.mxu0 0.0
        %1261 = vmatprep.subr.mxu0 0.0
        %1262 = vmatpush1.msra.mxu0 0.0
        %1263 = vmatprep.subr.mxu0 0.0
        %1264 = vmatpush1.msra.mxu0 0.0
        %1265 = vmatprep.subr.mxu0 0.0
        %1266 = vmatpush1.msra.mxu0 0.0
        %1267 = vmatprep.subr.mxu0 0.0
        %1268 = vmatpush1.msra.mxu0 0.0
        %1269 = vmatprep.subr.mxu0 0.0
        %1270 = vmatpush1.msra.mxu0 0.0
        %1271 = vmatprep.mubr.f32.mxu0 0.0
        %1272 = vmatmul.mubr.f32.gmra.mrb[0].mxu0 %v1135
        %v1273 = vpop.f32.mrb[0].mxu0
        %v1274 = vadd.f32 %v452, %v1273
        %v1275 = vpop.f32.mrb[0].mxu0
        %1276 = vdwg.mxu0
        %1277 = vmatprep.subr.mxu0 0.0
        %1278 = vmatpush1.msra.mxu0 %v354
        %1279 = vmatprep.subr.mxu0 0.0
        %1280 = vmatpush1.msra.mxu0 %v355
        %1281 = vmatprep.subr.mxu0 0.0
        %1282 = vmatpush1.msra.mxu0 %v356
        %1283 = vmatprep.subr.mxu0 0.0
        %1284 = vmatpush1.msra.mxu0 %v357
        %1285 = vmatprep.subr.mxu0 0.0
        %1286 = vmatpush1.msra.mxu0 0.0
        %1287 = vmatprep.subr.mxu0 0.0
        %1288 = vmatpush1.msra.mxu0 0.0
        %1289 = vmatprep.subr.mxu0 0.0
        %1290 = vmatpush1.msra.mxu0 0.0
        %1291 = vmatprep.subr.mxu0 0.0
        %1292 = vmatpush1.msra.mxu0 0.0
        %1293 = vmatprep.subr.mxu0 0.0
        %1294 = vmatpush1.msra.mxu0 0.0
        %1295 = vmatprep.subr.mxu0 0.0
        %1296 = vmatpush1.msra.mxu0 0.0
        %1297 = vmatprep.subr.mxu0 0.0
        %1298 = vmatpush1.msra.mxu0 0.0
        %1299 = vmatprep.subr.mxu0 0.0
        %1300 = vmatpush1.msra.mxu0 0.0
        %1301 = vmatprep.subr.mxu0 0.0
        %1302 = vmatpush1.msra.mxu0 0.0
        %1303 = vmatprep.subr.mxu0 0.0
        %1304 = vmatpush1.msra.mxu0 0.0
        %1305 = vmatprep.subr.mxu0 0.0
        %1306 = vmatpush1.msra.mxu0 0.0
        %1307 = vmatprep.subr.mxu0 0.0
        %1308 = vmatpush1.msra.mxu0 0.0
        %1309 = vmatprep.subr.mxu0 0.0
        %1310 = vmatpush1.msra.mxu0 0.0
        %1311 = vmatprep.subr.mxu0 0.0
        %1312 = vmatpush1.msra.mxu0 0.0
        %1313 = vmatprep.subr.mxu0 0.0
        %1314 = vmatpush1.msra.mxu0 0.0
        %1315 = vmatprep.subr.mxu0 0.0
        %1316 = vmatpush1.msra.mxu0 0.0
        %1317 = vmatprep.subr.mxu0 0.0
        %1318 = vmatpush1.msra.mxu0 0.0
        %1319 = vmatprep.subr.mxu0 0.0
        %1320 = vmatpush1.msra.mxu0 0.0
        %1321 = vmatprep.subr.mxu0 0.0
        %1322 = vmatpush1.msra.mxu0 0.0
        %1323 = vmatprep.subr.mxu0 0.0
        %1324 = vmatpush1.msra.mxu0 0.0
        %1325 = vmatprep.subr.mxu0 0.0
        %1326 = vmatpush1.msra.mxu0 0.0
        %1327 = vmatprep.subr.mxu0 0.0
        %1328 = vmatpush1.msra.mxu0 0.0
        %1329 = vmatprep.subr.mxu0 0.0
        %1330 = vmatpush1.msra.mxu0 0.0
        %1331 = vmatprep.subr.mxu0 0.0
        %1332 = vmatpush1.msra.mxu0 0.0
        %1333 = vmatprep.subr.mxu0 0.0
        %1334 = vmatpush1.msra.mxu0 0.0
        %1335 = vmatprep.subr.mxu0 0.0
        %1336 = vmatpush1.msra.mxu0 0.0
        %1337 = vmatprep.subr.mxu0 0.0
        %1338 = vmatpush1.msra.mxu0 0.0
        %1339 = vmatprep.subr.mxu0 0.0
        %1340 = vmatpush1.msra.mxu0 0.0
        %1341 = vmatprep.mubr.f32.mxu0 0.0
        %1342 = vmatmul.mubr.f32.gmra.mrb[0].mxu0 %v1135
        %v1343 = vpop.f32.mrb[0].mxu0
        %v1344 = vadd.f32 %v528, %v1343
        %v1345 = vpop.f32.mrb[0].mxu0
        %1346 = vdwg.mxu0
        %v1347 = vadd.f32 %v1129, %v1204
        %v1348 = vxor.u32 %v1347, 2147483648
        %v1349 = vmul.f32 %v1348, 1.442695
        %v1350 = vpow.pop %v1349
        %v1351 = vadd.f32 %v1350, 1.0
        %v1352 = vrcp.pop %v1351
        %v1353 = vmul.f32 1.0, %v1352
        %v1354 = vadd.f32 %v1130, %v1274
        %v1355 = vxor.u32 %v1354, 2147483648
        %v1356 = vmul.f32 %v1355, 1.442695
        %v1357 = vpow.pop %v1356
        %v1358 = vadd.f32 %v1357, 1.0
        %v1359 = vrcp.pop %v1358
        %v1360 = vmul.f32 1.0, %v1359
        %v1361 = vmul.f32 %v1353, %v1344
        %v1362 = vadd.f32 %v1131, %v1361
        %v1363 = vtanh.pop %v1362
        %v1364 = vsub.f32 %v1125, %v1363
        %v1365 = vmul.f32 %v1360, %v1364
        %v1366 = vadd.f32 %v1363, %v1365
        %v1367 = vsub.f32 %v1366, %v1125
        %1369 = vset.pattern.permute.xlu0 0
        %1370 = vperm.xlu0 %1369, %v1133
        %v1371 = vpop.permute.xlu0 %1370
        %v1373 = vmul.f32 %v1371, %v1367
        %v1374 = vadd.f32 %v1125, %v1373
        %s1375 = scalar_lea.vmem %s326, 12 [#allocation8]
        %1376 = vst.msk [vmem:[%s1375] sm:$0xf] %vm628, %v1374
        %s1377 = scalar_lea.vmem %s286, 48 [#allocation3]
        %v1378 = vld [vmem:[%s1377] sm:$0xf]
        %v1379 = vld [vmem:[%s1377 + $0x4] sm:$0xf]
        %v1380 = vld [vmem:[%s1377 + $0x8] sm:$0xf]
        %s1381 = scalar_lea.vmem %s335, 16
        %v1382 = vld [vmem:[%s1381] sm:$0xf]
        %v1384 = vsel %vm374, %v1374, 0
        %1386 = vmatprep.subr.mxu0 0.0
        %1387 = vmatpush1.msra.mxu0 %v344
        %1388 = vmatprep.subr.mxu0 0.0
        %1389 = vmatpush1.msra.mxu0 %v345
        %1390 = vmatprep.subr.mxu0 0.0
        %1391 = vmatpush1.msra.mxu0 %v346
        %1392 = vmatprep.subr.mxu0 0.0
        %1393 = vmatpush1.msra.mxu0 %v347
        %1394 = vmatprep.subr.mxu0 0.0
        %1395 = vmatpush1.msra.mxu0 0.0
        %1396 = vmatprep.subr.mxu0 0.0
        %1397 = vmatpush1.msra.mxu0 0.0
        %1398 = vmatprep.subr.mxu0 0.0
        %1399 = vmatpush1.msra.mxu0 0.0
        %1400 = vmatprep.subr.mxu0 0.0
        %1401 = vmatpush1.msra.mxu0 0.0
        %1402 = vmatprep.subr.mxu0 0.0
        %1403 = vmatpush1.msra.mxu0 0.0
        %1404 = vmatprep.subr.mxu0 0.0
        %1405 = vmatpush1.msra.mxu0 0.0
        %1406 = vmatprep.subr.mxu0 0.0
        %1407 = vmatpush1.msra.mxu0 0.0
        %1408 = vmatprep.subr.mxu0 0.0
        %1409 = vmatpush1.msra.mxu0 0.0
        %1410 = vmatprep.subr.mxu0 0.0
        %1411 = vmatpush1.msra.mxu0 0.0
        %1412 = vmatprep.subr.mxu0 0.0
        %1413 = vmatpush1.msra.mxu0 0.0
        %1414 = vmatprep.subr.mxu0 0.0
        %1415 = vmatpush1.msra.mxu0 0.0
        %1416 = vmatprep.subr.mxu0 0.0
        %1417 = vmatpush1.msra.mxu0 0.0
        %1418 = vmatprep.subr.mxu0 0.0
        %1419 = vmatpush1.msra.mxu0 0.0
        %1420 = vmatprep.subr.mxu0 0.0
        %1421 = vmatpush1.msra.mxu0 0.0
        %1422 = vmatprep.subr.mxu0 0.0
        %1423 = vmatpush1.msra.mxu0 0.0
        %1424 = vmatprep.subr.mxu0 0.0
        %1425 = vmatpush1.msra.mxu0 0.0
        %1426 = vmatprep.subr.mxu0 0.0
        %1427 = vmatpush1.msra.mxu0 0.0
        %1428 = vmatprep.subr.mxu0 0.0
        %1429 = vmatpush1.msra.mxu0 0.0
        %1430 = vmatprep.subr.mxu0 0.0
        %1431 = vmatpush1.msra.mxu0 0.0
        %1432 = vmatprep.subr.mxu0 0.0
        %1433 = vmatpush1.msra.mxu0 0.0
        %1434 = vmatprep.subr.mxu0 0.0
        %1435 = vmatpush1.msra.mxu0 0.0
        %1436 = vmatprep.subr.mxu0 0.0
        %1437 = vmatpush1.msra.mxu0 0.0
        %1438 = vmatprep.subr.mxu0 0.0
        %1439 = vmatpush1.msra.mxu0 0.0
        %1440 = vmatprep.subr.mxu0 0.0
        %1441 = vmatpush1.msra.mxu0 0.0
        %1442 = vmatprep.subr.mxu0 0.0
        %1443 = vmatpush1.msra.mxu0 0.0
        %1444 = vmatprep.subr.mxu0 0.0
        %1445 = vmatpush1.msra.mxu0 0.0
        %1446 = vmatprep.subr.mxu0 0.0
        %1447 = vmatpush1.msra.mxu0 0.0
        %1448 = vmatprep.subr.mxu0 0.0
        %1449 = vmatpush1.msra.mxu0 0.0
        %1450 = vmatprep.mubr.f32.mxu0 0.0
        %1451 = vmatmul.mubr.f32.gmra.mrb[0].mxu0 %v1384
        %v1452 = vpop.f32.mrb[0].mxu0
        %v1453 = vadd.f32 %v372, %v1452
        %v1454 = vpop.f32.mrb[0].mxu0
        %1455 = vdwg.mxu0
        %1456 = vmatprep.subr.mxu0 0.0
        %1457 = vmatpush1.msra.mxu0 %v349
        %1458 = vmatprep.subr.mxu0 0.0
        %1459 = vmatpush1.msra.mxu0 %v350
        %1460 = vmatprep.subr.mxu0 0.0
        %1461 = vmatpush1.msra.mxu0 %v351
        %1462 = vmatprep.subr.mxu0 0.0
        %1463 = vmatpush1.msra.mxu0 %v352
        %1464 = vmatprep.subr.mxu0 0.0
        %1465 = vmatpush1.msra.mxu0 0.0
        %1466 = vmatprep.subr.mxu0 0.0
        %1467 = vmatpush1.msra.mxu0 0.0
        %1468 = vmatprep.subr.mxu0 0.0
        %1469 = vmatpush1.msra.mxu0 0.0
        %1470 = vmatprep.subr.mxu0 0.0
        %1471 = vmatpush1.msra.mxu0 0.0
        %1472 = vmatprep.subr.mxu0 0.0
        %1473 = vmatpush1.msra.mxu0 0.0
        %1474 = vmatprep.subr.mxu0 0.0
        %1475 = vmatpush1.msra.mxu0 0.0
        %1476 = vmatprep.subr.mxu0 0.0
        %1477 = vmatpush1.msra.mxu0 0.0
        %1478 = vmatprep.subr.mxu0 0.0
        %1479 = vmatpush1.msra.mxu0 0.0
        %1480 = vmatprep.subr.mxu0 0.0
        %1481 = vmatpush1.msra.mxu0 0.0
        %1482 = vmatprep.subr.mxu0 0.0
        %1483 = vmatpush1.msra.mxu0 0.0
        %1484 = vmatprep.subr.mxu0 0.0
        %1485 = vmatpush1.msra.mxu0 0.0
        %1486 = vmatprep.subr.mxu0 0.0
        %1487 = vmatpush1.msra.mxu0 0.0
        %1488 = vmatprep.subr.mxu0 0.0
        %1489 = vmatpush1.msra.mxu0 0.0
        %1490 = vmatprep.subr.mxu0 0.0
        %1491 = vmatpush1.msra.mxu0 0.0
        %1492 = vmatprep.subr.mxu0 0.0
        %1493 = vmatpush1.msra.mxu0 0.0
        %1494 = vmatprep.subr.mxu0 0.0
        %1495 = vmatpush1.msra.mxu0 0.0
        %1496 = vmatprep.subr.mxu0 0.0
        %1497 = vmatpush1.msra.mxu0 0.0
        %1498 = vmatprep.subr.mxu0 0.0
        %1499 = vmatpush1.msra.mxu0 0.0
        %1500 = vmatprep.subr.mxu0 0.0
        %1501 = vmatpush1.msra.mxu0 0.0
        %1502 = vmatprep.subr.mxu0 0.0
        %1503 = vmatpush1.msra.mxu0 0.0
        %1504 = vmatprep.subr.mxu0 0.0
        %1505 = vmatpush1.msra.mxu0 0.0
        %1506 = vmatprep.subr.mxu0 0.0
        %1507 = vmatpush1.msra.mxu0 0.0
        %1508 = vmatprep.subr.mxu0 0.0
        %1509 = vmatpush1.msra.mxu0 0.0
        %1510 = vmatprep.subr.mxu0 0.0
        %1511 = vmatpush1.msra.mxu0 0.0
        %1512 = vmatprep.subr.mxu0 0.0
        %1513 = vmatpush1.msra.mxu0 0.0
        %1514 = vmatprep.subr.mxu0 0.0
        %1515 = vmatpush1.msra.mxu0 0.0
        %1516 = vmatprep.subr.mxu0 0.0
        %1517 = vmatpush1.msra.mxu0 0.0
        %1518 = vmatprep.subr.mxu0 0.0
        %1519 = vmatpush1.msra.mxu0 0.0
        %1520 = vmatprep.mubr.f32.mxu0 0.0
        %1521 = vmatmul.mubr.f32.gmra.mrb[0].mxu0 %v1384
        %v1522 = vpop.f32.mrb[0].mxu0
        %v1523 = vadd.f32 %v452, %v1522
        %v1524 = vpop.f32.mrb[0].mxu0
        %1525 = vdwg.mxu0
        %1526 = vmatprep.subr.mxu0 0.0
        %1527 = vmatpush1.msra.mxu0 %v354
        %1528 = vmatprep.subr.mxu0 0.0
        %1529 = vmatpush1.msra.mxu0 %v355
        %1530 = vmatprep.subr.mxu0 0.0
        %1531 = vmatpush1.msra.mxu0 %v356
        %1532 = vmatprep.subr.mxu0 0.0
        %1533 = vmatpush1.msra.mxu0 %v357
        %1534 = vmatprep.subr.mxu0 0.0
        %1535 = vmatpush1.msra.mxu0 0.0
        %1536 = vmatprep.subr.mxu0 0.0
        %1537 = vmatpush1.msra.mxu0 0.0
        %1538 = vmatprep.subr.mxu0 0.0
        %1539 = vmatpush1.msra.mxu0 0.0
        %1540 = vmatprep.subr.mxu0 0.0
        %1541 = vmatpush1.msra.mxu0 0.0
        %1542 = vmatprep.subr.mxu0 0.0
        %1543 = vmatpush1.msra.mxu0 0.0
        %1544 = vmatprep.subr.mxu0 0.0
        %1545 = vmatpush1.msra.mxu0 0.0
        %1546 = vmatprep.subr.mxu0 0.0
        %1547 = vmatpush1.msra.mxu0 0.0
        %1548 = vmatprep.subr.mxu0 0.0
        %1549 = vmatpush1.msra.mxu0 0.0
        %1550 = vmatprep.subr.mxu0 0.0
        %1551 = vmatpush1.msra.mxu0 0.0
        %1552 = vmatprep.subr.mxu0 0.0
        %1553 = vmatpush1.msra.mxu0 0.0
        %1554 = vmatprep.subr.mxu0 0.0
        %1555 = vmatpush1.msra.mxu0 0.0
        %1556 = vmatprep.subr.mxu0 0.0
        %1557 = vmatpush1.msra.mxu0 0.0
        %1558 = vmatprep.subr.mxu0 0.0
        %1559 = vmatpush1.msra.mxu0 0.0
        %1560 = vmatprep.subr.mxu0 0.0
        %1561 = vmatpush1.msra.mxu0 0.0
        %1562 = vmatprep.subr.mxu0 0.0
        %1563 = vmatpush1.msra.mxu0 0.0
        %1564 = vmatprep.subr.mxu0 0.0
        %1565 = vmatpush1.msra.mxu0 0.0
        %1566 = vmatprep.subr.mxu0 0.0
        %1567 = vmatpush1.msra.mxu0 0.0
        %1568 = vmatprep.subr.mxu0 0.0
        %1569 = vmatpush1.msra.mxu0 0.0
        %1570 = vmatprep.subr.mxu0 0.0
        %1571 = vmatpush1.msra.mxu0 0.0
        %1572 = vmatprep.subr.mxu0 0.0
        %1573 = vmatpush1.msra.mxu0 0.0
        %1574 = vmatprep.subr.mxu0 0.0
        %1575 = vmatpush1.msra.mxu0 0.0
        %1576 = vmatprep.subr.mxu0 0.0
        %1577 = vmatpush1.msra.mxu0 0.0
        %1578 = vmatprep.subr.mxu0 0.0
        %1579 = vmatpush1.msra.mxu0 0.0
        %1580 = vmatprep.subr.mxu0 0.0
        %1581 = vmatpush1.msra.mxu0 0.0
        %1582 = vmatprep.subr.mxu0 0.0
        %1583 = vmatpush1.msra.mxu0 0.0
        %1584 = vmatprep.subr.mxu0 0.0
        %1585 = vmatpush1.msra.mxu0 0.0
        %1586 = vmatprep.subr.mxu0 0.0
        %1587 = vmatpush1.msra.mxu0 0.0
        %1588 = vmatprep.subr.mxu0 0.0
        %1589 = vmatpush1.msra.mxu0 0.0
        %1590 = vmatprep.mubr.f32.mxu0 0.0
        %1591 = vmatmul.mubr.f32.gmra.mrb[0].mxu0 %v1384
        %v1592 = vpop.f32.mrb[0].mxu0
        %v1593 = vadd.f32 %v528, %v1592
        %v1594 = vpop.f32.mrb[0].mxu0
        %1595 = vdwg.mxu0
        %v1596 = vadd.f32 %v1378, %v1453
        %v1597 = vxor.u32 %v1596, 2147483648
        %v1598 = vmul.f32 %v1597, 1.442695
        %v1599 = vpow.pop %v1598
        %v1600 = vadd.f32 %v1599, 1.0
        %v1601 = vrcp.pop %v1600
        %v1602 = vmul.f32 1.0, %v1601
        %v1603 = vadd.f32 %v1379, %v1523
        %v1604 = vxor.u32 %v1603, 2147483648
        %v1605 = vmul.f32 %v1604, 1.442695
        %v1606 = vpow.pop %v1605
        %v1607 = vadd.f32 %v1606, 1.0
        %v1608 = vrcp.pop %v1607
        %v1609 = vmul.f32 1.0, %v1608
        %v1610 = vmul.f32 %v1602, %v1593
        %v1611 = vadd.f32 %v1380, %v1610
        %v1612 = vtanh.pop %v1611
        %v1613 = vsub.f32 %v1374, %v1612
        %v1614 = vmul.f32 %v1609, %v1613
        %v1615 = vadd.f32 %v1612, %v1614
        %v1616 = vsub.f32 %v1615, %v1374
        %1618 = vset.pattern.permute.xlu0 0
        %1619 = vperm.xlu0 %1618, %v1382
        %v1620 = vpop.permute.xlu0 %1619
        %v1622 = vmul.f32 %v1620, %v1616
        %v1623 = vadd.f32 %v1374, %v1622
        %s1624 = scalar_lea.vmem %s326, 16 [#allocation8]
        %1625 = vst.msk [vmem:[%s1624] sm:$0xf] %vm628, %v1623
        %s1626 = scalar_lea.vmem %s286, 60 [#allocation3]
        %v1627 = vld [vmem:[%s1626] sm:$0xf]
        %v1628 = vld [vmem:[%s1626 + $0x4] sm:$0xf]
        %v1629 = vld [vmem:[%s1626 + $0x8] sm:$0xf]
        %s1630 = scalar_lea.vmem %s335, 20
        %v1631 = vld [vmem:[%s1630] sm:$0xf]
        %v1633 = vsel %vm374, %v1623, 0
        %1635 = vmatprep.subr.mxu0 0.0
        %1636 = vmatpush1.msra.mxu0 %v344
        %1637 = vmatprep.subr.mxu0 0.0
        %1638 = vmatpush1.msra.mxu0 %v345
        %1639 = vmatprep.subr.mxu0 0.0
        %1640 = vmatpush1.msra.mxu0 %v346
        %1641 = vmatprep.subr.mxu0 0.0
        %1642 = vmatpush1.msra.mxu0 %v347
        %1643 = vmatprep.subr.mxu0 0.0
        %1644 = vmatpush1.msra.mxu0 0.0
        %1645 = vmatprep.subr.mxu0 0.0
        %1646 = vmatpush1.msra.mxu0 0.0
        %1647 = vmatprep.subr.mxu0 0.0
        %1648 = vmatpush1.msra.mxu0 0.0
        %1649 = vmatprep.subr.mxu0 0.0
        %1650 = vmatpush1.msra.mxu0 0.0
        %1651 = vmatprep.subr.mxu0 0.0
        %1652 = vmatpush1.msra.mxu0 0.0
        %1653 = vmatprep.subr.mxu0 0.0
        %1654 = vmatpush1.msra.mxu0 0.0
        %1655 = vmatprep.subr.mxu0 0.0
        %1656 = vmatpush1.msra.mxu0 0.0
        %1657 = vmatprep.subr.mxu0 0.0
        %1658 = vmatpush1.msra.mxu0 0.0
        %1659 = vmatprep.subr.mxu0 0.0
        %1660 = vmatpush1.msra.mxu0 0.0
        %1661 = vmatprep.subr.mxu0 0.0
        %1662 = vmatpush1.msra.mxu0 0.0
        %1663 = vmatprep.subr.mxu0 0.0
        %1664 = vmatpush1.msra.mxu0 0.0
        %1665 = vmatprep.subr.mxu0 0.0
        %1666 = vmatpush1.msra.mxu0 0.0
        %1667 = vmatprep.subr.mxu0 0.0
        %1668 = vmatpush1.msra.mxu0 0.0
        %1669 = vmatprep.subr.mxu0 0.0
        %1670 = vmatpush1.msra.mxu0 0.0
        %1671 = vmatprep.subr.mxu0 0.0
        %1672 = vmatpush1.msra.mxu0 0.0
        %1673 = vmatprep.subr.mxu0 0.0
        %1674 = vmatpush1.msra.mxu0 0.0
        %1675 = vmatprep.subr.mxu0 0.0
        %1676 = vmatpush1.msra.mxu0 0.0
        %1677 = vmatprep.subr.mxu0 0.0
        %1678 = vmatpush1.msra.mxu0 0.0
        %1679 = vmatprep.subr.mxu0 0.0
        %1680 = vmatpush1.msra.mxu0 0.0
        %1681 = vmatprep.subr.mxu0 0.0
        %1682 = vmatpush1.msra.mxu0 0.0
        %1683 = vmatprep.subr.mxu0 0.0
        %1684 = vmatpush1.msra.mxu0 0.0
        %1685 = vmatprep.subr.mxu0 0.0
        %1686 = vmatpush1.msra.mxu0 0.0
        %1687 = vmatprep.subr.mxu0 0.0
        %1688 = vmatpush1.msra.mxu0 0.0
        %1689 = vmatprep.subr.mxu0 0.0
        %1690 = vmatpush1.msra.mxu0 0.0
        %1691 = vmatprep.subr.mxu0 0.0
        %1692 = vmatpush1.msra.mxu0 0.0
        %1693 = vmatprep.subr.mxu0 0.0
        %1694 = vmatpush1.msra.mxu0 0.0
        %1695 = vmatprep.subr.mxu0 0.0
        %1696 = vmatpush1.msra.mxu0 0.0
        %1697 = vmatprep.subr.mxu0 0.0
        %1698 = vmatpush1.msra.mxu0 0.0
        %1699 = vmatprep.mubr.f32.mxu0 0.0
        %1700 = vmatmul.mubr.f32.gmra.mrb[0].mxu0 %v1633
        %v1701 = vpop.f32.mrb[0].mxu0
        %v1702 = vadd.f32 %v372, %v1701
        %v1703 = vpop.f32.mrb[0].mxu0
        %1704 = vdwg.mxu0
        %1705 = vmatprep.subr.mxu0 0.0
        %1706 = vmatpush1.msra.mxu0 %v349
        %1707 = vmatprep.subr.mxu0 0.0
        %1708 = vmatpush1.msra.mxu0 %v350
        %1709 = vmatprep.subr.mxu0 0.0
        %1710 = vmatpush1.msra.mxu0 %v351
        %1711 = vmatprep.subr.mxu0 0.0
        %1712 = vmatpush1.msra.mxu0 %v352
        %1713 = vmatprep.subr.mxu0 0.0
        %1714 = vmatpush1.msra.mxu0 0.0
        %1715 = vmatprep.subr.mxu0 0.0
        %1716 = vmatpush1.msra.mxu0 0.0
        %1717 = vmatprep.subr.mxu0 0.0
        %1718 = vmatpush1.msra.mxu0 0.0
        %1719 = vmatprep.subr.mxu0 0.0
        %1720 = vmatpush1.msra.mxu0 0.0
        %1721 = vmatprep.subr.mxu0 0.0
        %1722 = vmatpush1.msra.mxu0 0.0
        %1723 = vmatprep.subr.mxu0 0.0
        %1724 = vmatpush1.msra.mxu0 0.0
        %1725 = vmatprep.subr.mxu0 0.0
        %1726 = vmatpush1.msra.mxu0 0.0
        %1727 = vmatprep.subr.mxu0 0.0
        %1728 = vmatpush1.msra.mxu0 0.0
        %1729 = vmatprep.subr.mxu0 0.0
        %1730 = vmatpush1.msra.mxu0 0.0
        %1731 = vmatprep.subr.mxu0 0.0
        %1732 = vmatpush1.msra.mxu0 0.0
        %1733 = vmatprep.subr.mxu0 0.0
        %1734 = vmatpush1.msra.mxu0 0.0
        %1735 = vmatprep.subr.mxu0 0.0
        %1736 = vmatpush1.msra.mxu0 0.0
        %1737 = vmatprep.subr.mxu0 0.0
        %1738 = vmatpush1.msra.mxu0 0.0
        %1739 = vmatprep.subr.mxu0 0.0
        %1740 = vmatpush1.msra.mxu0 0.0
        %1741 = vmatprep.subr.mxu0 0.0
        %1742 = vmatpush1.msra.mxu0 0.0
        %1743 = vmatprep.subr.mxu0 0.0
        %1744 = vmatpush1.msra.mxu0 0.0
        %1745 = vmatprep.subr.mxu0 0.0
        %1746 = vmatpush1.msra.mxu0 0.0
        %1747 = vmatprep.subr.mxu0 0.0
        %1748 = vmatpush1.msra.mxu0 0.0
        %1749 = vmatprep.subr.mxu0 0.0
        %1750 = vmatpush1.msra.mxu0 0.0
        %1751 = vmatprep.subr.mxu0 0.0
        %1752 = vmatpush1.msra.mxu0 0.0
        %1753 = vmatprep.subr.mxu0 0.0
        %1754 = vmatpush1.msra.mxu0 0.0
        %1755 = vmatprep.subr.mxu0 0.0
        %1756 = vmatpush1.msra.mxu0 0.0
        %1757 = vmatprep.subr.mxu0 0.0
        %1758 = vmatpush1.msra.mxu0 0.0
        %1759 = vmatprep.subr.mxu0 0.0
        %1760 = vmatpush1.msra.mxu0 0.0
        %1761 = vmatprep.subr.mxu0 0.0
        %1762 = vmatpush1.msra.mxu0 0.0
        %1763 = vmatprep.subr.mxu0 0.0
        %1764 = vmatpush1.msra.mxu0 0.0
        %1765 = vmatprep.subr.mxu0 0.0
        %1766 = vmatpush1.msra.mxu0 0.0
        %1767 = vmatprep.subr.mxu0 0.0
        %1768 = vmatpush1.msra.mxu0 0.0
        %1769 = vmatprep.mubr.f32.mxu0 0.0
        %1770 = vmatmul.mubr.f32.gmra.mrb[0].mxu0 %v1633
        %v1771 = vpop.f32.mrb[0].mxu0
        %v1772 = vadd.f32 %v452, %v1771
        %v1773 = vpop.f32.mrb[0].mxu0
        %1774 = vdwg.mxu0
        %1775 = vmatprep.subr.mxu0 0.0
        %1776 = vmatpush1.msra.mxu0 %v354
        %1777 = vmatprep.subr.mxu0 0.0
        %1778 = vmatpush1.msra.mxu0 %v355
        %1779 = vmatprep.subr.mxu0 0.0
        %1780 = vmatpush1.msra.mxu0 %v356
        %1781 = vmatprep.subr.mxu0 0.0
        %1782 = vmatpush1.msra.mxu0 %v357
        %1783 = vmatprep.subr.mxu0 0.0
        %1784 = vmatpush1.msra.mxu0 0.0
        %1785 = vmatprep.subr.mxu0 0.0
        %1786 = vmatpush1.msra.mxu0 0.0
        %1787 = vmatprep.subr.mxu0 0.0
        %1788 = vmatpush1.msra.mxu0 0.0
        %1789 = vmatprep.subr.mxu0 0.0
        %1790 = vmatpush1.msra.mxu0 0.0
        %1791 = vmatprep.subr.mxu0 0.0
        %1792 = vmatpush1.msra.mxu0 0.0
        %1793 = vmatprep.subr.mxu0 0.0
        %1794 = vmatpush1.msra.mxu0 0.0
        %1795 = vmatprep.subr.mxu0 0.0
        %1796 = vmatpush1.msra.mxu0 0.0
        %1797 = vmatprep.subr.mxu0 0.0
        %1798 = vmatpush1.msra.mxu0 0.0
        %1799 = vmatprep.subr.mxu0 0.0
        %1800 = vmatpush1.msra.mxu0 0.0
        %1801 = vmatprep.subr.mxu0 0.0
        %1802 = vmatpush1.msra.mxu0 0.0
        %1803 = vmatprep.subr.mxu0 0.0
        %1804 = vmatpush1.msra.mxu0 0.0
        %1805 = vmatprep.subr.mxu0 0.0
        %1806 = vmatpush1.msra.mxu0 0.0
        %1807 = vmatprep.subr.mxu0 0.0
        %1808 = vmatpush1.msra.mxu0 0.0
        %1809 = vmatprep.subr.mxu0 0.0
        %1810 = vmatpush1.msra.mxu0 0.0
        %1811 = vmatprep.subr.mxu0 0.0
        %1812 = vmatpush1.msra.mxu0 0.0
        %1813 = vmatprep.subr.mxu0 0.0
        %1814 = vmatpush1.msra.mxu0 0.0
        %1815 = vmatprep.subr.mxu0 0.0
        %1816 = vmatpush1.msra.mxu0 0.0
        %1817 = vmatprep.subr.mxu0 0.0
        %1818 = vmatpush1.msra.mxu0 0.0
        %1819 = vmatprep.subr.mxu0 0.0
        %1820 = vmatpush1.msra.mxu0 0.0
        %1821 = vmatprep.subr.mxu0 0.0
        %1822 = vmatpush1.msra.mxu0 0.0
        %1823 = vmatprep.subr.mxu0 0.0
        %1824 = vmatpush1.msra.mxu0 0.0
        %1825 = vmatprep.subr.mxu0 0.0
        %1826 = vmatpush1.msra.mxu0 0.0
        %1827 = vmatprep.subr.mxu0 0.0
        %1828 = vmatpush1.msra.mxu0 0.0
        %1829 = vmatprep.subr.mxu0 0.0
        %1830 = vmatpush1.msra.mxu0 0.0
        %1831 = vmatprep.subr.mxu0 0.0
        %1832 = vmatpush1.msra.mxu0 0.0
        %1833 = vmatprep.subr.mxu0 0.0
        %1834 = vmatpush1.msra.mxu0 0.0
        %1835 = vmatprep.subr.mxu0 0.0
        %1836 = vmatpush1.msra.mxu0 0.0
        %1837 = vmatprep.subr.mxu0 0.0
        %1838 = vmatpush1.msra.mxu0 0.0
        %1839 = vmatprep.mubr.f32.mxu0 0.0
        %1840 = vmatmul.mubr.f32.gmra.mrb[0].mxu0 %v1633
        %v1841 = vpop.f32.mrb[0].mxu0
        %v1842 = vadd.f32 %v528, %v1841
        %v1843 = vpop.f32.mrb[0].mxu0
        %1844 = vdwg.mxu0
        %v1845 = vadd.f32 %v1627, %v1702
        %v1846 = vxor.u32 %v1845, 2147483648
        %v1847 = vmul.f32 %v1846, 1.442695
        %v1848 = vpow.pop %v1847
        %v1849 = vadd.f32 %v1848, 1.0
        %v1850 = vrcp.pop %v1849
        %v1851 = vmul.f32 1.0, %v1850
        %v1852 = vadd.f32 %v1628, %v1772
        %v1853 = vxor.u32 %v1852, 2147483648
        %v1854 = vmul.f32 %v1853, 1.442695
        %v1855 = vpow.pop %v1854
        %v1856 = vadd.f32 %v1855, 1.0
        %v1857 = vrcp.pop %v1856
        %v1858 = vmul.f32 1.0, %v1857
        %v1859 = vmul.f32 %v1851, %v1842
        %v1860 = vadd.f32 %v1629, %v1859
        %v1861 = vtanh.pop %v1860
        %v1862 = vsub.f32 %v1623, %v1861
        %v1863 = vmul.f32 %v1858, %v1862
        %v1864 = vadd.f32 %v1861, %v1863
        %v1865 = vsub.f32 %v1864, %v1623
        %1867 = vset.pattern.permute.xlu0 0
        %1868 = vperm.xlu0 %1867, %v1631
        %v1869 = vpop.permute.xlu0 %1868
        %v1871 = vmul.f32 %v1869, %v1865
        %v1872 = vadd.f32 %v1623, %v1871
        %s1873 = scalar_lea.vmem %s326, 20 [#allocation8]
        %1874 = vst.msk [vmem:[%s1873] sm:$0xf] %vm628, %v1872
        %s1875 = scalar_lea.vmem %s286, 72 [#allocation3]
        %v1876 = vld [vmem:[%s1875] sm:$0xf]
        %v1877 = vld [vmem:[%s1875 + $0x4] sm:$0xf]
        %v1878 = vld [vmem:[%s1875 + $0x8] sm:$0xf]
        %s1879 = scalar_lea.vmem %s335, 24
        %v1880 = vld [vmem:[%s1879] sm:$0xf]
        %v1882 = vsel %vm374, %v1872, 0
        %1884 = vmatprep.subr.mxu0 0.0
        %1885 = vmatpush1.msra.mxu0 %v344
        %1886 = vmatprep.subr.mxu0 0.0
        %1887 = vmatpush1.msra.mxu0 %v345
        %1888 = vmatprep.subr.mxu0 0.0
        %1889 = vmatpush1.msra.mxu0 %v346
        %1890 = vmatprep.subr.mxu0 0.0
        %1891 = vmatpush1.msra.mxu0 %v347
        %1892 = vmatprep.subr.mxu0 0.0
        %1893 = vmatpush1.msra.mxu0 0.0
        %1894 = vmatprep.subr.mxu0 0.0
        %1895 = vmatpush1.msra.mxu0 0.0
        %1896 = vmatprep.subr.mxu0 0.0
        %1897 = vmatpush1.msra.mxu0 0.0
        %1898 = vmatprep.subr.mxu0 0.0
        %1899 = vmatpush1.msra.mxu0 0.0
        %1900 = vmatprep.subr.mxu0 0.0
        %1901 = vmatpush1.msra.mxu0 0.0
        %1902 = vmatprep.subr.mxu0 0.0
        %1903 = vmatpush1.msra.mxu0 0.0
        %1904 = vmatprep.subr.mxu0 0.0
        %1905 = vmatpush1.msra.mxu0 0.0
        %1906 = vmatprep.subr.mxu0 0.0
        %1907 = vmatpush1.msra.mxu0 0.0
        %1908 = vmatprep.subr.mxu0 0.0
        %1909 = vmatpush1.msra.mxu0 0.0
        %1910 = vmatprep.subr.mxu0 0.0
        %1911 = vmatpush1.msra.mxu0 0.0
        %1912 = vmatprep.subr.mxu0 0.0
        %1913 = vmatpush1.msra.mxu0 0.0
        %1914 = vmatprep.subr.mxu0 0.0
        %1915 = vmatpush1.msra.mxu0 0.0
        %1916 = vmatprep.subr.mxu0 0.0
        %1917 = vmatpush1.msra.mxu0 0.0
        %1918 = vmatprep.subr.mxu0 0.0
        %1919 = vmatpush1.msra.mxu0 0.0
        %1920 = vmatprep.subr.mxu0 0.0
        %1921 = vmatpush1.msra.mxu0 0.0
        %1922 = vmatprep.subr.mxu0 0.0
        %1923 = vmatpush1.msra.mxu0 0.0
        %1924 = vmatprep.subr.mxu0 0.0
        %1925 = vmatpush1.msra.mxu0 0.0
        %1926 = vmatprep.subr.mxu0 0.0
        %1927 = vmatpush1.msra.mxu0 0.0
        %1928 = vmatprep.subr.mxu0 0.0
        %1929 = vmatpush1.msra.mxu0 0.0
        %1930 = vmatprep.subr.mxu0 0.0
        %1931 = vmatpush1.msra.mxu0 0.0
        %1932 = vmatprep.subr.mxu0 0.0
        %1933 = vmatpush1.msra.mxu0 0.0
        %1934 = vmatprep.subr.mxu0 0.0
        %1935 = vmatpush1.msra.mxu0 0.0
        %1936 = vmatprep.subr.mxu0 0.0
        %1937 = vmatpush1.msra.mxu0 0.0
        %1938 = vmatprep.subr.mxu0 0.0
        %1939 = vmatpush1.msra.mxu0 0.0
        %1940 = vmatprep.subr.mxu0 0.0
        %1941 = vmatpush1.msra.mxu0 0.0
        %1942 = vmatprep.subr.mxu0 0.0
        %1943 = vmatpush1.msra.mxu0 0.0
        %1944 = vmatprep.subr.mxu0 0.0
        %1945 = vmatpush1.msra.mxu0 0.0
        %1946 = vmatprep.subr.mxu0 0.0
        %1947 = vmatpush1.msra.mxu0 0.0
        %1948 = vmatprep.mubr.f32.mxu0 0.0
        %1949 = vmatmul.mubr.f32.gmra.mrb[0].mxu0 %v1882
        %v1950 = vpop.f32.mrb[0].mxu0
        %v1951 = vadd.f32 %v372, %v1950
        %v1952 = vpop.f32.mrb[0].mxu0
        %1953 = vdwg.mxu0
        %1954 = vmatprep.subr.mxu0 0.0
        %1955 = vmatpush1.msra.mxu0 %v349
        %1956 = vmatprep.subr.mxu0 0.0
        %1957 = vmatpush1.msra.mxu0 %v350
        %1958 = vmatprep.subr.mxu0 0.0
        %1959 = vmatpush1.msra.mxu0 %v351
        %1960 = vmatprep.subr.mxu0 0.0
        %1961 = vmatpush1.msra.mxu0 %v352
        %1962 = vmatprep.subr.mxu0 0.0
        %1963 = vmatpush1.msra.mxu0 0.0
        %1964 = vmatprep.subr.mxu0 0.0
        %1965 = vmatpush1.msra.mxu0 0.0
        %1966 = vmatprep.subr.mxu0 0.0
        %1967 = vmatpush1.msra.mxu0 0.0
        %1968 = vmatprep.subr.mxu0 0.0
        %1969 = vmatpush1.msra.mxu0 0.0
        %1970 = vmatprep.subr.mxu0 0.0
        %1971 = vmatpush1.msra.mxu0 0.0
        %1972 = vmatprep.subr.mxu0 0.0
        %1973 = vmatpush1.msra.mxu0 0.0
        %1974 = vmatprep.subr.mxu0 0.0
        %1975 = vmatpush1.msra.mxu0 0.0
        %1976 = vmatprep.subr.mxu0 0.0
        %1977 = vmatpush1.msra.mxu0 0.0
        %1978 = vmatprep.subr.mxu0 0.0
        %1979 = vmatpush1.msra.mxu0 0.0
        %1980 = vmatprep.subr.mxu0 0.0
        %1981 = vmatpush1.msra.mxu0 0.0
        %1982 = vmatprep.subr.mxu0 0.0
        %1983 = vmatpush1.msra.mxu0 0.0
        %1984 = vmatprep.subr.mxu0 0.0
        %1985 = vmatpush1.msra.mxu0 0.0
        %1986 = vmatprep.subr.mxu0 0.0
        %1987 = vmatpush1.msra.mxu0 0.0
        %1988 = vmatprep.subr.mxu0 0.0
        %1989 = vmatpush1.msra.mxu0 0.0
        %1990 = vmatprep.subr.mxu0 0.0
        %1991 = vmatpush1.msra.mxu0 0.0
        %1992 = vmatprep.subr.mxu0 0.0
        %1993 = vmatpush1.msra.mxu0 0.0
        %1994 = vmatprep.subr.mxu0 0.0
        %1995 = vmatpush1.msra.mxu0 0.0
        %1996 = vmatprep.subr.mxu0 0.0
        %1997 = vmatpush1.msra.mxu0 0.0
        %1998 = vmatprep.subr.mxu0 0.0
        %1999 = vmatpush1.msra.mxu0 0.0
        %2000 = vmatprep.subr.mxu0 0.0
        %2001 = vmatpush1.msra.mxu0 0.0
        %2002 = vmatprep.subr.mxu0 0.0
        %2003 = vmatpush1.msra.mxu0 0.0
        %2004 = vmatprep.subr.mxu0 0.0
        %2005 = vmatpush1.msra.mxu0 0.0
        %2006 = vmatprep.subr.mxu0 0.0
        %2007 = vmatpush1.msra.mxu0 0.0
        %2008 = vmatprep.subr.mxu0 0.0
        %2009 = vmatpush1.msra.mxu0 0.0
        %2010 = vmatprep.subr.mxu0 0.0
        %2011 = vmatpush1.msra.mxu0 0.0
        %2012 = vmatprep.subr.mxu0 0.0
        %2013 = vmatpush1.msra.mxu0 0.0
        %2014 = vmatprep.subr.mxu0 0.0
        %2015 = vmatpush1.msra.mxu0 0.0
        %2016 = vmatprep.subr.mxu0 0.0
        %2017 = vmatpush1.msra.mxu0 0.0
        %2018 = vmatprep.mubr.f32.mxu0 0.0
        %2019 = vmatmul.mubr.f32.gmra.mrb[0].mxu0 %v1882
        %v2020 = vpop.f32.mrb[0].mxu0
        %v2021 = vadd.f32 %v452, %v2020
        %v2022 = vpop.f32.mrb[0].mxu0
        %2023 = vdwg.mxu0
        %2024 = vmatprep.subr.mxu0 0.0
        %2025 = vmatpush1.msra.mxu0 %v354
        %2026 = vmatprep.subr.mxu0 0.0
        %2027 = vmatpush1.msra.mxu0 %v355
        %2028 = vmatprep.subr.mxu0 0.0
        %2029 = vmatpush1.msra.mxu0 %v356
        %2030 = vmatprep.subr.mxu0 0.0
        %2031 = vmatpush1.msra.mxu0 %v357
        %2032 = vmatprep.subr.mxu0 0.0
        %2033 = vmatpush1.msra.mxu0 0.0
        %2034 = vmatprep.subr.mxu0 0.0
        %2035 = vmatpush1.msra.mxu0 0.0
        %2036 = vmatprep.subr.mxu0 0.0
        %2037 = vmatpush1.msra.mxu0 0.0
        %2038 = vmatprep.subr.mxu0 0.0
        %2039 = vmatpush1.msra.mxu0 0.0
        %2040 = vmatprep.subr.mxu0 0.0
        %2041 = vmatpush1.msra.mxu0 0.0
        %2042 = vmatprep.subr.mxu0 0.0
        %2043 = vmatpush1.msra.mxu0 0.0
        %2044 = vmatprep.subr.mxu0 0.0
        %2045 = vmatpush1.msra.mxu0 0.0
        %2046 = vmatprep.subr.mxu0 0.0
        %2047 = vmatpush1.msra.mxu0 0.0
        %2048 = vmatprep.subr.mxu0 0.0
        %2049 = vmatpush1.msra.mxu0 0.0
        %2050 = vmatprep.subr.mxu0 0.0
        %2051 = vmatpush1.msra.mxu0 0.0
        %2052 = vmatprep.subr.mxu0 0.0
        %2053 = vmatpush1.msra.mxu0 0.0
        %2054 = vmatprep.subr.mxu0 0.0
        %2055 = vmatpush1.msra.mxu0 0.0
        %2056 = vmatprep.subr.mxu0 0.0
        %2057 = vmatpush1.msra.mxu0 0.0
        %2058 = vmatprep.subr.mxu0 0.0
        %2059 = vmatpush1.msra.mxu0 0.0
        %2060 = vmatprep.subr.mxu0 0.0
        %2061 = vmatpush1.msra.mxu0 0.0
        %2062 = vmatprep.subr.mxu0 0.0
        %2063 = vmatpush1.msra.mxu0 0.0
        %2064 = vmatprep.subr.mxu0 0.0
        %2065 = vmatpush1.msra.mxu0 0.0
        %2066 = vmatprep.subr.mxu0 0.0
        %2067 = vmatpush1.msra.mxu0 0.0
        %2068 = vmatprep.subr.mxu0 0.0
        %2069 = vmatpush1.msra.mxu0 0.0
        %2070 = vmatprep.subr.mxu0 0.0
        %2071 = vmatpush1.msra.mxu0 0.0
        %2072 = vmatprep.subr.mxu0 0.0
        %2073 = vmatpush1.msra.mxu0 0.0
        %2074 = vmatprep.subr.mxu0 0.0
        %2075 = vmatpush1.msra.mxu0 0.0
        %2076 = vmatprep.subr.mxu0 0.0
        %2077 = vmatpush1.msra.mxu0 0.0
        %2078 = vmatprep.subr.mxu0 0.0
        %2079 = vmatpush1.msra.mxu0 0.0
        %2080 = vmatprep.subr.mxu0 0.0
        %2081 = vmatpush1.msra.mxu0 0.0
        %2082 = vmatprep.subr.mxu0 0.0
        %2083 = vmatpush1.msra.mxu0 0.0
        %2084 = vmatprep.subr.mxu0 0.0
        %2085 = vmatpush1.msra.mxu0 0.0
        %2086 = vmatprep.subr.mxu0 0.0
        %2087 = vmatpush1.msra.mxu0 0.0
        %2088 = vmatprep.mubr.f32.mxu0 0.0
        %2089 = vmatmul.mubr.f32.gmra.mrb[0].mxu0 %v1882
        %v2090 = vpop.f32.mrb[0].mxu0
        %v2091 = vadd.f32 %v528, %v2090
        %v2092 = vpop.f32.mrb[0].mxu0
        %2093 = vdwg.mxu0
        %v2094 = vadd.f32 %v1876, %v1951
        %v2095 = vxor.u32 %v2094, 2147483648
        %v2096 = vmul.f32 %v2095, 1.442695
        %v2097 = vpow.pop %v2096
        %v2098 = vadd.f32 %v2097, 1.0
        %v2099 = vrcp.pop %v2098
        %v2100 = vmul.f32 1.0, %v2099
        %v2101 = vadd.f32 %v1877, %v2021
        %v2102 = vxor.u32 %v2101, 2147483648
        %v2103 = vmul.f32 %v2102, 1.442695
        %v2104 = vpow.pop %v2103
        %v2105 = vadd.f32 %v2104, 1.0
        %v2106 = vrcp.pop %v2105
        %v2107 = vmul.f32 1.0, %v2106
        %v2108 = vmul.f32 %v2100, %v2091
        %v2109 = vadd.f32 %v1878, %v2108
        %v2110 = vtanh.pop %v2109
        %v2111 = vsub.f32 %v1872, %v2110
        %v2112 = vmul.f32 %v2107, %v2111
        %v2113 = vadd.f32 %v2110, %v2112
        %v2114 = vsub.f32 %v2113, %v1872
        %2116 = vset.pattern.permute.xlu0 0
        %2117 = vperm.xlu0 %2116, %v1880
        %v2118 = vpop.permute.xlu0 %2117
        %v2120 = vmul.f32 %v2118, %v2114
        %v2121 = vadd.f32 %v1872, %v2120
        %s2122 = scalar_lea.vmem %s326, 24 [#allocation8]
        %2123 = vst.msk [vmem:[%s2122] sm:$0xf] %vm628, %v2121
        %s2124 = scalar_lea.vmem %s286, 84 [#allocation3]
        %v2125 = vld [vmem:[%s2124] sm:$0xf]
        %v2126 = vld [vmem:[%s2124 + $0x4] sm:$0xf]
        %v2127 = vld [vmem:[%s2124 + $0x8] sm:$0xf]
        %s2128 = scalar_lea.vmem %s335, 28
        %v2129 = vld [vmem:[%s2128] sm:$0xf]
        %v2131 = vsel %vm374, %v2121, 0
        %2133 = vmatprep.subr.mxu0 0.0
        %2134 = vmatpush1.msra.mxu0 %v344
        %2135 = vmatprep.subr.mxu0 0.0
        %2136 = vmatpush1.msra.mxu0 %v345
        %2137 = vmatprep.subr.mxu0 0.0
        %2138 = vmatpush1.msra.mxu0 %v346
        %2139 = vmatprep.subr.mxu0 0.0
        %2140 = vmatpush1.msra.mxu0 %v347
        %2141 = vmatprep.subr.mxu0 0.0
        %2142 = vmatpush1.msra.mxu0 0.0
        %2143 = vmatprep.subr.mxu0 0.0
        %2144 = vmatpush1.msra.mxu0 0.0
        %2145 = vmatprep.subr.mxu0 0.0
        %2146 = vmatpush1.msra.mxu0 0.0
        %2147 = vmatprep.subr.mxu0 0.0
        %2148 = vmatpush1.msra.mxu0 0.0
        %2149 = vmatprep.subr.mxu0 0.0
        %2150 = vmatpush1.msra.mxu0 0.0
        %2151 = vmatprep.subr.mxu0 0.0
        %2152 = vmatpush1.msra.mxu0 0.0
        %2153 = vmatprep.subr.mxu0 0.0
        %2154 = vmatpush1.msra.mxu0 0.0
        %2155 = vmatprep.subr.mxu0 0.0
        %2156 = vmatpush1.msra.mxu0 0.0
        %2157 = vmatprep.subr.mxu0 0.0
        %2158 = vmatpush1.msra.mxu0 0.0
        %2159 = vmatprep.subr.mxu0 0.0
        %2160 = vmatpush1.msra.mxu0 0.0
        %2161 = vmatprep.subr.mxu0 0.0
        %2162 = vmatpush1.msra.mxu0 0.0
        %2163 = vmatprep.subr.mxu0 0.0
        %2164 = vmatpush1.msra.mxu0 0.0
        %2165 = vmatprep.subr.mxu0 0.0
        %2166 = vmatpush1.msra.mxu0 0.0
        %2167 = vmatprep.subr.mxu0 0.0
        %2168 = vmatpush1.msra.mxu0 0.0
        %2169 = vmatprep.subr.mxu0 0.0
        %2170 = vmatpush1.msra.mxu0 0.0
        %2171 = vmatprep.subr.mxu0 0.0
        %2172 = vmatpush1.msra.mxu0 0.0
        %2173 = vmatprep.subr.mxu0 0.0
        %2174 = vmatpush1.msra.mxu0 0.0
        %2175 = vmatprep.subr.mxu0 0.0
        %2176 = vmatpush1.msra.mxu0 0.0
        %2177 = vmatprep.subr.mxu0 0.0
        %2178 = vmatpush1.msra.mxu0 0.0
        %2179 = vmatprep.subr.mxu0 0.0
        %2180 = vmatpush1.msra.mxu0 0.0
        %2181 = vmatprep.subr.mxu0 0.0
        %2182 = vmatpush1.msra.mxu0 0.0
        %2183 = vmatprep.subr.mxu0 0.0
        %2184 = vmatpush1.msra.mxu0 0.0
        %2185 = vmatprep.subr.mxu0 0.0
        %2186 = vmatpush1.msra.mxu0 0.0
        %2187 = vmatprep.subr.mxu0 0.0
        %2188 = vmatpush1.msra.mxu0 0.0
        %2189 = vmatprep.subr.mxu0 0.0
        %2190 = vmatpush1.msra.mxu0 0.0
        %2191 = vmatprep.subr.mxu0 0.0
        %2192 = vmatpush1.msra.mxu0 0.0
        %2193 = vmatprep.subr.mxu0 0.0
        %2194 = vmatpush1.msra.mxu0 0.0
        %2195 = vmatprep.subr.mxu0 0.0
        %2196 = vmatpush1.msra.mxu0 0.0
        %2197 = vmatprep.mubr.f32.mxu0 0.0
        %2198 = vmatmul.mubr.f32.gmra.mrb[0].mxu0 %v2131
        %v2199 = vpop.f32.mrb[0].mxu0
        %v2200 = vadd.f32 %v372, %v2199
        %v2201 = vpop.f32.mrb[0].mxu0
        %2202 = vdwg.mxu0
        %2203 = vmatprep.subr.mxu0 0.0
        %2204 = vmatpush1.msra.mxu0 %v349
        %2205 = vmatprep.subr.mxu0 0.0
        %2206 = vmatpush1.msra.mxu0 %v350
        %2207 = vmatprep.subr.mxu0 0.0
        %2208 = vmatpush1.msra.mxu0 %v351
        %2209 = vmatprep.subr.mxu0 0.0
        %2210 = vmatpush1.msra.mxu0 %v352
        %2211 = vmatprep.subr.mxu0 0.0
        %2212 = vmatpush1.msra.mxu0 0.0
        %2213 = vmatprep.subr.mxu0 0.0
        %2214 = vmatpush1.msra.mxu0 0.0
        %2215 = vmatprep.subr.mxu0 0.0
        %2216 = vmatpush1.msra.mxu0 0.0
        %2217 = vmatprep.subr.mxu0 0.0
        %2218 = vmatpush1.msra.mxu0 0.0
        %2219 = vmatprep.subr.mxu0 0.0
        %2220 = vmatpush1.msra.mxu0 0.0
        %2221 = vmatprep.subr.mxu0 0.0
        %2222 = vmatpush1.msra.mxu0 0.0
        %2223 = vmatprep.subr.mxu0 0.0
        %2224 = vmatpush1.msra.mxu0 0.0
        %2225 = vmatprep.subr.mxu0 0.0
        %2226 = vmatpush1.msra.mxu0 0.0
        %2227 = vmatprep.subr.mxu0 0.0
        %2228 = vmatpush1.msra.mxu0 0.0
        %2229 = vmatprep.subr.mxu0 0.0
        %2230 = vmatpush1.msra.mxu0 0.0
        %2231 = vmatprep.subr.mxu0 0.0
        %2232 = vmatpush1.msra.mxu0 0.0
        %2233 = vmatprep.subr.mxu0 0.0
        %2234 = vmatpush1.msra.mxu0 0.0
        %2235 = vmatprep.subr.mxu0 0.0
        %2236 = vmatpush1.msra.mxu0 0.0
        %2237 = vmatprep.subr.mxu0 0.0
        %2238 = vmatpush1.msra.mxu0 0.0
        %2239 = vmatprep.subr.mxu0 0.0
        %2240 = vmatpush1.msra.mxu0 0.0
        %2241 = vmatprep.subr.mxu0 0.0
        %2242 = vmatpush1.msra.mxu0 0.0
        %2243 = vmatprep.subr.mxu0 0.0
        %2244 = vmatpush1.msra.mxu0 0.0
        %2245 = vmatprep.subr.mxu0 0.0
        %2246 = vmatpush1.msra.mxu0 0.0
        %2247 = vmatprep.subr.mxu0 0.0
        %2248 = vmatpush1.msra.mxu0 0.0
        %2249 = vmatprep.subr.mxu0 0.0
        %2250 = vmatpush1.msra.mxu0 0.0
        %2251 = vmatprep.subr.mxu0 0.0
        %2252 = vmatpush1.msra.mxu0 0.0
        %2253 = vmatprep.subr.mxu0 0.0
        %2254 = vmatpush1.msra.mxu0 0.0
        %2255 = vmatprep.subr.mxu0 0.0
        %2256 = vmatpush1.msra.mxu0 0.0
        %2257 = vmatprep.subr.mxu0 0.0
        %2258 = vmatpush1.msra.mxu0 0.0
        %2259 = vmatprep.subr.mxu0 0.0
        %2260 = vmatpush1.msra.mxu0 0.0
        %2261 = vmatprep.subr.mxu0 0.0
        %2262 = vmatpush1.msra.mxu0 0.0
        %2263 = vmatprep.subr.mxu0 0.0
        %2264 = vmatpush1.msra.mxu0 0.0
        %2265 = vmatprep.subr.mxu0 0.0
        %2266 = vmatpush1.msra.mxu0 0.0
        %2267 = vmatprep.mubr.f32.mxu0 0.0
        %2268 = vmatmul.mubr.f32.gmra.mrb[0].mxu0 %v2131
        %v2269 = vpop.f32.mrb[0].mxu0
        %v2270 = vadd.f32 %v452, %v2269
        %v2271 = vpop.f32.mrb[0].mxu0
        %2272 = vdwg.mxu0
        %2273 = vmatprep.subr.mxu0 0.0
        %2274 = vmatpush1.msra.mxu0 %v354
        %2275 = vmatprep.subr.mxu0 0.0
        %2276 = vmatpush1.msra.mxu0 %v355
        %2277 = vmatprep.subr.mxu0 0.0
        %2278 = vmatpush1.msra.mxu0 %v356
        %2279 = vmatprep.subr.mxu0 0.0
        %2280 = vmatpush1.msra.mxu0 %v357
        %2281 = vmatprep.subr.mxu0 0.0
        %2282 = vmatpush1.msra.mxu0 0.0
        %2283 = vmatprep.subr.mxu0 0.0
        %2284 = vmatpush1.msra.mxu0 0.0
        %2285 = vmatprep.subr.mxu0 0.0
        %2286 = vmatpush1.msra.mxu0 0.0
        %2287 = vmatprep.subr.mxu0 0.0
        %2288 = vmatpush1.msra.mxu0 0.0
        %2289 = vmatprep.subr.mxu0 0.0
        %2290 = vmatpush1.msra.mxu0 0.0
        %2291 = vmatprep.subr.mxu0 0.0
        %2292 = vmatpush1.msra.mxu0 0.0
        %2293 = vmatprep.subr.mxu0 0.0
        %2294 = vmatpush1.msra.mxu0 0.0
        %2295 = vmatprep.subr.mxu0 0.0
        %2296 = vmatpush1.msra.mxu0 0.0
        %2297 = vmatprep.subr.mxu0 0.0
        %2298 = vmatpush1.msra.mxu0 0.0
        %2299 = vmatprep.subr.mxu0 0.0
        %2300 = vmatpush1.msra.mxu0 0.0
        %2301 = vmatprep.subr.mxu0 0.0
        %2302 = vmatpush1.msra.mxu0 0.0
        %2303 = vmatprep.subr.mxu0 0.0
        %2304 = vmatpush1.msra.mxu0 0.0
        %2305 = vmatprep.subr.mxu0 0.0
        %2306 = vmatpush1.msra.mxu0 0.0
        %2307 = vmatprep.subr.mxu0 0.0
        %2308 = vmatpush1.msra.mxu0 0.0
        %2309 = vmatprep.subr.mxu0 0.0
        %2310 = vmatpush1.msra.mxu0 0.0
        %2311 = vmatprep.subr.mxu0 0.0
        %2312 = vmatpush1.msra.mxu0 0.0
        %2313 = vmatprep.subr.mxu0 0.0
        %2314 = vmatpush1.msra.mxu0 0.0
        %2315 = vmatprep.subr.mxu0 0.0
        %2316 = vmatpush1.msra.mxu0 0.0
        %2317 = vmatprep.subr.mxu0 0.0
        %2318 = vmatpush1.msra.mxu0 0.0
        %2319 = vmatprep.subr.mxu0 0.0
        %2320 = vmatpush1.msra.mxu0 0.0
        %2321 = vmatprep.subr.mxu0 0.0
        %2322 = vmatpush1.msra.mxu0 0.0
        %2323 = vmatprep.subr.mxu0 0.0
        %2324 = vmatpush1.msra.mxu0 0.0
        %2325 = vmatprep.subr.mxu0 0.0
        %2326 = vmatpush1.msra.mxu0 0.0
        %2327 = vmatprep.subr.mxu0 0.0
        %2328 = vmatpush1.msra.mxu0 0.0
        %2329 = vmatprep.subr.mxu0 0.0
        %2330 = vmatpush1.msra.mxu0 0.0
        %2331 = vmatprep.subr.mxu0 0.0
        %2332 = vmatpush1.msra.mxu0 0.0
        %2333 = vmatprep.subr.mxu0 0.0
        %2334 = vmatpush1.msra.mxu0 0.0
        %2335 = vmatprep.subr.mxu0 0.0
        %2336 = vmatpush1.msra.mxu0 0.0
        %2337 = vmatprep.mubr.f32.mxu0 0.0
        %2338 = vmatmul.mubr.f32.gmra.mrb[0].mxu0 %v2131
        %v2339 = vpop.f32.mrb[0].mxu0
        %v2340 = vadd.f32 %v528, %v2339
        %v2341 = vpop.f32.mrb[0].mxu0
        %2342 = vdwg.mxu0
        %v2343 = vadd.f32 %v2125, %v2200
        %v2344 = vxor.u32 %v2343, 2147483648
        %v2345 = vmul.f32 %v2344, 1.442695
        %v2346 = vpow.pop %v2345
        %v2347 = vadd.f32 %v2346, 1.0
        %v2348 = vrcp.pop %v2347
        %v2349 = vmul.f32 1.0, %v2348
        %v2350 = vadd.f32 %v2126, %v2270
        %v2351 = vxor.u32 %v2350, 2147483648
        %v2352 = vmul.f32 %v2351, 1.442695
        %v2353 = vpow.pop %v2352
        %v2354 = vadd.f32 %v2353, 1.0
        %v2355 = vrcp.pop %v2354
        %v2356 = vmul.f32 1.0, %v2355
        %v2357 = vmul.f32 %v2349, %v2340
        %v2358 = vadd.f32 %v2127, %v2357
        %v2359 = vtanh.pop %v2358
        %v2360 = vsub.f32 %v2121, %v2359
        %v2361 = vmul.f32 %v2356, %v2360
        %v2362 = vadd.f32 %v2359, %v2361
        %v2363 = vsub.f32 %v2362, %v2121
        %2365 = vset.pattern.permute.xlu0 0
        %2366 = vperm.xlu0 %2365, %v2129
        %v2367 = vpop.permute.xlu0 %2366
        %v2369 = vmul.f32 %v2367, %v2363
        %v2370 = vadd.f32 %v2121, %v2369
        %s2371 = scalar_lea.vmem %s326, 28 [#allocation8]
        %2372 = vst.msk [vmem:[%s2371] sm:$0xf] %vm628, %v2370
        %2373 = vst.msk [vmem:[#allocation2] sm:$0xf] %vm628, %v2370
        %s2374 = sand.u32 %s186, 1
        %s2375 = scalar_lea.sflag [#allocation5], %s2374
        %s2376 = sand.u32 %s186, 1
        %s2377 = smul.addr %s2376, 32
        %s2378 = scalar_lea.vmem [#allocation8], %s2377
        // Predicated region
        $region57: #{tpu_custom_call.1} parent=43 // pred_check
          %p2379 = pneg %p196
        $region58: #{tpu_custom_call.1} parent=43 // pred_check_branch
          %2381 = sbr.rel (%p2379) target = $region60
        $region59: #{tpu_custom_call.1} parent=43 // pred_region
          %s2382 = smul.u32 8, %s29
          %s2384 = ssub.s32 512, 512
          %2385 = vsyncadd %s2375, %s2384
          %s2386 = sadd.s32 %s28, %s2382
          %s2387 = smul.addr %s2386, 64
          %s2388 = scalar_lea.hbm %s6, %s2387
          %s2389 = sshll.u32 %s2378, 4
          %s2390 = int_to_ptr.vmem [resolvable:$true] %s2389
          %2395 = dma.vmem_to_hbm [thread:$0]  %s2390, 512, %s2388, %s2375, 64, 64, 4
        $region60: #{tpu_custom_call.1} parent=43 // pred_fallthru
          _
      $region44: #{tpu_custom_call.1} parent=5 // pred_fallthru
        _
      %p2396 = scmp.le.s32.totalorder 2, %s19
      // Predicated region
      $region61: #{tpu_custom_call.1} parent=5 // pred_check
        %p2397 = pneg %p2396
      $region62: #{tpu_custom_call.1} parent=5 // pred_check_branch
        %2399 = sbr.rel (%p2397) target = $region64
      $region63: #{tpu_custom_call.1} parent=5 // pred_region
        %s2400 = ssub.s32 %s19, 2
        // Predicated region
        $region65: #{tpu_custom_call.1} parent=63 // pred_check
          %p2401 = pneg %p202
        $region66: #{tpu_custom_call.1} parent=63 // pred_check_branch
          %2403 = sbr.rel (%p2401) target = $region68
        $region67: #{tpu_custom_call.1} parent=63 // pred_region
          %s2404 = sand.u32 %s187, 1
          %s2405 = scalar_lea.sflag [#allocation5], %s2404
          %s2406 = sand.u32 %s187, 1
          %s2407 = smul.addr %s2406, 32
          %s2408 = scalar_lea.vmem [#allocation8], %s2407
          %2409 = dma.done %s2405, 512
        $region68: #{tpu_custom_call.1} parent=63 // pred_fallthru
          _
      $region64: #{tpu_custom_call.1} parent=5 // pred_fallthru
        _
    $region6: #{tpu_custom_call.1} parent=1 // loop_footer
      %s23 = sadd.s32 1, %s19
    $region7: #{tpu_custom_call.1} parent=1 // loop_footer_branch
      %18 = sbr.rel target = $region3
    $region8: #{tpu_custom_call.1} parent=1 // loop_exit
      _
    %2410 = vsyncpa [#allocation4], 1
    %s2411 = scalar_lea.sflag [#allocation4], 1
    %2412 = vsyncpa %s2411, 1
    %2413 = vsyncpa [#allocation7], 1
    %2414 = vsyncpa [#allocation5], 1
    %s2415 = scalar_lea.sflag [#allocation5], 1
    %2416 = vsyncpa %s2415, 1

</llo_original>
